<compile_context>
chip_gen: v7x
topology: tpu7x:2x2x1
jax: 0.10.0
libtpu: 0.0.40
codegen_flags: <defaults>
</compile_context>

<pallas_src>
import functools
import math

import jax
import jax.numpy as jnp
from jax import lax
from jax.experimental import pallas as pl
from jax.experimental.pallas import tpu as pltpu

BN_EPS = 1e-5
LANE = 128                 # TPU lane width; feature dims are padded to this
K_SPLIT = 2                # fc1 reduction-dim split (DMA/compute overlap)
VEC_ROWS = 16              # packed small-vector array rows (13 used, 3 pad)
VMEM_LIMIT = 32 * 1024 * 1024

# softplus(RHO_PAD) == 1, so a padded (mu=0, rho=RHO_PAD, eps=0) element samples
# to weight 0 and contributes ~0 (second order) to the KL sum.
RHO_PAD = math.log(math.e - 1.0)

# Row indices inside the packed (16, LANE) small-vector array.
(V_MB1, V_RB1, V_EB1, V_G1, V_BE1,
 V_MB2, V_RB2, V_EB2, V_G2, V_BE2,
 V_MB3, V_RB3, V_EB3) = range(13)


def _round_up(n, m):
    return ((n + m - 1) // m) * m


def _softplus(x):
    # Numerically stable softplus.
    return jnp.maximum(x, 0.0) + jnp.log1p(jnp.exp(-jnp.abs(x)))


def _sample_and_klsum(mu, rho, eps):
    """Reparameterized sample and the *sum* of elementwise KL(N(mu,s)||N(0,1))."""
    sigma = _softplus(rho)
    w = mu + sigma * eps
    kl = jnp.sum(-jnp.log(sigma) + 0.5 * (sigma * sigma + mu * mu) - 0.5)
    return w, kl


def _bn_relu(h, gamma, beta):
    """Training-mode BatchNorm1d (biased batch variance) followed by ReLU."""
    mean = jnp.mean(h, axis=0, keepdims=True)
    var = jnp.mean((h - mean) ** 2, axis=0, keepdims=True)
    h = (h - mean) * lax.rsqrt(var + BN_EPS) * gamma + beta
    return jnp.maximum(h, 0.0)


# -----------------------------------------------------------------------------
# Single fused kernel: grid=(K_SPLIT,) "arbitrary".
#   every iteration : sample its w1 half, partial matmul, partial KL sum
#   i == 0          : zero the accumulators
#   i == last       : bias/BN/ReLU, fc2, fc3, final KL combine
# -----------------------------------------------------------------------------
def _mlp_uni_kernel(counts,
                    x_ref, mw1_ref, rw1_ref, ew1_ref,
                    mw2_ref, rw2_ref, ew2_ref,
                    mw3_ref, rw3_ref, ew3_ref,
                    vec_ref,
                    out_ref, kl_ref,
                    h_acc, kl_acc):
    i = pl.program_id(0)
    n_w1, n_b1, n_w2, n_b2, n_w3, n_b3 = counts

    @pl.when(i == 0)
    def _():
        h_acc[...] = jnp.zeros_like(h_acc)
        kl_acc[0] = jnp.float32(0.0)

    # ---- fc1 half: sample weights, partial matmul, partial KL sum ----
    mu1 = mw1_ref[...]
    sigma1 = _softplus(rw1_ref[...])
    w1 = mu1 + sigma1 * ew1_ref[...]
    h_acc[...] += jnp.dot(x_ref[0], w1, preferred_element_type=jnp.float32)
    kl_acc[0] += jnp.sum(-jnp.log(sigma1)
                         + 0.5 * (sigma1 * sigma1 + mu1 * mu1) - 0.5)

    # ---- tail: only on the last grid iteration ----
    @pl.when(i == pl.num_programs(0) - 1)
    def _():
        hid_pad = mw2_ref.shape[0]
        out_pad = out_ref.shape[1]

        # Unpack the (16, LANE) small-vector block by row (static slices).
        mb1 = vec_ref[V_MB1:V_MB1 + 1, :hid_pad]
        rb1 = vec_ref[V_RB1:V_RB1 + 1, :hid_pad]
        eb1 = vec_ref[V_EB1:V_EB1 + 1, :hid_pad]
        g1 = vec_ref[V_G1:V_G1 + 1, :hid_pad]
        be1 = vec_ref[V_BE1:V_BE1 + 1, :hid_pad]
        mb2 = vec_ref[V_MB2:V_MB2 + 1, :hid_pad]
        rb2 = vec_ref[V_RB2:V_RB2 + 1, :hid_pad]
        eb2 = vec_ref[V_EB2:V_EB2 + 1, :hid_pad]
        g2 = vec_ref[V_G2:V_G2 + 1, :hid_pad]
        be2 = vec_ref[V_BE2:V_BE2 + 1, :hid_pad]
        mb3 = vec_ref[V_MB3:V_MB3 + 1, :out_pad]
        rb3 = vec_ref[V_RB3:V_RB3 + 1, :out_pad]
        eb3 = vec_ref[V_EB3:V_EB3 + 1, :out_pad]

        # fc1 bias + BN1 + ReLU
        b1, klb1 = _sample_and_klsum(mb1, rb1, eb1)
        h = h_acc[...] + b1
        h = _bn_relu(h, g1, be1)

        # fc2 + BN2 + ReLU
        w2, klw2 = _sample_and_klsum(mw2_ref[...], rw2_ref[...], ew2_ref[...])
        b2, klb2 = _sample_and_klsum(mb2, rb2, eb2)
        h = jnp.dot(h, w2, preferred_element_type=jnp.float32) + b2
        h = _bn_relu(h, g2, be2)

        # fc3
        w3, klw3 = _sample_and_klsum(mw3_ref[...], rw3_ref[...], ew3_ref[...])
        b3, klb3 = _sample_and_klsum(mb3, rb3, eb3)
        out_ref[...] = jnp.dot(h, w3, preferred_element_type=jnp.float32) + b3

        # KL combine (sums -> means with TRUE element counts), scalar SMEM out.
        klw1 = kl_acc[0]
        kl_ref[0, 0] = (klw1 / n_w1 + klb1 / n_b1 + klw2 / n_w2 +
                        klb2 / n_b2 + klw3 / n_w3 + klb3 / n_b3)


def mlp_uni_forward(x, padded_params, true_sizes):
    """Flatten NCHW input and run the single fused Pallas forward pass."""
    input_size, hidden_size, output_size = true_sizes
    (mw1, rw1, ew1, mw2, rw2, ew2, mw3, rw3, ew3, vec) = padded_params

    B = x.shape[0]
    xf = x.reshape(B, -1).astype(jnp.float32)
    assert xf.shape[1] == input_size
    assert input_size % K_SPLIT == 0 and (input_size // K_SPLIT) % 8 == 0
    k_half = input_size // K_SPLIT
    hid_pad = mw1.shape[1]
    out_pad = mw3.shape[1]

    # Present x as (K_SPLIT, B, k_half) so each grid point reads a full-dim block.
    xs = xf.reshape(B, K_SPLIT, k_half).transpose(1, 0, 2)

    counts = (float(input_size * hidden_size), float(hidden_size),
              float(hidden_size * hidden_size), float(hidden_size),
              float(hidden_size * output_size), float(output_size))

    cost = pl.CostEstimate(
        flops=2 * B * (input_size * hid_pad + hid_pad * hid_pad
                       + hid_pad * out_pad),
        transcendentals=3 * (input_size * hid_pad + hid_pad * hid_pad
                             + hid_pad * out_pad + 2 * hid_pad + out_pad),
        bytes_accessed=4 * (B * input_size
                            + 3 * (input_size * hid_pad + hid_pad * hid_pad
                                   + hid_pad * out_pad)
                            + VEC_ROWS * vec.shape[1]
                            + B * out_pad + 1))

    def full(shape):
        # Full-array block, constant index -> DMA once, resident across the grid.
        return pl.BlockSpec(shape, lambda i: tuple(0 for _ in shape))

    y_pad, kl = pl.pallas_call(
        functools.partial(_mlp_uni_kernel, counts),
        out_shape=(
            jax.ShapeDtypeStruct((B, out_pad), jnp.float32),
            jax.ShapeDtypeStruct((1, 1), jnp.float32),
        ),
        grid=(K_SPLIT,),
        in_specs=[
            pl.BlockSpec((1, B, k_half), lambda i: (i, 0, 0)),          # x half
            pl.BlockSpec((k_half, hid_pad), lambda i: (i, 0)),          # mu_w1
            pl.BlockSpec((k_half, hid_pad), lambda i: (i, 0)),          # rho_w1
            pl.BlockSpec((k_half, hid_pad), lambda i: (i, 0)),          # eps_w1
            full(mw2.shape), full(rw2.shape), full(ew2.shape),          # w2
            full(mw3.shape), full(rw3.shape), full(ew3.shape),          # w3
            full(vec.shape),                                            # packed vecs
        ],
        out_specs=(
            pl.BlockSpec((B, out_pad), lambda i: (0, 0)),
            pl.BlockSpec(memory_space=pltpu.MemorySpace.SMEM),
        ),
        scratch_shapes=[
            pltpu.VMEM((B, hid_pad), jnp.float32),   # fc1 partial-product acc
            pltpu.SMEM((1,), jnp.float32),           # fc1 partial-KL acc
        ],
        compiler_params=pltpu.CompilerParams(
            dimension_semantics=("arbitrary",),
            vmem_limit_bytes=VMEM_LIMIT),
        cost_estimate=cost,
    )(xs, mw1, rw1, ew1, mw2, rw2, ew2, mw3, rw3, ew3, vec)

    return y_pad[:, :output_size], kl[0, 0]


# -----------------------------------------------------------------------------
# Parameter construction / padding / pure-JAX reference
# -----------------------------------------------------------------------------
def init_params(key, input_size, hidden_size, output_size):
    """Synthetic init matching bayesian_torch defaults: mu~N(0,0.1), rho~N(-3,0.1),
    forward noise eps~N(0,1); BatchNorm gamma=1, beta=0. True (unpadded) shapes."""
    layer_dims = [(input_size, hidden_size),
                  (hidden_size, hidden_size),
                  (hidden_size, output_size)]
    layers = []
    for i, (fin, fout) in enumerate(layer_dims):
        k = jax.random.fold_in(key, i)
        kmw, krw, kew, kmb, krb, keb = jax.random.split(k, 6)
        mu_w = 0.1 * jax.random.normal(kmw, (fin, fout), jnp.float32)
        rho_w = -3.0 + 0.1 * jax.random.normal(krw, (fin, fout), jnp.float32)
        eps_w = jax.random.normal(kew, (fin, fout), jnp.float32)
        mu_b = 0.1 * jax.random.normal(kmb, (1, fout), jnp.float32)
        rho_b = -3.0 + 0.1 * jax.random.normal(krb, (1, fout), jnp.float32)
        eps_b = jax.random.normal(keb, (1, fout), jnp.float32)
        layers.append([mu_w, rho_w, eps_w, mu_b, rho_b, eb := eps_b])

    g1 = jnp.ones((1, hidden_size), jnp.float32)
    be1 = jnp.zeros((1, hidden_size), jnp.float32)
    g2 = jnp.ones((1, hidden_size), jnp.float32)
    be2 = jnp.zeros((1, hidden_size), jnp.float32)

    return layers[0] + [g1, be1] + layers[1] + [g2, be2] + layers[2]


def pad_params(params):
    """Pad feature dims to 128 lanes and pack the 13 small (1,*) vectors into one
    (16, LANE-multiple) array.  Padded Gaussian entries use
    (mu=0, rho=log(e-1), eps=0): sampled weight 0 and KL element ~0, so padded
    columns/rows are mathematically inert."""
    (mw1, rw1, ew1, mb1, rb1, eb1, g1, be1,
     mw2, rw2, ew2, mb2, rb2, eb2, g2, be2,
     mw3, rw3, ew3, mb3, rb3, eb3) = params
    hidden_size = mw1.shape[1]
    output_size = mw3.shape[1]
    hp = _round_up(hidden_size, LANE)
    op = _round_up(output_size, LANE)
    vw = max(hp, op)

    def pad_gauss(mu, rho, eps, rows, cols):
        r0, c0 = mu.shape
        pad = ((0, rows - r0), (0, cols - c0))
        return (jnp.pad(mu, pad),
                jnp.pad(rho, pad, constant_values=RHO_PAD),
                jnp.pad(eps, pad))

    mw1, rw1, ew1 = pad_gauss(mw1, rw1, ew1, mw1.shape[0], hp)
    mw2, rw2, ew2 = pad_gauss(mw2, rw2, ew2, hp, hp)
    mw3, rw3, ew3 = pad_gauss(mw3, rw3, ew3, hp, op)

    def pad_row(v, fill=0.0):
        return jnp.pad(v, ((0, 0), (0, vw - v.shape[1])), constant_values=fill)

    rows = [
        pad_row(mb1), pad_row(rb1, RHO_PAD), pad_row(eb1),
        pad_row(g1, 1.0), pad_row(be1),
        pad_row(mb2), pad_row(rb2, RHO_PAD), pad_row(eb2),
        pad_row(g2, 1.0), pad_row(be2),
        pad_row(mb3), pad_row(rb3, RHO_PAD), pad_row(eb3),
    ]
    rows.append(jnp.zeros((VEC_ROWS - len(rows), vw), jnp.float32))
    vec = jnp.concatenate(rows, axis=0)

    return [mw1, rw1, ew1, mw2, rw2, ew2, mw3, rw3, ew3, vec]


def reference_forward(x, params):
    """Pure-JAX reference on the TRUE (unpadded) params, same math as PyTorch."""
    B = x.shape[0]
    h = x.reshape(B, -1).astype(jnp.float32)
    (mw1, rw1, ew1, mb1, rb1, eb1, g1, be1,
     mw2, rw2, ew2, mb2, rb2, eb2, g2, be2,
     mw3, rw3, ew3, mb3, rb3, eb3) = params

    def sample_kl_mean(mu, rho, eps):
        sigma = _softplus(rho)
        w = mu + sigma * eps
        kl = jnp.mean(-jnp.log(sigma) + 0.5 * (sigma * sigma + mu * mu) - 0.5)
        return w, kl

    w1, klw1 = sample_kl_mean(mw1, rw1, ew1)
    b1, klb1 = sample_kl_mean(mb1, rb1, eb1)
    h = _bn_relu(h @ w1 + b1, g1, be1)
    w2, klw2 = sample_kl_mean(mw2, rw2, ew2)
    b2, klb2 = sample_kl_mean(mb2, rb2, eb2)
    h = _bn_relu(h @ w2 + b2, g2, be2)
    w3, klw3 = sample_kl_mean(mw3, rw3, ew3)
    b3, klb3 = sample_kl_mean(mb3, rb3, eb3)
    out = h @ w3 + b3
    return out, klw1 + klb1 + klw2 + klb2 + klw3 + klb3


if __name__ == "__main__":
    key = jax.random.PRNGKey(0)
    kx, kp = jax.random.split(key)

    # MNIST-like shapes implied by the module defaults (input_size = 28*28).
    B, C, H, W = 8, 1, 28, 28
    input_size, hidden_size, output_size = C * H * W, 100, 10

    x = jax.random.normal(kx, (B, C, H, W), jnp.float32)
    params = init_params(kp, input_size, hidden_size, output_size)
    padded = pad_params(params)   # one-time param padding (not part of the hot path)

    y, kl = mlp_uni_forward(x, padded, (input_size, hidden_size, output_size))
    jax.block_until_ready((y, kl))

    y_ref, kl_ref = reference_forward(x, params)
    assert y.shape == (B, output_size)
    assert jnp.allclose(y, y_ref, atol=2e-4, rtol=2e-4)
    assert jnp.allclose(kl, kl_ref, atol=2e-4, rtol=2e-4)

    print("KERNEL_OK")
</pallas_src>

<mosaic_0001>
module attributes {stable_mosaic.version = 11 : i64} {
  func.func @_mlp_uni_kernel(%arg0: i32, %arg1: memref<1x8x392xf32, #tpu.memory_space<vmem>>, %arg2: memref<392x128xf32, #tpu.memory_space<vmem>>, %arg3: memref<392x128xf32, #tpu.memory_space<vmem>>, %arg4: memref<392x128xf32, #tpu.memory_space<vmem>>, %arg5: memref<128x128xf32, #tpu.memory_space<vmem>>, %arg6: memref<128x128xf32, #tpu.memory_space<vmem>>, %arg7: memref<128x128xf32, #tpu.memory_space<vmem>>, %arg8: memref<128x128xf32, #tpu.memory_space<vmem>>, %arg9: memref<128x128xf32, #tpu.memory_space<vmem>>, %arg10: memref<128x128xf32, #tpu.memory_space<vmem>>, %arg11: memref<16x128xf32, #tpu.memory_space<vmem>>, %arg12: memref<8x128xf32, #tpu.memory_space<vmem>>, %arg13: memref<1x1xf32, #tpu.memory_space<smem>>, %arg14: memref<8x128xf32, #tpu.memory_space<vmem>>, %arg15: memref<1xf32, #tpu.memory_space<smem>>) attributes {dimension_semantics = [#tpu.dimension_semantics<arbitrary>], iteration_bounds = array<i64: 2>, scalar_prefetch = 0 : i64, scratch_operands = 2 : i64, tpu.core_type = #tpu.core_type<tc>, window_params = [{transform_indices = @transform_0, window_bounds = array<i64: 1, 8, 392>}, {transform_indices = @transform_1, window_bounds = array<i64: 392, 128>}, {transform_indices = @transform_2, window_bounds = array<i64: 392, 128>}, {transform_indices = @transform_3, window_bounds = array<i64: 392, 128>}, {pipeline_mode = #tpu.pipeline_mode<synchronous>, transform_indices = @transform_4, window_bounds = array<i64: 128, 128>}, {pipeline_mode = #tpu.pipeline_mode<synchronous>, transform_indices = @transform_5, window_bounds = array<i64: 128, 128>}, {pipeline_mode = #tpu.pipeline_mode<synchronous>, transform_indices = @transform_6, window_bounds = array<i64: 128, 128>}, {pipeline_mode = #tpu.pipeline_mode<synchronous>, transform_indices = @transform_7, window_bounds = array<i64: 128, 128>}, {pipeline_mode = #tpu.pipeline_mode<synchronous>, transform_indices = @transform_8, window_bounds = array<i64: 128, 128>}, {pipeline_mode = #tpu.pipeline_mode<synchronous>, transform_indices = @transform_9, window_bounds = array<i64: 128, 128>}, {pipeline_mode = #tpu.pipeline_mode<synchronous>, transform_indices = @transform_10, window_bounds = array<i64: 16, 128>}, {pipeline_mode = #tpu.pipeline_mode<synchronous>, transform_indices = @transform_11, window_bounds = array<i64: 8, 128>}, {transform_indices = @transform_12, window_bounds = array<i64: 1, 1>}]} {
    %c0_i32 = arith.constant 0 : i32
    %0 = arith.cmpi eq, %arg0, %c0_i32 : i32
    %1 = arith.extui %0 : i1 to i32
    %c0_i32_0 = arith.constant 0 : i32
    %2 = arith.cmpi ne, %1, %c0_i32_0 : i32
    scf.if %2 {
      %cst_22 = arith.constant 0.000000e+00 : f32
      %43 = vector.broadcast %cst_22 : f32 to vector<8x128xf32>
      %c0_23 = arith.constant 0 : index
      %c0_24 = arith.constant 0 : index
      %44 = vector.load %arg14[%c0_23, %c0_24] : memref<8x128xf32, #tpu.memory_space<vmem>>, vector<8x128xf32>
      tpu.vector_store %arg14[%c0_23, %c0_24], %43 {strides = array<i32>} : memref<8x128xf32, #tpu.memory_space<vmem>>, vector<8x128xf32>,
      %cst_25 = arith.constant 0.000000e+00 : f32
      %c0_26 = arith.constant 0 : index
      %45 = memref.load %arg15[%c0_26] : memref<1xf32, #tpu.memory_space<smem>>
      memref.store %cst_25, %arg15[%c0_26] : memref<1xf32, #tpu.memory_space<smem>>
    } else {
    }
    %c0 = arith.constant 0 : index
    %c0_1 = arith.constant 0 : index
    %3 = vector.load %arg2[%c0, %c0_1] : memref<392x128xf32, #tpu.memory_space<vmem>>, vector<392x128xf32>
    %c0_2 = arith.constant 0 : index
    %c0_3 = arith.constant 0 : index
    %4 = vector.load %arg3[%c0_2, %c0_3] : memref<392x128xf32, #tpu.memory_space<vmem>>, vector<392x128xf32>
    %cst = arith.constant 0.000000e+00 : f32
    %5 = vector.broadcast %cst : f32 to vector<392x128xf32>
    %6 = arith.maximumf %4, %5 : vector<392x128xf32>
    %7 = math.absf %4 : vector<392x128xf32>
    %cst_4 = arith.constant 0.000000e+00 : f32
    %8 = vector.broadcast %cst_4 : f32 to vector<392x128xf32>
    %9 = arith.subf %8, %7 : vector<392x128xf32>
    %10 = math.exp %9 : vector<392x128xf32>
    %11 = math.log1p %10 : vector<392x128xf32>
    %12 = arith.addf %6, %11 : vector<392x128xf32>
    %c0_5 = arith.constant 0 : index
    %c0_6 = arith.constant 0 : index
    %13 = vector.load %arg4[%c0_5, %c0_6] : memref<392x128xf32, #tpu.memory_space<vmem>>, vector<392x128xf32>
    %14 = arith.mulf %12, %13 : vector<392x128xf32>
    %15 = arith.addf %3, %14 : vector<392x128xf32>
    %c0_7 = arith.constant 0 : index
    %c0_8 = arith.constant 0 : index
    %16 = vector.load %arg14[%c0_7, %c0_8] : memref<8x128xf32, #tpu.memory_space<vmem>>, vector<8x128xf32>
    %c0_9 = arith.constant 0 : index
    %c0_10 = arith.constant 0 : index
    %c0_11 = arith.constant 0 : index
    %17 = vector.load %arg1[%c0_9, %c0_10, %c0_11] : memref<1x8x392xf32, #tpu.memory_space<vmem>>, vector<1x8x392xf32>
    %18 = vector.shape_cast %17 : vector<1x8x392xf32> to vector<8x392xf32>
    %cst_12 = arith.constant dense<0.000000e+00> : vector<8x128xf32>
    %19 = tpu.matmul %18, %15, %cst_12 {dimension_numbers = #tpu.dot_dimension_numbers<[1], [0], [0], [1], [0, 0, 1, 1], [], []>} : vector<8x392xf32>, vector<392x128xf32>, vector<8x128xf32> -> vector<8x128xf32>
    %20 = arith.addf %16, %19 : vector<8x128xf32>
    %c0_13 = arith.constant 0 : index
    %c0_14 = arith.constant 0 : index
    %21 = vector.load %arg14[%c0_13, %c0_14] : memref<8x128xf32, #tpu.memory_space<vmem>>, vector<8x128xf32>
    tpu.vector_store %arg14[%c0_13, %c0_14], %20 {strides = array<i32>} : memref<8x128xf32, #tpu.memory_space<vmem>>, vector<8x128xf32>,
    %c0_15 = arith.constant 0 : index
    %22 = memref.load %arg15[%c0_15] : memref<1xf32, #tpu.memory_space<smem>>
    %23 = math.log %12 : vector<392x128xf32>
    %cst_16 = arith.constant 0.000000e+00 : f32
    %24 = vector.broadcast %cst_16 : f32 to vector<392x128xf32>
    %25 = arith.subf %24, %23 : vector<392x128xf32>
    %26 = arith.mulf %12, %12 : vector<392x128xf32>
    %27 = arith.mulf %3, %3 : vector<392x128xf32>
    %28 = arith.addf %26, %27 : vector<392x128xf32>
    %cst_17 = arith.constant 5.000000e-01 : f32
    %29 = vector.broadcast %cst_17 : f32 to vector<392x128xf32>
    %30 = arith.mulf %29, %28 : vector<392x128xf32>
    %31 = arith.addf %25, %30 : vector<392x128xf32>
    %cst_18 = arith.constant 5.000000e-01 : f32
    %32 = vector.broadcast %cst_18 : f32 to vector<392x128xf32>
    %33 = arith.subf %31, %32 : vector<392x128xf32>
    %34 = vector.shape_cast %33 : vector<392x128xf32> to vector<1x392x128xf32>
    %cst_19 = arith.constant dense<0.000000e+00> : vector<1xf32>
    %35 = vector.multi_reduction <add>, %34, %cst_19 [1, 2] : vector<1x392x128xf32> to vector<1xf32>
    %36 = vector.shape_cast %35 : vector<1xf32> to vector<1x1x1xf32>
    %37 = vector.extract %36[0, 0, 0] : f32 from vector<1x1x1xf32>
    %38 = arith.addf %22, %37 : f32
    %c0_20 = arith.constant 0 : index
    %39 = memref.load %arg15[%c0_20] : memref<1xf32, #tpu.memory_space<smem>>
    memref.store %38, %arg15[%c0_20] : memref<1xf32, #tpu.memory_space<smem>>
    %c1_i32 = arith.constant 1 : i32
    %40 = arith.cmpi eq, %arg0, %c1_i32 : i32
    %41 = arith.extui %40 : i1 to i32
    %c0_i32_21 = arith.constant 0 : i32
    %42 = arith.cmpi ne, %41, %c0_i32_21 : i32
    scf.if %42 {
      %c0_22 = arith.constant 0 : index
      %c0_23 = arith.constant 0 : index
      %43 = vector.load %arg11[%c0_22, %c0_23] : memref<16x128xf32, #tpu.memory_space<vmem>>, vector<1x128xf32>
      %c1 = arith.constant 1 : index
      %c0_24 = arith.constant 0 : index
      %44 = vector.load %arg11[%c1, %c0_24] : memref<16x128xf32, #tpu.memory_space<vmem>>, vector<1x128xf32>
      %c2 = arith.constant 2 : index
      %c0_25 = arith.constant 0 : index
      %45 = vector.load %arg11[%c2, %c0_25] : memref<16x128xf32, #tpu.memory_space<vmem>>, vector<1x128xf32>
      %c3 = arith.constant 3 : index
      %c0_26 = arith.constant 0 : index
      %46 = vector.load %arg11[%c3, %c0_26] : memref<16x128xf32, #tpu.memory_space<vmem>>, vector<1x128xf32>
      %c4 = arith.constant 4 : index
      %c0_27 = arith.constant 0 : index
      %47 = vector.load %arg11[%c4, %c0_27] : memref<16x128xf32, #tpu.memory_space<vmem>>, vector<1x128xf32>
      %c5 = arith.constant 5 : index
      %c0_28 = arith.constant 0 : index
      %48 = vector.load %arg11[%c5, %c0_28] : memref<16x128xf32, #tpu.memory_space<vmem>>, vector<1x128xf32>
      %c6 = arith.constant 6 : index
      %c0_29 = arith.constant 0 : index
      %49 = vector.load %arg11[%c6, %c0_29] : memref<16x128xf32, #tpu.memory_space<vmem>>, vector<1x128xf32>
      %c7 = arith.constant 7 : index
      %c0_30 = arith.constant 0 : index
      %50 = vector.load %arg11[%c7, %c0_30] : memref<16x128xf32, #tpu.memory_space<vmem>>, vector<1x128xf32>
      %c8 = arith.constant 8 : index
      %c0_31 = arith.constant 0 : index
      %51 = vector.load %arg11[%c8, %c0_31] : memref<16x128xf32, #tpu.memory_space<vmem>>, vector<1x128xf32>
      %c9 = arith.constant 9 : index
      %c0_32 = arith.constant 0 : index
      %52 = vector.load %arg11[%c9, %c0_32] : memref<16x128xf32, #tpu.memory_space<vmem>>, vector<1x128xf32>
      %c10 = arith.constant 10 : index
      %c0_33 = arith.constant 0 : index
      %53 = vector.load %arg11[%c10, %c0_33] : memref<16x128xf32, #tpu.memory_space<vmem>>, vector<1x128xf32>
      %c11 = arith.constant 11 : index
      %c0_34 = arith.constant 0 : index
      %54 = vector.load %arg11[%c11, %c0_34] : memref<16x128xf32, #tpu.memory_space<vmem>>, vector<1x128xf32>
      %c12 = arith.constant 12 : index
      %c0_35 = arith.constant 0 : index
      %55 = vector.load %arg11[%c12, %c0_35] : memref<16x128xf32, #tpu.memory_space<vmem>>, vector<1x128xf32>
      %cst_36 = arith.constant 0.000000e+00 : f32
      %56 = vector.broadcast %cst_36 : f32 to vector<1x128xf32>
      %57 = arith.maximumf %44, %56 : vector<1x128xf32>
      %58 = math.absf %44 : vector<1x128xf32>
      %cst_37 = arith.constant 0.000000e+00 : f32
      %59 = vector.broadcast %cst_37 : f32 to vector<1x128xf32>
      %60 = arith.subf %59, %58 : vector<1x128xf32>
      %61 = math.exp %60 : vector<1x128xf32>
      %62 = math.log1p %61 : vector<1x128xf32>
      %63 = arith.addf %57, %62 : vector<1x128xf32>
      %64 = arith.mulf %63, %45 : vector<1x128xf32>
      %65 = arith.addf %43, %64 : vector<1x128xf32>
      %66 = math.log %63 : vector<1x128xf32>
      %cst_38 = arith.constant 0.000000e+00 : f32
      %67 = vector.broadcast %cst_38 : f32 to vector<1x128xf32>
      %68 = arith.subf %67, %66 : vector<1x128xf32>
      %69 = arith.mulf %63, %63 : vector<1x128xf32>
      %70 = arith.mulf %43, %43 : vector<1x128xf32>
      %71 = arith.addf %69, %70 : vector<1x128xf32>
      %cst_39 = arith.constant 5.000000e-01 : f32
      %72 = vector.broadcast %cst_39 : f32 to vector<1x128xf32>
      %73 = arith.mulf %72, %71 : vector<1x128xf32>
      %74 = arith.addf %68, %73 : vector<1x128xf32>
      %cst_40 = arith.constant 5.000000e-01 : f32
      %75 = vector.broadcast %cst_40 : f32 to vector<1x128xf32>
      %76 = arith.subf %74, %75 : vector<1x128xf32>
      %77 = vector.shape_cast %76 : vector<1x128xf32> to vector<1x1x128xf32>
      %cst_41 = arith.constant dense<0.000000e+00> : vector<1xf32>
      %78 = vector.multi_reduction <add>, %77, %cst_41 [1, 2] : vector<1x1x128xf32> to vector<1xf32>
      %79 = vector.shape_cast %78 : vector<1xf32> to vector<1x1x1xf32>
      %80 = vector.extract %79[0, 0, 0] : f32 from vector<1x1x1xf32>
      %c0_42 = arith.constant 0 : index
      %c0_43 = arith.constant 0 : index
      %81 = vector.load %arg14[%c0_42, %c0_43] : memref<8x128xf32, #tpu.memory_space<vmem>>, vector<8x128xf32>
      %82 = vector.broadcast %65 : vector<1x128xf32> to vector<8x128xf32>
      %83 = arith.addf %81, %82 : vector<8x128xf32>
      %cst_44 = arith.constant dense<0.000000e+00> : vector<128xf32>
      %84 = vector.multi_reduction <add>, %83, %cst_44 [0] : vector<8x128xf32> to vector<128xf32>
      %85 = vector.shape_cast %84 : vector<128xf32> to vector<1x128xf32>
      %cst_45 = arith.constant 8.000000e+00 : f32
      %86 = vector.broadcast %cst_45 : f32 to vector<1x128xf32>
      %87 = arith.divf %85, %86 : vector<1x128xf32>
      %88 = vector.broadcast %87 : vector<1x128xf32> to vector<8x128xf32>
      %89 = arith.subf %83, %88 : vector<8x128xf32>
      %90 = arith.mulf %89, %89 : vector<8x128xf32>
      %cst_46 = arith.constant dense<0.000000e+00> : vector<128xf32>
      %91 = vector.multi_reduction <add>, %90, %cst_46 [0] : vector<8x128xf32> to vector<128xf32>
      %92 = vector.shape_cast %91 : vector<128xf32> to vector<1x128xf32>
      %cst_47 = arith.constant 8.000000e+00 : f32
      %93 = vector.broadcast %cst_47 : f32 to vector<1x128xf32>
      %94 = arith.divf %92, %93 : vector<1x128xf32>
      %95 = vector.broadcast %87 : vector<1x128xf32> to vector<8x128xf32>
      %96 = arith.subf %83, %95 : vector<8x128xf32>
      %cst_48 = arith.constant 9.99999974E-6 : f32
      %97 = vector.broadcast %cst_48 : f32 to vector<1x128xf32>
      %98 = arith.addf %94, %97 : vector<1x128xf32>
      %99 = math.rsqrt %98 : vector<1x128xf32>
      %100 = vector.broadcast %99 : vector<1x128xf32> to vector<8x128xf32>
      %101 = arith.mulf %96, %100 : vector<8x128xf32>
      %102 = vector.broadcast %46 : vector<1x128xf32> to vector<8x128xf32>
      %103 = arith.mulf %101, %102 : vector<8x128xf32>
      %104 = vector.broadcast %47 : vector<1x128xf32> to vector<8x128xf32>
      %105 = arith.addf %103, %104 : vector<8x128xf32>
      %cst_49 = arith.constant 0.000000e+00 : f32
      %106 = vector.broadcast %cst_49 : f32 to vector<8x128xf32>
      %107 = arith.maximumf %105, %106 : vector<8x128xf32>
      %c0_50 = arith.constant 0 : index
      %c0_51 = arith.constant 0 : index
      %108 = vector.load %arg5[%c0_50, %c0_51] : memref<128x128xf32, #tpu.memory_space<vmem>>, vector<128x128xf32>
      %c0_52 = arith.constant 0 : index
      %c0_53 = arith.constant 0 : index
      %109 = vector.load %arg6[%c0_52, %c0_53] : memref<128x128xf32, #tpu.memory_space<vmem>>, vector<128x128xf32>
      %c0_54 = arith.constant 0 : index
      %c0_55 = arith.constant 0 : index
      %110 = vector.load %arg7[%c0_54, %c0_55] : memref<128x128xf32, #tpu.memory_space<vmem>>, vector<128x128xf32>
      %cst_56 = arith.constant 0.000000e+00 : f32
      %111 = vector.broadcast %cst_56 : f32 to vector<128x128xf32>
      %112 = arith.maximumf %109, %111 : vector<128x128xf32>
      %113 = math.absf %109 : vector<128x128xf32>
      %cst_57 = arith.constant 0.000000e+00 : f32
      %114 = vector.broadcast %cst_57 : f32 to vector<128x128xf32>
      %115 = arith.subf %114, %113 : vector<128x128xf32>
      %116 = math.exp %115 : vector<128x128xf32>
      %117 = math.log1p %116 : vector<128x128xf32>
      %118 = arith.addf %112, %117 : vector<128x128xf32>
      %119 = arith.mulf %118, %110 : vector<128x128xf32>
      %120 = arith.addf %108, %119 : vector<128x128xf32>
      %121 = math.log %118 : vector<128x128xf32>
      %cst_58 = arith.constant 0.000000e+00 : f32
      %122 = vector.broadcast %cst_58 : f32 to vector<128x128xf32>
      %123 = arith.subf %122, %121 : vector<128x128xf32>
      %124 = arith.mulf %118, %118 : vector<128x128xf32>
      %125 = arith.mulf %108, %108 : vector<128x128xf32>
      %126 = arith.addf %124, %125 : vector<128x128xf32>
      %cst_59 = arith.constant 5.000000e-01 : f32
      %127 = vector.broadcast %cst_59 : f32 to vector<128x128xf32>
      %128 = arith.mulf %127, %126 : vector<128x128xf32>
      %129 = arith.addf %123, %128 : vector<128x128xf32>
      %cst_60 = arith.constant 5.000000e-01 : f32
      %130 = vector.broadcast %cst_60 : f32 to vector<128x128xf32>
      %131 = arith.subf %129, %130 : vector<128x128xf32>
      %132 = vector.shape_cast %131 : vector<128x128xf32> to vector<1x128x128xf32>
      %cst_61 = arith.constant dense<0.000000e+00> : vector<1xf32>
      %133 = vector.multi_reduction <add>, %132, %cst_61 [1, 2] : vector<1x128x128xf32> to vector<1xf32>
      %134 = vector.shape_cast %133 : vector<1xf32> to vector<1x1x1xf32>
      %135 = vector.extract %134[0, 0, 0] : f32 from vector<1x1x1xf32>
      %cst_62 = arith.constant 0.000000e+00 : f32
      %136 = vector.broadcast %cst_62 : f32 to vector<1x128xf32>
      %137 = arith.maximumf %49, %136 : vector<1x128xf32>
      %138 = math.absf %49 : vector<1x128xf32>
      %cst_63 = arith.constant 0.000000e+00 : f32
      %139 = vector.broadcast %cst_63 : f32 to vector<1x128xf32>
      %140 = arith.subf %139, %138 : vector<1x128xf32>
      %141 = math.exp %140 : vector<1x128xf32>
      %142 = math.log1p %141 : vector<1x128xf32>
      %143 = arith.addf %137, %142 : vector<1x128xf32>
      %144 = arith.mulf %143, %50 : vector<1x128xf32>
      %145 = arith.addf %48, %144 : vector<1x128xf32>
      %146 = math.log %143 : vector<1x128xf32>
      %cst_64 = arith.constant 0.000000e+00 : f32
      %147 = vector.broadcast %cst_64 : f32 to vector<1x128xf32>
      %148 = arith.subf %147, %146 : vector<1x128xf32>
      %149 = arith.mulf %143, %143 : vector<1x128xf32>
      %150 = arith.mulf %48, %48 : vector<1x128xf32>
      %151 = arith.addf %149, %150 : vector<1x128xf32>
      %cst_65 = arith.constant 5.000000e-01 : f32
      %152 = vector.broadcast %cst_65 : f32 to vector<1x128xf32>
      %153 = arith.mulf %152, %151 : vector<1x128xf32>
      %154 = arith.addf %148, %153 : vector<1x128xf32>
      %cst_66 = arith.constant 5.000000e-01 : f32
      %155 = vector.broadcast %cst_66 : f32 to vector<1x128xf32>
      %156 = arith.subf %154, %155 : vector<1x128xf32>
      %157 = vector.shape_cast %156 : vector<1x128xf32> to vector<1x1x128xf32>
      %cst_67 = arith.constant dense<0.000000e+00> : vector<1xf32>
      %158 = vector.multi_reduction <add>, %157, %cst_67 [1, 2] : vector<1x1x128xf32> to vector<1xf32>
      %159 = vector.shape_cast %158 : vector<1xf32> to vector<1x1x1xf32>
      %160 = vector.extract %159[0, 0, 0] : f32 from vector<1x1x1xf32>
      %cst_68 = arith.constant dense<0.000000e+00> : vector<8x128xf32>
      %161 = tpu.matmul %107, %120, %cst_68 {dimension_numbers = #tpu.dot_dimension_numbers<[1], [0], [0], [1], [0, 0, 1, 1], [], []>} : vector<8x128xf32>, vector<128x128xf32>, vector<8x128xf32> -> vector<8x128xf32>
      %162 = vector.broadcast %145 : vector<1x128xf32> to vector<8x128xf32>
      %163 = arith.addf %161, %162 : vector<8x128xf32>
      %cst_69 = arith.constant dense<0.000000e+00> : vector<128xf32>
      %164 = vector.multi_reduction <add>, %163, %cst_69 [0] : vector<8x128xf32> to vector<128xf32>
      %165 = vector.shape_cast %164 : vector<128xf32> to vector<1x128xf32>
      %cst_70 = arith.constant 8.000000e+00 : f32
      %166 = vector.broadcast %cst_70 : f32 to vector<1x128xf32>
      %167 = arith.divf %165, %166 : vector<1x128xf32>
      %168 = vector.broadcast %167 : vector<1x128xf32> to vector<8x128xf32>
      %169 = arith.subf %163, %168 : vector<8x128xf32>
      %170 = arith.mulf %169, %169 : vector<8x128xf32>
      %cst_71 = arith.constant dense<0.000000e+00> : vector<128xf32>
      %171 = vector.multi_reduction <add>, %170, %cst_71 [0] : vector<8x128xf32> to vector<128xf32>
      %172 = vector.shape_cast %171 : vector<128xf32> to vector<1x128xf32>
      %cst_72 = arith.constant 8.000000e+00 : f32
      %173 = vector.broadcast %cst_72 : f32 to vector<1x128xf32>
      %174 = arith.divf %172, %173 : vector<1x128xf32>
      %175 = vector.broadcast %167 : vector<1x128xf32> to vector<8x128xf32>
      %176 = arith.subf %163, %175 : vector<8x128xf32>
      %cst_73 = arith.constant 9.99999974E-6 : f32
      %177 = vector.broadcast %cst_73 : f32 to vector<1x128xf32>
      %178 = arith.addf %174, %177 : vector<1x128xf32>
      %179 = math.rsqrt %178 : vector<1x128xf32>
      %180 = vector.broadcast %179 : vector<1x128xf32> to vector<8x128xf32>
      %181 = arith.mulf %176, %180 : vector<8x128xf32>
      %182 = vector.broadcast %51 : vector<1x128xf32> to vector<8x128xf32>
      %183 = arith.mulf %181, %182 : vector<8x128xf32>
      %184 = vector.broadcast %52 : vector<1x128xf32> to vector<8x128xf32>
      %185 = arith.addf %183, %184 : vector<8x128xf32>
      %cst_74 = arith.constant 0.000000e+00 : f32
      %186 = vector.broadcast %cst_74 : f32 to vector<8x128xf32>
      %187 = arith.maximumf %185, %186 : vector<8x128xf32>
      %c0_75 = arith.constant 0 : index
      %c0_76 = arith.constant 0 : index
      %188 = vector.load %arg8[%c0_75, %c0_76] : memref<128x128xf32, #tpu.memory_space<vmem>>, vector<128x128xf32>
      %c0_77 = arith.constant 0 : index
      %c0_78 = arith.constant 0 : index
      %189 = vector.load %arg9[%c0_77, %c0_78] : memref<128x128xf32, #tpu.memory_space<vmem>>, vector<128x128xf32>
      %c0_79 = arith.constant 0 : index
      %c0_80 = arith.constant 0 : index
      %190 = vector.load %arg10[%c0_79, %c0_80] : memref<128x128xf32, #tpu.memory_space<vmem>>, vector<128x128xf32>
      %cst_81 = arith.constant 0.000000e+00 : f32
      %191 = vector.broadcast %cst_81 : f32 to vector<128x128xf32>
      %192 = arith.maximumf %189, %191 : vector<128x128xf32>
      %193 = math.absf %189 : vector<128x128xf32>
      %cst_82 = arith.constant 0.000000e+00 : f32
      %194 = vector.broadcast %cst_82 : f32 to vector<128x128xf32>
      %195 = arith.subf %194, %193 : vector<128x128xf32>
      %196 = math.exp %195 : vector<128x128xf32>
      %197 = math.log1p %196 : vector<128x128xf32>
      %198 = arith.addf %192, %197 : vector<128x128xf32>
      %199 = arith.mulf %198, %190 : vector<128x128xf32>
      %200 = arith.addf %188, %199 : vector<128x128xf32>
      %201 = math.log %198 : vector<128x128xf32>
      %cst_83 = arith.constant 0.000000e+00 : f32
      %202 = vector.broadcast %cst_83 : f32 to vector<128x128xf32>
      %203 = arith.subf %202, %201 : vector<128x128xf32>
      %204 = arith.mulf %198, %198 : vector<128x128xf32>
      %205 = arith.mulf %188, %188 : vector<128x128xf32>
      %206 = arith.addf %204, %205 : vector<128x128xf32>
      %cst_84 = arith.constant 5.000000e-01 : f32
      %207 = vector.broadcast %cst_84 : f32 to vector<128x128xf32>
      %208 = arith.mulf %207, %206 : vector<128x128xf32>
      %209 = arith.addf %203, %208 : vector<128x128xf32>
      %cst_85 = arith.constant 5.000000e-01 : f32
      %210 = vector.broadcast %cst_85 : f32 to vector<128x128xf32>
      %211 = arith.subf %209, %210 : vector<128x128xf32>
      %212 = vector.shape_cast %211 : vector<128x128xf32> to vector<1x128x128xf32>
      %cst_86 = arith.constant dense<0.000000e+00> : vector<1xf32>
      %213 = vector.multi_reduction <add>, %212, %cst_86 [1, 2] : vector<1x128x128xf32> to vector<1xf32>
      %214 = vector.shape_cast %213 : vector<1xf32> to vector<1x1x1xf32>
      %215 = vector.extract %214[0, 0, 0] : f32 from vector<1x1x1xf32>
      %cst_87 = arith.constant 0.000000e+00 : f32
      %216 = vector.broadcast %cst_87 : f32 to vector<1x128xf32>
      %217 = arith.maximumf %54, %216 : vector<1x128xf32>
      %218 = math.absf %54 : vector<1x128xf32>
      %cst_88 = arith.constant 0.000000e+00 : f32
      %219 = vector.broadcast %cst_88 : f32 to vector<1x128xf32>
      %220 = arith.subf %219, %218 : vector<1x128xf32>
      %221 = math.exp %220 : vector<1x128xf32>
      %222 = math.log1p %221 : vector<1x128xf32>
      %223 = arith.addf %217, %222 : vector<1x128xf32>
      %224 = arith.mulf %223, %55 : vector<1x128xf32>
      %225 = arith.addf %53, %224 : vector<1x128xf32>
      %226 = math.log %223 : vector<1x128xf32>
      %cst_89 = arith.constant 0.000000e+00 : f32
      %227 = vector.broadcast %cst_89 : f32 to vector<1x128xf32>
      %228 = arith.subf %227, %226 : vector<1x128xf32>
      %229 = arith.mulf %223, %223 : vector<1x128xf32>
      %230 = arith.mulf %53, %53 : vector<1x128xf32>
      %231 = arith.addf %229, %230 : vector<1x128xf32>
      %cst_90 = arith.constant 5.000000e-01 : f32
      %232 = vector.broadcast %cst_90 : f32 to vector<1x128xf32>
      %233 = arith.mulf %232, %231 : vector<1x128xf32>
      %234 = arith.addf %228, %233 : vector<1x128xf32>
      %cst_91 = arith.constant 5.000000e-01 : f32
      %235 = vector.broadcast %cst_91 : f32 to vector<1x128xf32>
      %236 = arith.subf %234, %235 : vector<1x128xf32>
      %237 = vector.shape_cast %236 : vector<1x128xf32> to vector<1x1x128xf32>
      %cst_92 = arith.constant dense<0.000000e+00> : vector<1xf32>
      %238 = vector.multi_reduction <add>, %237, %cst_92 [1, 2] : vector<1x1x128xf32> to vector<1xf32>
      %239 = vector.shape_cast %238 : vector<1xf32> to vector<1x1x1xf32>
      %240 = vector.extract %239[0, 0, 0] : f32 from vector<1x1x1xf32>
      %cst_93 = arith.constant dense<0.000000e+00> : vector<8x128xf32>
      %241 = tpu.matmul %187, %200, %cst_93 {dimension_numbers = #tpu.dot_dimension_numbers<[1], [0], [0], [1], [0, 0, 1, 1], [], []>} : vector<8x128xf32>, vector<128x128xf32>, vector<8x128xf32> -> vector<8x128xf32>
      %242 = vector.broadcast %225 : vector<1x128xf32> to vector<8x128xf32>
      %243 = arith.addf %241, %242 : vector<8x128xf32>
      %c0_94 = arith.constant 0 : index
      %c0_95 = arith.constant 0 : index
      %244 = vector.load %arg12[%c0_94, %c0_95] : memref<8x128xf32, #tpu.memory_space<vmem>>, vector<8x128xf32>
      tpu.vector_store %arg12[%c0_94, %c0_95], %243 {strides = array<i32>} : memref<8x128xf32, #tpu.memory_space<vmem>>, vector<8x128xf32>,
      %c0_96 = arith.constant 0 : index
      %245 = memref.load %arg15[%c0_96] : memref<1xf32, #tpu.memory_space<smem>>
      %cst_97 = arith.constant 7.840000e+04 : f32
      %246 = arith.divf %245, %cst_97 : f32
      %cst_98 = arith.constant 1.000000e+02 : f32
      %247 = arith.divf %80, %cst_98 : f32
      %248 = arith.addf %246, %247 : f32
      %cst_99 = arith.constant 1.000000e+04 : f32
      %249 = arith.divf %135, %cst_99 : f32
      %250 = arith.addf %248, %249 : f32
      %cst_100 = arith.constant 1.000000e+02 : f32
      %251 = arith.divf %160, %cst_100 : f32
      %252 = arith.addf %250, %251 : f32
      %cst_101 = arith.constant 1.000000e+03 : f32
      %253 = arith.divf %215, %cst_101 : f32
      %254 = arith.addf %252, %253 : f32
      %cst_102 = arith.constant 1.000000e+01 : f32
      %255 = arith.divf %240, %cst_102 : f32
      %256 = arith.addf %254, %255 : f32
      %c0_103 = arith.constant 0 : index
      %c0_104 = arith.constant 0 : index
      %257 = memref.load %arg13[%c0_103, %c0_104] : memref<1x1xf32, #tpu.memory_space<smem>>
      memref.store %256, %arg13[%c0_103, %c0_104] : memref<1x1xf32, #tpu.memory_space<smem>>
    } else {
    }
    return
  }
  func.func @transform_0(%arg0: i32) -> (i32, i32, i32) {
    %c0_i32 = arith.constant 0 : i32
    %c0_i32_0 = arith.constant 0 : i32
    %c0_i32_1 = arith.constant 0 : i32
    return %arg0, %c0_i32, %c0_i32_0 : i32, i32, i32
  }
  func.func @transform_1(%arg0: i32) -> (i32, i32) {
    %c0_i32 = arith.constant 0 : i32
    %c0_i32_0 = arith.constant 0 : i32
    return %arg0, %c0_i32 : i32, i32
  }
  func.func @transform_2(%arg0: i32) -> (i32, i32) {
    %c0_i32 = arith.constant 0 : i32
    %c0_i32_0 = arith.constant 0 : i32
    return %arg0, %c0_i32 : i32, i32
  }
  func.func @transform_3(%arg0: i32) -> (i32, i32) {
    %c0_i32 = arith.constant 0 : i32
    %c0_i32_0 = arith.constant 0 : i32
    return %arg0, %c0_i32 : i32, i32
  }
  func.func @transform_4(%arg0: i32) -> (i32, i32) {
    %c0_i32 = arith.constant 0 : i32
    %c0_i32_0 = arith.constant 0 : i32
    %c0_i32_1 = arith.constant 0 : i32
    return %c0_i32, %c0_i32_0 : i32, i32
  }
  func.func @transform_5(%arg0: i32) -> (i32, i32) {
    %c0_i32 = arith.constant 0 : i32
    %c0_i32_0 = arith.constant 0 : i32
    %c0_i32_1 = arith.constant 0 : i32
    return %c0_i32, %c0_i32_0 : i32, i32
  }
  func.func @transform_6(%arg0: i32) -> (i32, i32) {
    %c0_i32 = arith.constant 0 : i32
    %c0_i32_0 = arith.constant 0 : i32
    %c0_i32_1 = arith.constant 0 : i32
    return %c0_i32, %c0_i32_0 : i32, i32
  }
  func.func @transform_7(%arg0: i32) -> (i32, i32) {
    %c0_i32 = arith.constant 0 : i32
    %c0_i32_0 = arith.constant 0 : i32
    %c0_i32_1 = arith.constant 0 : i32
    return %c0_i32, %c0_i32_0 : i32, i32
  }
  func.func @transform_8(%arg0: i32) -> (i32, i32) {
    %c0_i32 = arith.constant 0 : i32
    %c0_i32_0 = arith.constant 0 : i32
    %c0_i32_1 = arith.constant 0 : i32
    return %c0_i32, %c0_i32_0 : i32, i32
  }
  func.func @transform_9(%arg0: i32) -> (i32, i32) {
    %c0_i32 = arith.constant 0 : i32
    %c0_i32_0 = arith.constant 0 : i32
    %c0_i32_1 = arith.constant 0 : i32
    return %c0_i32, %c0_i32_0 : i32, i32
  }
  func.func @transform_10(%arg0: i32) -> (i32, i32) {
    %c0_i32 = arith.constant 0 : i32
    %c0_i32_0 = arith.constant 0 : i32
    %c0_i32_1 = arith.constant 0 : i32
    return %c0_i32, %c0_i32_0 : i32, i32
  }
  func.func @transform_11(%arg0: i32) -> (i32, i32) {
    %c0_i32 = arith.constant 0 : i32
    %c0_i32_0 = arith.constant 0 : i32
    %c0_i32_1 = arith.constant 0 : i32
    return %c0_i32, %c0_i32_0 : i32, i32
  }
  func.func @transform_12(%arg0: i32) -> (i32, i32) {
    %c0_i32 = arith.constant 0 : i32
    %c0_i32_0 = arith.constant 0 : i32
    %c0_i32_1 = arith.constant 0 : i32
    return %c0_i32, %c0_i32_0 : i32, i32
  }
}

</mosaic_0001>

<llo_original>
// kernel: tpu_custom_call.1
$region0: #{tpu_custom_call.1}
  #allocation0 [shape = 'u32[]', space=smem, size = 0x4, offset = 0x4, fixed_abs, tag = 'smem constant byte address 0x4 - core index']
  #allocation1 [shape = 'u32[144,128]{1,0:T(1,128)}', space=vmem, size = 0x12000, scoped, tag = 'internal scratch']
  #allocation2 [shape = 'f32[8,128]{1,0:T(8,128)}', space=vmem, size = 0x1000, scoped, tag = 'scratch operand']
  #allocation3 [shape = 'f32[1]{0:T(128)}', space=smem, size = 0x200, scoped, tag = 'scratch operand']
  %s0 = inlined_call_operand.hbm [shape: f32[2,8,392], index: 0, kind: input, shape index: {}]
  %s1 = inlined_call_operand.hbm [shape: f32[784,128], index: 1, kind: input, shape index: {}]
  %s2 = inlined_call_operand.hbm [shape: f32[784,128], index: 2, kind: input, shape index: {}]
  %s3 = inlined_call_operand.hbm [shape: f32[784,128], index: 3, kind: input, shape index: {}]
  %s4 = inlined_call_operand.hbm [shape: f32[128,128], index: 4, kind: input, shape index: {}]
  %s5 = inlined_call_operand.hbm [shape: f32[128,128], index: 5, kind: input, shape index: {}]
  %s6 = inlined_call_operand.hbm [shape: f32[128,128], index: 6, kind: input, shape index: {}]
  %s7 = inlined_call_operand.hbm [shape: f32[128,128], index: 7, kind: input, shape index: {}]
  %s8 = inlined_call_operand.hbm [shape: f32[128,128], index: 8, kind: input, shape index: {}]
  %s9 = inlined_call_operand.hbm [shape: f32[128,128], index: 9, kind: input, shape index: {}]
  %s10 = inlined_call_operand.vmem [shape: f32[16,128], index: 10, kind: input, shape index: {}]
  %s11 = inlined_call_operand.hbm [shape: f32[8,128], index: 11, kind: output, shape index: {0}]
  %s12 = inlined_call_operand.hbm [shape: f32[1,1], index: 12, kind: output, shape index: {1}]
  %13 = xla_tuple %s11, %s12
  %s14 = sld [smem:[#allocation0]]
  $region133: #{tpu_custom_call.1} parent=0
    _
  %s16 = ssub.s32 1, %s14
  %s17 = scalar_select 0, %s16, %s14
  $region1: #{tpu_custom_call.1} parent=0
    #allocation4 [shape = 'u8[32768]{0}', space=vmem, size = 0x8000, scoped, tag = 'input window, operand 0']
    #allocation5 [shape = 's32[2]{0}', space=sflag, size = 0x8, scoped, tag = 'scoped memory for tpu_custom_call.1']
    #allocation6 [shape = 's32[2]{0}', space=sflag, size = 0x8, scoped, tag = 'scoped memory for tpu_custom_call.1']
    #allocation7 [shape = 's32[2]{0}', space=sflag, size = 0x8, scoped, tag = 'scoped memory for tpu_custom_call.1']
    #allocation8 [shape = 'u8[401408]{0}', space=vmem, size = 0x62000, scoped, tag = 'input window, operand 1']
    #allocation9 [shape = 's32[2]{0}', space=sflag, size = 0x8, scoped, tag = 'scoped memory for tpu_custom_call.1']
    #allocation10 [shape = 'u8[401408]{0}', space=vmem, size = 0x62000, scoped, tag = 'input window, operand 2']
    #allocation11 [shape = 'u8[401408]{0}', space=vmem, size = 0x62000, scoped, tag = 'input window, operand 3']
    #allocation12 [shape = 's32[2]{0}', space=sflag, size = 0x8, scoped, tag = 'scoped memory for tpu_custom_call.1']
    #allocation13 [shape = 'u8[65536]{0}', space=vmem, size = 0x10000, scoped, tag = 'input window, operand 4, single buffered']
    #allocation14 [shape = 'u8[65536]{0}', space=vmem, size = 0x10000, scoped, tag = 'input window, operand 5, single buffered']
    #allocation15 [shape = 's32[1]{0}', space=sflag, size = 0x4, scoped, tag = 'scoped memory for tpu_custom_call.1']
    #allocation16 [shape = 'u8[65536]{0}', space=vmem, size = 0x10000, scoped, tag = 'input window, operand 6, single buffered']
    #allocation17 [shape = 'u8[65536]{0}', space=vmem, size = 0x10000, scoped, tag = 'input window, operand 7, single buffered']
    #allocation18 [shape = 's32[1]{0}', space=sflag, size = 0x4, scoped, tag = 'scoped memory for tpu_custom_call.1']
    #allocation19 [shape = 'u8[65536]{0}', space=vmem, size = 0x10000, scoped, tag = 'input window, operand 8, single buffered']
    #allocation20 [shape = 'u8[65536]{0}', space=vmem, size = 0x10000, scoped, tag = 'input window, operand 9, single buffered']
    #allocation21 [shape = 's32[1]{0}', space=sflag, size = 0x4, scoped, tag = 'scoped memory for tpu_custom_call.1']
    #allocation22 [shape = 'u8[4096]{0}', space=vmem, size = 0x1000, scoped, tag = 'output window, operand 0, single buffered']
    #allocation23 [shape = 'u8[512]{0}', space=smem, size = 0x200, scoped, tag = 'output window, operand 1, single buffered']
    %18 = vsyncpa [#allocation5], 0
    %s19 = scalar_lea.sflag [#allocation5], 1
    %20 = vsyncpa %s19, 0
    %21 = vsyncpa [#allocation9], 0
    %s22 = scalar_lea.sflag [#allocation9], 1
    %23 = vsyncpa %s22, 0
    %24 = vsyncpa [#allocation12], 0
    %s25 = scalar_lea.sflag [#allocation12], 1
    %26 = vsyncpa %s25, 0
    %27 = vsyncpa [#allocation15], 0
    %28 = vsyncpa [#allocation18], 0
    %29 = vsyncpa [#allocation21], 0
    %30 = vsyncpa [#allocation6], 0
    %31 = vsyncpa [#allocation7], 0
    loop: start=0, step=1, limit=4
    $region2: #{tpu_custom_call.1} parent=1 // loop_pre_header
      _
    $region3: #{tpu_custom_call.1} parent=1 // loop_header
      %s33 = sphi 0, %s37
      %p34 = scmp.ge.s32.totalorder %s33, 4
      %s43 = sphi 0, %s45
      %s46 = sphi 0, %s43
      %s47 = sphi 0, %s46
      %s63 = sphi 0, %s47
      %s69 = sphi 0, %s71
      %s72 = sphi 0, %s69
      %s73 = sphi 0, %s72
      %s89 = sphi 0, %s73
      %s95 = sphi 0, %s97
      %s98 = sphi 0, %s95
      %s99 = sphi 0, %s98
      %s115 = sphi 0, %s99
      %s121 = sphi 0, %s123
      %s124 = sphi 0, %s121
      %s125 = sphi 0, %s124
      %s141 = sphi 0, %s125
      %s145 = sphi 0, %s145
      %s147 = sphi 0, %s145
      %s148 = sphi 0, %s147
      %s162 = sphi 0, %s148
      %s166 = sphi 0, %s166
      %s168 = sphi 0, %s166
      %s169 = sphi 0, %s168
      %s183 = sphi 0, %s169
      %s187 = sphi 0, %s187
      %s189 = sphi 0, %s187
      %s190 = sphi 0, %s189
      %s204 = sphi 0, %s190
      %s208 = sphi 0, %s208
      %s210 = sphi 0, %s208
      %s211 = sphi 0, %s210
      %s225 = sphi 0, %s211
      %s229 = sphi 0, %s229
      %s231 = sphi 0, %s229
      %s232 = sphi 0, %s231
      %s246 = sphi 0, %s232
      %s250 = sphi 0, %s250
      %s252 = sphi 0, %s250
      %s253 = sphi 0, %s252
      %s267 = sphi 0, %s253
      %s271 = sphi 0, %s271
      %s273 = sphi 0, %s271
      %s274 = sphi 0, %s273
      %s288 = sphi 0, %s274
      %s292 = sphi 0, %s292
      %s294 = sphi 0, %s292
      %s295 = sphi 0, %s294
      %s309 = sphi 0, %s295
      %s313 = sphi 0, %s313
      %s315 = sphi 0, %s313
      %s316 = sphi 0, %s315
      %s330 = sphi 0, %s316
    $region4: #{tpu_custom_call.1} parent=1 // loop_header_branch
      %36 = sbr.rel (%p34) target = $region8
    $region5: #{tpu_custom_call.1} parent=1 // loop_body
      %s38 = ssub.s32 %s33, 1
      %s39 = ssub.s32 %s33, 2
      %s40 = sadd.s32 %s33, 1
      %s41 = ssub.s32 %s33, %s40
      %p42 = scmp.eq.s32.totalorder %s41, 0
      %s44 = sadd.s32 %s43, 1
      %s45 = scalar_select %p42, %s43, %s44
      %p48 = pneg %p42
      %p49 = scmp.eq.s32.totalorder %s33, 1
      %p50 = por %p48, %p49
      %p51 = scmp.ne.s32.totalorder %s43, %s46
      %p52 = scmp.eq.s32.totalorder %s33, 0
      %p53 = por %p51, %p52
      %p54 = scmp.ne.s32.totalorder %s43, %s46
      %p55 = scmp.eq.s32.totalorder %s38, 1
      %p56 = por %p54, %p55
      %p57 = scmp.ne.s32.totalorder %s46, %s47
      %p58 = scmp.eq.s32.totalorder %s38, 0
      %p59 = por %p57, %p58
      %p60 = scmp.ne.s32.totalorder %s46, %s47
      %p61 = scmp.eq.s32.totalorder %s39, 1
      %p62 = por %p60, %p61
      %p64 = scmp.ne.s32.totalorder %s47, %s63
      %p65 = scmp.eq.s32.totalorder %s39, 0
      %p66 = por %p64, %p65
      %s67 = ssub.s32 %s33, %s40
      %p68 = scmp.eq.s32.totalorder %s67, 0
      %s70 = sadd.s32 %s69, 1
      %s71 = scalar_select %p68, %s69, %s70
      %p74 = pneg %p68
      %p75 = scmp.eq.s32.totalorder %s33, 1
      %p76 = por %p74, %p75
      %p77 = scmp.ne.s32.totalorder %s69, %s72
      %p78 = scmp.eq.s32.totalorder %s33, 0
      %p79 = por %p77, %p78
      %p80 = scmp.ne.s32.totalorder %s69, %s72
      %p81 = scmp.eq.s32.totalorder %s38, 1
      %p82 = por %p80, %p81
      %p83 = scmp.ne.s32.totalorder %s72, %s73
      %p84 = scmp.eq.s32.totalorder %s38, 0
      %p85 = por %p83, %p84
      %p86 = scmp.ne.s32.totalorder %s72, %s73
      %p87 = scmp.eq.s32.totalorder %s39, 1
      %p88 = por %p86, %p87
      %p90 = scmp.ne.s32.totalorder %s73, %s89
      %p91 = scmp.eq.s32.totalorder %s39, 0
      %p92 = por %p90, %p91
      %s93 = ssub.s32 %s33, %s40
      %p94 = scmp.eq.s32.totalorder %s93, 0
      %s96 = sadd.s32 %s95, 1
      %s97 = scalar_select %p94, %s95, %s96
      %p100 = pneg %p94
      %p101 = scmp.eq.s32.totalorder %s33, 1
      %p102 = por %p100, %p101
      %p103 = scmp.ne.s32.totalorder %s95, %s98
      %p104 = scmp.eq.s32.totalorder %s33, 0
      %p105 = por %p103, %p104
      %p106 = scmp.ne.s32.totalorder %s95, %s98
      %p107 = scmp.eq.s32.totalorder %s38, 1
      %p108 = por %p106, %p107
      %p109 = scmp.ne.s32.totalorder %s98, %s99
      %p110 = scmp.eq.s32.totalorder %s38, 0
      %p111 = por %p109, %p110
      %p112 = scmp.ne.s32.totalorder %s98, %s99
      %p113 = scmp.eq.s32.totalorder %s39, 1
      %p114 = por %p112, %p113
      %p116 = scmp.ne.s32.totalorder %s99, %s115
      %p117 = scmp.eq.s32.totalorder %s39, 0
      %p118 = por %p116, %p117
      %s119 = ssub.s32 %s33, %s40
      %p120 = scmp.eq.s32.totalorder %s119, 0
      %s122 = sadd.s32 %s121, 1
      %s123 = scalar_select %p120, %s121, %s122
      %p126 = pneg %p120
      %p127 = scmp.eq.s32.totalorder %s33, 1
      %p128 = por %p126, %p127
      %p129 = scmp.ne.s32.totalorder %s121, %s124
      %p130 = scmp.eq.s32.totalorder %s33, 0
      %p131 = por %p129, %p130
      %p132 = scmp.ne.s32.totalorder %s121, %s124
      %p133 = scmp.eq.s32.totalorder %s38, 1
      %p134 = por %p132, %p133
      %p135 = scmp.ne.s32.totalorder %s124, %s125
      %p136 = scmp.eq.s32.totalorder %s38, 0
      %p137 = por %p135, %p136
      %p138 = scmp.ne.s32.totalorder %s124, %s125
      %p139 = scmp.eq.s32.totalorder %s39, 1
      %p140 = por %p138, %p139
      %p142 = scmp.ne.s32.totalorder %s125, %s141
      %p143 = scmp.eq.s32.totalorder %s39, 0
      %p144 = por %p142, %p143
      %s146 = sadd.s32 %s145, 1
      %p149 = scmp.eq.s32.totalorder %s33, 1
      %p150 = scmp.ne.s32.totalorder %s145, %s147
      %p151 = scmp.eq.s32.totalorder %s33, 0
      %p152 = por %p150, %p151
      %p153 = scmp.ne.s32.totalorder %s145, %s147
      %p154 = scmp.eq.s32.totalorder %s38, 1
      %p155 = por %p153, %p154
      %p156 = scmp.ne.s32.totalorder %s147, %s148
      %p157 = scmp.eq.s32.totalorder %s38, 0
      %p158 = por %p156, %p157
      %p159 = scmp.ne.s32.totalorder %s147, %s148
      %p160 = scmp.eq.s32.totalorder %s39, 1
      %p161 = por %p159, %p160
      %p163 = scmp.ne.s32.totalorder %s148, %s162
      %p164 = scmp.eq.s32.totalorder %s39, 0
      %p165 = por %p163, %p164
      %s167 = sadd.s32 %s166, 1
      %p170 = scmp.eq.s32.totalorder %s33, 1
      %p171 = scmp.ne.s32.totalorder %s166, %s168
      %p172 = scmp.eq.s32.totalorder %s33, 0
      %p173 = por %p171, %p172
      %p174 = scmp.ne.s32.totalorder %s166, %s168
      %p175 = scmp.eq.s32.totalorder %s38, 1
      %p176 = por %p174, %p175
      %p177 = scmp.ne.s32.totalorder %s168, %s169
      %p178 = scmp.eq.s32.totalorder %s38, 0
      %p179 = por %p177, %p178
      %p180 = scmp.ne.s32.totalorder %s168, %s169
      %p181 = scmp.eq.s32.totalorder %s39, 1
      %p182 = por %p180, %p181
      %p184 = scmp.ne.s32.totalorder %s169, %s183
      %p185 = scmp.eq.s32.totalorder %s39, 0
      %p186 = por %p184, %p185
      %s188 = sadd.s32 %s187, 1
      %p191 = scmp.eq.s32.totalorder %s33, 1
      %p192 = scmp.ne.s32.totalorder %s187, %s189
      %p193 = scmp.eq.s32.totalorder %s33, 0
      %p194 = por %p192, %p193
      %p195 = scmp.ne.s32.totalorder %s187, %s189
      %p196 = scmp.eq.s32.totalorder %s38, 1
      %p197 = por %p195, %p196
      %p198 = scmp.ne.s32.totalorder %s189, %s190
      %p199 = scmp.eq.s32.totalorder %s38, 0
      %p200 = por %p198, %p199
      %p201 = scmp.ne.s32.totalorder %s189, %s190
      %p202 = scmp.eq.s32.totalorder %s39, 1
      %p203 = por %p201, %p202
      %p205 = scmp.ne.s32.totalorder %s190, %s204
      %p206 = scmp.eq.s32.totalorder %s39, 0
      %p207 = por %p205, %p206
      %s209 = sadd.s32 %s208, 1
      %p212 = scmp.eq.s32.totalorder %s33, 1
      %p213 = scmp.ne.s32.totalorder %s208, %s210
      %p214 = scmp.eq.s32.totalorder %s33, 0
      %p215 = por %p213, %p214
      %p216 = scmp.ne.s32.totalorder %s208, %s210
      %p217 = scmp.eq.s32.totalorder %s38, 1
      %p218 = por %p216, %p217
      %p219 = scmp.ne.s32.totalorder %s210, %s211
      %p220 = scmp.eq.s32.totalorder %s38, 0
      %p221 = por %p219, %p220
      %p222 = scmp.ne.s32.totalorder %s210, %s211
      %p223 = scmp.eq.s32.totalorder %s39, 1
      %p224 = por %p222, %p223
      %p226 = scmp.ne.s32.totalorder %s211, %s225
      %p227 = scmp.eq.s32.totalorder %s39, 0
      %p228 = por %p226, %p227
      %s230 = sadd.s32 %s229, 1
      %p233 = scmp.eq.s32.totalorder %s33, 1
      %p234 = scmp.ne.s32.totalorder %s229, %s231
      %p235 = scmp.eq.s32.totalorder %s33, 0
      %p236 = por %p234, %p235
      %p237 = scmp.ne.s32.totalorder %s229, %s231
      %p238 = scmp.eq.s32.totalorder %s38, 1
      %p239 = por %p237, %p238
      %p240 = scmp.ne.s32.totalorder %s231, %s232
      %p241 = scmp.eq.s32.totalorder %s38, 0
      %p242 = por %p240, %p241
      %p243 = scmp.ne.s32.totalorder %s231, %s232
      %p244 = scmp.eq.s32.totalorder %s39, 1
      %p245 = por %p243, %p244
      %p247 = scmp.ne.s32.totalorder %s232, %s246
      %p248 = scmp.eq.s32.totalorder %s39, 0
      %p249 = por %p247, %p248
      %s251 = sadd.s32 %s250, 1
      %p254 = scmp.eq.s32.totalorder %s33, 1
      %p255 = scmp.ne.s32.totalorder %s250, %s252
      %p256 = scmp.eq.s32.totalorder %s33, 0
      %p257 = por %p255, %p256
      %p258 = scmp.ne.s32.totalorder %s250, %s252
      %p259 = scmp.eq.s32.totalorder %s38, 1
      %p260 = por %p258, %p259
      %p261 = scmp.ne.s32.totalorder %s252, %s253
      %p262 = scmp.eq.s32.totalorder %s38, 0
      %p263 = por %p261, %p262
      %p264 = scmp.ne.s32.totalorder %s252, %s253
      %p265 = scmp.eq.s32.totalorder %s39, 1
      %p266 = por %p264, %p265
      %p268 = scmp.ne.s32.totalorder %s253, %s267
      %p269 = scmp.eq.s32.totalorder %s39, 0
      %p270 = por %p268, %p269
      %s272 = sadd.s32 %s271, 1
      %p275 = scmp.eq.s32.totalorder %s33, 1
      %p276 = scmp.ne.s32.totalorder %s271, %s273
      %p277 = scmp.eq.s32.totalorder %s33, 0
      %p278 = por %p276, %p277
      %p279 = scmp.ne.s32.totalorder %s271, %s273
      %p280 = scmp.eq.s32.totalorder %s38, 1
      %p281 = por %p279, %p280
      %p282 = scmp.ne.s32.totalorder %s273, %s274
      %p283 = scmp.eq.s32.totalorder %s38, 0
      %p284 = por %p282, %p283
      %p285 = scmp.ne.s32.totalorder %s273, %s274
      %p286 = scmp.eq.s32.totalorder %s39, 1
      %p287 = por %p285, %p286
      %p289 = scmp.ne.s32.totalorder %s274, %s288
      %p290 = scmp.eq.s32.totalorder %s39, 0
      %p291 = por %p289, %p290
      %s293 = sadd.s32 %s292, 1
      %p296 = scmp.eq.s32.totalorder %s33, 1
      %p297 = scmp.ne.s32.totalorder %s292, %s294
      %p298 = scmp.eq.s32.totalorder %s33, 0
      %p299 = por %p297, %p298
      %p300 = scmp.ne.s32.totalorder %s292, %s294
      %p301 = scmp.eq.s32.totalorder %s38, 1
      %p302 = por %p300, %p301
      %p303 = scmp.ne.s32.totalorder %s294, %s295
      %p304 = scmp.eq.s32.totalorder %s38, 0
      %p305 = por %p303, %p304
      %p306 = scmp.ne.s32.totalorder %s294, %s295
      %p307 = scmp.eq.s32.totalorder %s39, 1
      %p308 = por %p306, %p307
      %p310 = scmp.ne.s32.totalorder %s295, %s309
      %p311 = scmp.eq.s32.totalorder %s39, 0
      %p312 = por %p310, %p311
      %s314 = sadd.s32 %s313, 1
      %p317 = scmp.eq.s32.totalorder %s33, 1
      %p318 = scmp.ne.s32.totalorder %s313, %s315
      %p319 = scmp.eq.s32.totalorder %s33, 0
      %p320 = por %p318, %p319
      %p321 = scmp.ne.s32.totalorder %s313, %s315
      %p322 = scmp.eq.s32.totalorder %s38, 1
      %p323 = por %p321, %p322
      %p324 = scmp.ne.s32.totalorder %s315, %s316
      %p325 = scmp.eq.s32.totalorder %s38, 0
      %p326 = por %p324, %p325
      %p327 = scmp.ne.s32.totalorder %s315, %s316
      %p328 = scmp.eq.s32.totalorder %s39, 1
      %p329 = por %p327, %p328
      %p331 = scmp.ne.s32.totalorder %s316, %s330
      %p332 = scmp.eq.s32.totalorder %s39, 0
      %p333 = por %p331, %p332
      %p334 = scmp.le.s32.totalorder 1, %s33
      %p335 = scmp.lt.s32.totalorder %s33, 3
      %p336 = pnand %p334, %p335
      %p337 = pneg %p336
      // Predicated region
      $region9: #{tpu_custom_call.1} parent=5 // pred_check
        _
      $region10: #{tpu_custom_call.1} parent=5 // pred_check_branch
        %339 = sbr.rel (%p336) target = $region12
      $region11: #{tpu_custom_call.1} parent=5 // pred_region
        %s340 = ssub.s32 %s33, 1
        // Predicated region
        $region13: #{tpu_custom_call.1} parent=11 // pred_check
          %p341 = pneg %p158
        $region14: #{tpu_custom_call.1} parent=11 // pred_check_branch
          %343 = sbr.rel (%p341) target = $region16
        $region15: #{tpu_custom_call.1} parent=11 // pred_region
          %s345 = ssub.s32 2048, 2048
          %346 = vsyncadd [#allocation12], %s345
          %s347 = sshll.u32 [#allocation13], 4
          %s348 = int_to_ptr.vmem [resolvable:$true] %s347
          %353 = dma.hbm_to_vmem [thread:$0]  %s4, 2048, %s348, [#allocation12], 128, 128, 8
        $region16: #{tpu_custom_call.1} parent=11 // pred_fallthru
          _
        // Predicated region
        $region17: #{tpu_custom_call.1} parent=11 // pred_check
          %p354 = pneg %p179
        $region18: #{tpu_custom_call.1} parent=11 // pred_check_branch
          %356 = sbr.rel (%p354) target = $region20
        $region19: #{tpu_custom_call.1} parent=11 // pred_region
          %s358 = ssub.s32 2048, 2048
          %359 = vsyncadd [#allocation15], %s358
          %s360 = sshll.u32 [#allocation14], 4
          %s361 = int_to_ptr.vmem [resolvable:$true] %s360
          %366 = dma.hbm_to_vmem [thread:$0]  %s5, 2048, %s361, [#allocation15], 128, 128, 8
        $region20: #{tpu_custom_call.1} parent=11 // pred_fallthru
          _
        // Predicated region
        $region21: #{tpu_custom_call.1} parent=11 // pred_check
          %p367 = pneg %p200
        $region22: #{tpu_custom_call.1} parent=11 // pred_check_branch
          %369 = sbr.rel (%p367) target = $region24
        $region23: #{tpu_custom_call.1} parent=11 // pred_region
          %s371 = ssub.s32 2048, 2048
          %372 = vsyncadd [#allocation15], %s371
          %s373 = sshll.u32 [#allocation16], 4
          %s374 = int_to_ptr.vmem [resolvable:$true] %s373
          %379 = dma.hbm_to_vmem [thread:$0]  %s6, 2048, %s374, [#allocation15], 128, 128, 8
        $region24: #{tpu_custom_call.1} parent=11 // pred_fallthru
          _
        // Predicated region
        $region25: #{tpu_custom_call.1} parent=11 // pred_check
          %p380 = pneg %p221
        $region26: #{tpu_custom_call.1} parent=11 // pred_check_branch
          %382 = sbr.rel (%p380) target = $region28
        $region27: #{tpu_custom_call.1} parent=11 // pred_region
          %s384 = ssub.s32 2048, 2048
          %385 = vsyncadd [#allocation18], %s384
          %s386 = sshll.u32 [#allocation17], 4
          %s387 = int_to_ptr.vmem [resolvable:$true] %s386
          %392 = dma.hbm_to_vmem [thread:$0]  %s7, 2048, %s387, [#allocation18], 128, 128, 8
        $region28: #{tpu_custom_call.1} parent=11 // pred_fallthru
          _
        // Predicated region
        $region29: #{tpu_custom_call.1} parent=11 // pred_check
          %p393 = pneg %p242
        $region30: #{tpu_custom_call.1} parent=11 // pred_check_branch
          %395 = sbr.rel (%p393) target = $region32
        $region31: #{tpu_custom_call.1} parent=11 // pred_region
          %s397 = ssub.s32 2048, 2048
          %398 = vsyncadd [#allocation18], %s397
          %s399 = sshll.u32 [#allocation19], 4
          %s400 = int_to_ptr.vmem [resolvable:$true] %s399
          %405 = dma.hbm_to_vmem [thread:$0]  %s8, 2048, %s400, [#allocation18], 128, 128, 8
        $region32: #{tpu_custom_call.1} parent=11 // pred_fallthru
          _
        // Predicated region
        $region33: #{tpu_custom_call.1} parent=11 // pred_check
          %p406 = pneg %p263
        $region34: #{tpu_custom_call.1} parent=11 // pred_check_branch
          %408 = sbr.rel (%p406) target = $region36
        $region35: #{tpu_custom_call.1} parent=11 // pred_region
          %s410 = ssub.s32 2048, 2048
          %411 = vsyncadd [#allocation21], %s410
          %s412 = sshll.u32 [#allocation20], 4
          %s413 = int_to_ptr.vmem [resolvable:$true] %s412
          %418 = dma.hbm_to_vmem [thread:$0]  %s9, 2048, %s413, [#allocation21], 128, 128, 8
        $region36: #{tpu_custom_call.1} parent=11 // pred_fallthru
          _
        // Predicated region
        $region37: #{tpu_custom_call.1} parent=11 // pred_check
          %p419 = pneg %p284
        $region38: #{tpu_custom_call.1} parent=11 // pred_check_branch
          %421 = sbr.rel (%p419) target = $region40
        $region39: #{tpu_custom_call.1} parent=11 // pred_region
          _
        $region40: #{tpu_custom_call.1} parent=11 // pred_fallthru
          _
      $region12: #{tpu_custom_call.1} parent=5 // pred_fallthru
        _
      %p422 = scmp.lt.s32.totalorder %s33, 2
      // Predicated region
      $region41: #{tpu_custom_call.1} parent=5 // pred_check
        %p423 = pneg %p422
      $region42: #{tpu_custom_call.1} parent=5 // pred_check_branch
        %425 = sbr.rel (%p423) target = $region44
      $region43: #{tpu_custom_call.1} parent=5 // pred_region
        // Predicated region
        $region45: #{tpu_custom_call.1} parent=43 // pred_check
          %p426 = pneg %p53
        $region46: #{tpu_custom_call.1} parent=43 // pred_check_branch
          %428 = sbr.rel (%p426) target = $region48
        $region47: #{tpu_custom_call.1} parent=43 // pred_region
          %s429 = sand.u32 %s43, 1
          %s430 = scalar_lea.sflag [#allocation5], %s429
          %s431 = sand.u32 %s43, 1
          %s432 = smul.addr %s431, 32
          %s433 = scalar_lea.vmem [#allocation4], %s432
          %s435 = ssub.s32 512, 512
          %436 = vsyncadd %s430, %s435
          %s437 = smul.addr %s33, 4
          %s438 = smul.addr %s437, 128
          %s439 = scalar_lea.hbm %s0, %s438
          %s441 = sshll.u32 %s433, 4
          %s442 = int_to_ptr.vmem [resolvable:$true] %s441
          %444 = dma.hbm_to_vmem [thread:$0]  %s439, 512, %s442, %s430
        $region48: #{tpu_custom_call.1} parent=43 // pred_fallthru
          _
        // Predicated region
        $region49: #{tpu_custom_call.1} parent=43 // pred_check
          %p445 = pneg %p79
        $region50: #{tpu_custom_call.1} parent=43 // pred_check_branch
          %447 = sbr.rel (%p445) target = $region52
        $region51: #{tpu_custom_call.1} parent=43 // pred_region
          %s448 = sand.u32 %s33, 1
          %s449 = scalar_lea.sflag [#allocation9], %s448
          %s450 = sand.u32 %s69, 1
          %s451 = smul.addr %s450, 392
          %s452 = scalar_lea.vmem [#allocation8], %s451
          %s453 = smul.u32 49, %s33
          %s455 = ssub.s32 6272, 6272
          %456 = vsyncadd %s449, %s455
          %s457 = smul.addr %s453, 128
          %s458 = scalar_lea.hbm %s1, %s457
          %s459 = sshll.u32 %s452, 4
          %s460 = int_to_ptr.vmem [resolvable:$true] %s459
          %465 = dma.hbm_to_vmem [thread:$0]  %s458, 6272, %s460, %s449, 128, 128, 8
        $region52: #{tpu_custom_call.1} parent=43 // pred_fallthru
          _
        // Predicated region
        $region53: #{tpu_custom_call.1} parent=43 // pred_check
          %p466 = pneg %p105
        $region54: #{tpu_custom_call.1} parent=43 // pred_check_branch
          %468 = sbr.rel (%p466) target = $region56
        $region55: #{tpu_custom_call.1} parent=43 // pred_region
          %s469 = sand.u32 %s33, 1
          %s470 = scalar_lea.sflag [#allocation9], %s469
          %s471 = sand.u32 %s95, 1
          %s472 = smul.addr %s471, 392
          %s473 = scalar_lea.vmem [#allocation10], %s472
          %s474 = smul.u32 49, %s33
          %s476 = ssub.s32 6272, 6272
          %477 = vsyncadd %s470, %s476
          %s478 = smul.addr %s474, 128
          %s479 = scalar_lea.hbm %s2, %s478
          %s480 = sshll.u32 %s473, 4
          %s481 = int_to_ptr.vmem [resolvable:$true] %s480
          %486 = dma.hbm_to_vmem [thread:$0]  %s479, 6272, %s481, %s470, 128, 128, 8
        $region56: #{tpu_custom_call.1} parent=43 // pred_fallthru
          _
        // Predicated region
        $region57: #{tpu_custom_call.1} parent=43 // pred_check
          %p487 = pneg %p131
        $region58: #{tpu_custom_call.1} parent=43 // pred_check_branch
          %489 = sbr.rel (%p487) target = $region60
        $region59: #{tpu_custom_call.1} parent=43 // pred_region
          %s490 = sand.u32 %s33, 1
          %s491 = scalar_lea.sflag [#allocation12], %s490
          %s492 = sand.u32 %s121, 1
          %s493 = smul.addr %s492, 392
          %s494 = scalar_lea.vmem [#allocation11], %s493
          %s495 = smul.u32 49, %s33
          %s497 = ssub.s32 6272, 6272
          %498 = vsyncadd %s491, %s497
          %s499 = smul.addr %s495, 128
          %s500 = scalar_lea.hbm %s3, %s499
          %s501 = sshll.u32 %s494, 4
          %s502 = int_to_ptr.vmem [resolvable:$true] %s501
          %507 = dma.hbm_to_vmem [thread:$0]  %s500, 6272, %s502, %s491, 128, 128, 8
        $region60: #{tpu_custom_call.1} parent=43 // pred_fallthru
          _
      $region44: #{tpu_custom_call.1} parent=5 // pred_fallthru
        _
      %p508 = scmp.le.s32.totalorder 1, %s33
      %p509 = scmp.lt.s32.totalorder %s33, 3
      %p510 = pnand %p508, %p509
      %p511 = pneg %p510
      // Predicated region
      $region61: #{tpu_custom_call.1} parent=5 // pred_check
        _
      $region62: #{tpu_custom_call.1} parent=5 // pred_check_branch
        %513 = sbr.rel (%p510) target = $region64
      $region63: #{tpu_custom_call.1} parent=5 // pred_region
        %s514 = ssub.s32 %s33, 1
        %s515 = sand.u32 %s46, 1
        %s516 = scalar_lea.sflag [#allocation5], %s515
        %s517 = sand.u32 %s46, 1
        %s518 = smul.addr %s517, 32
        %s519 = scalar_lea.vmem [#allocation4], %s518
        // Predicated region
        $region65: #{tpu_custom_call.1} parent=63 // pred_check
          %p520 = pneg %p59
        $region66: #{tpu_custom_call.1} parent=63 // pred_check_branch
          %522 = sbr.rel (%p520) target = $region68
        $region67: #{tpu_custom_call.1} parent=63 // pred_region
          %523 = dma.done %s516, 512
        $region68: #{tpu_custom_call.1} parent=63 // pred_fallthru
          _
        %s524 = sand.u32 %s38, 1
        %s525 = scalar_lea.sflag [#allocation9], %s524
        %s526 = sand.u32 %s72, 1
        %s527 = smul.addr %s526, 392
        %s528 = scalar_lea.vmem [#allocation8], %s527
        // Predicated region
        $region69: #{tpu_custom_call.1} parent=63 // pred_check
          %p529 = pneg %p85
        $region70: #{tpu_custom_call.1} parent=63 // pred_check_branch
          %531 = sbr.rel (%p529) target = $region72
        $region71: #{tpu_custom_call.1} parent=63 // pred_region
          %532 = dma.done %s525, 6272
        $region72: #{tpu_custom_call.1} parent=63 // pred_fallthru
          _
        %s533 = sand.u32 %s38, 1
        %s534 = scalar_lea.sflag [#allocation9], %s533
        %s535 = sand.u32 %s98, 1
        %s536 = smul.addr %s535, 392
        %s537 = scalar_lea.vmem [#allocation10], %s536
        // Predicated region
        $region73: #{tpu_custom_call.1} parent=63 // pred_check
          %p538 = pneg %p111
        $region74: #{tpu_custom_call.1} parent=63 // pred_check_branch
          %540 = sbr.rel (%p538) target = $region76
        $region75: #{tpu_custom_call.1} parent=63 // pred_region
          %541 = dma.done %s534, 6272
        $region76: #{tpu_custom_call.1} parent=63 // pred_fallthru
          _
        %s542 = sand.u32 %s38, 1
        %s543 = scalar_lea.sflag [#allocation12], %s542
        %s544 = sand.u32 %s124, 1
        %s545 = smul.addr %s544, 392
        %s546 = scalar_lea.vmem [#allocation11], %s545
        // Predicated region
        $region77: #{tpu_custom_call.1} parent=63 // pred_check
          %p547 = pneg %p137
        $region78: #{tpu_custom_call.1} parent=63 // pred_check_branch
          %549 = sbr.rel (%p547) target = $region80
        $region79: #{tpu_custom_call.1} parent=63 // pred_region
          %550 = dma.done %s543, 6272
        $region80: #{tpu_custom_call.1} parent=63 // pred_fallthru
          _
        // Predicated region
        $region81: #{tpu_custom_call.1} parent=63 // pred_check
          %p551 = pneg %p158
        $region82: #{tpu_custom_call.1} parent=63 // pred_check_branch
          %553 = sbr.rel (%p551) target = $region84
        $region83: #{tpu_custom_call.1} parent=63 // pred_region
          %554 = dma.done [#allocation12], 2048
        $region84: #{tpu_custom_call.1} parent=63 // pred_fallthru
          _
        // Predicated region
        $region85: #{tpu_custom_call.1} parent=63 // pred_check
          %p555 = pneg %p179
        $region86: #{tpu_custom_call.1} parent=63 // pred_check_branch
          %557 = sbr.rel (%p555) target = $region88
        $region87: #{tpu_custom_call.1} parent=63 // pred_region
          %558 = dma.done [#allocation15], 2048
        $region88: #{tpu_custom_call.1} parent=63 // pred_fallthru
          _
        // Predicated region
        $region89: #{tpu_custom_call.1} parent=63 // pred_check
          %p559 = pneg %p200
        $region90: #{tpu_custom_call.1} parent=63 // pred_check_branch
          %561 = sbr.rel (%p559) target = $region92
        $region91: #{tpu_custom_call.1} parent=63 // pred_region
          %562 = dma.done [#allocation15], 2048
        $region92: #{tpu_custom_call.1} parent=63 // pred_fallthru
          _
        // Predicated region
        $region93: #{tpu_custom_call.1} parent=63 // pred_check
          %p563 = pneg %p221
        $region94: #{tpu_custom_call.1} parent=63 // pred_check_branch
          %565 = sbr.rel (%p563) target = $region96
        $region95: #{tpu_custom_call.1} parent=63 // pred_region
          %566 = dma.done [#allocation18], 2048
        $region96: #{tpu_custom_call.1} parent=63 // pred_fallthru
          _
        // Predicated region
        $region97: #{tpu_custom_call.1} parent=63 // pred_check
          %p567 = pneg %p242
        $region98: #{tpu_custom_call.1} parent=63 // pred_check_branch
          %569 = sbr.rel (%p567) target = $region100
        $region99: #{tpu_custom_call.1} parent=63 // pred_region
          %570 = dma.done [#allocation18], 2048
        $region100: #{tpu_custom_call.1} parent=63 // pred_fallthru
          _
        // Predicated region
        $region101: #{tpu_custom_call.1} parent=63 // pred_check
          %p571 = pneg %p263
        $region102: #{tpu_custom_call.1} parent=63 // pred_check_branch
          %573 = sbr.rel (%p571) target = $region104
        $region103: #{tpu_custom_call.1} parent=63 // pred_region
          %574 = dma.done [#allocation21], 2048
        $region104: #{tpu_custom_call.1} parent=63 // pred_fallthru
          _
        %s575 = sand.u32 %s46, 1
        %s576 = scalar_lea.sflag [#allocation5], %s575
        %s577 = sand.u32 %s46, 1
        %s578 = smul.addr %s577, 32
        %s579 = scalar_lea.vmem [#allocation4], %s578
        %p580 = pneg %p59
        %p581 = pneg %p56
        %s582 = sand.u32 %s38, 1
        %s583 = scalar_lea.sflag [#allocation9], %s582
        %s584 = sand.u32 %s72, 1
        %s585 = smul.addr %s584, 392
        %s586 = scalar_lea.vmem [#allocation8], %s585
        %p587 = pneg %p85
        %p588 = pneg %p82
        %s589 = sand.u32 %s38, 1
        %s590 = scalar_lea.sflag [#allocation9], %s589
        %s591 = sand.u32 %s98, 1
        %s592 = smul.addr %s591, 392
        %s593 = scalar_lea.vmem [#allocation10], %s592
        %p594 = pneg %p111
        %p595 = pneg %p108
        %s596 = sand.u32 %s38, 1
        %s597 = scalar_lea.sflag [#allocation12], %s596
        %s598 = sand.u32 %s124, 1
        %s599 = smul.addr %s598, 392
        %s600 = scalar_lea.vmem [#allocation11], %s599
        %p601 = pneg %p137
        %p602 = pneg %p134
        %p603 = pneg %p158
        %p604 = pneg %p155
        %p605 = pneg %p179
        %p606 = pneg %p176
        %p607 = pneg %p200
        %p608 = pneg %p197
        %p609 = pneg %p221
        %p610 = pneg %p218
        %p611 = pneg %p242
        %p612 = pneg %p239
        %p613 = pneg %p263
        %p614 = pneg %p260
        %p615 = pneg %p284
        %p616 = pneg %p281
        %p617 = pneg %p305
        %p618 = pneg %p302
        %p619 = pneg %p326
        %p620 = pneg %p323
        %s621 = smul.u32 49, %s38
        %s622 = smul.u32 49, %s38
        %s623 = smul.u32 49, %s38
        %p624 = scmp.eq.s32.totalorder %s38, 0
        // Predicated region
        $region105: #{tpu_custom_call.1} parent=63 // pred_check
          %p625 = pneg %p624
        $region106: #{tpu_custom_call.1} parent=63 // pred_check_branch
          %627 = sbr.rel (%p625) target = $region108
        $region107: #{tpu_custom_call.1} parent=63 // pred_region
          %628 = vst [vmem:[#allocation2] sm:$0xff] 0.0
          %s629 = scalar_lea.smem [#allocation3], 0
          %630 = sst [smem:[%s629]] 0.0
        $region108: #{tpu_custom_call.1} parent=63 // pred_fallthru
          _
        %v631 = vld [vmem:[%s528] sm:$0xff]
        %v632 = vld [vmem:[%s528 + $0x8] sm:$0xff]
        %v633 = vld [vmem:[%s528 + $0x10] sm:$0xff]
        %v634 = vld [vmem:[%s528 + $0x18] sm:$0xff]
        %v635 = vld [vmem:[%s528 + $0x20] sm:$0xff]
        %v636 = vld [vmem:[%s528 + $0x28] sm:$0xff]
        %v637 = vld [vmem:[%s528 + $0x30] sm:$0xff]
        %v638 = vld [vmem:[%s528 + $0x38] sm:$0xff]
        %v639 = vld [vmem:[%s528 + $0x40] sm:$0xff]
        %v640 = vld [vmem:[%s528 + $0x48] sm:$0xff]
        %v641 = vld [vmem:[%s528 + $0x50] sm:$0xff]
        %v642 = vld [vmem:[%s528 + $0x58] sm:$0xff]
        %v643 = vld [vmem:[%s528 + $0x60] sm:$0xff]
        %v644 = vld [vmem:[%s528 + $0x68] sm:$0xff]
        %v645 = vld [vmem:[%s528 + $0x70] sm:$0xff]
        %v646 = vld [vmem:[%s528 + $0x78] sm:$0xff]
        %v647 = vld [vmem:[%s528 + $0x80] sm:$0xff]
        %v648 = vld [vmem:[%s528 + $0x88] sm:$0xff]
        %v649 = vld [vmem:[%s528 + $0x90] sm:$0xff]
        %v650 = vld [vmem:[%s528 + $0x98] sm:$0xff]
        %v651 = vld [vmem:[%s528 + $0xa0] sm:$0xff]
        %v652 = vld [vmem:[%s528 + $0xa8] sm:$0xff]
        %v653 = vld [vmem:[%s528 + $0xb0] sm:$0xff]
        %v654 = vld [vmem:[%s528 + $0xb8] sm:$0xff]
        %v655 = vld [vmem:[%s528 + $0xc0] sm:$0xff]
        %v656 = vld [vmem:[%s528 + $0xc8] sm:$0xff]
        %v657 = vld [vmem:[%s528 + $0xd0] sm:$0xff]
        %v658 = vld [vmem:[%s528 + $0xd8] sm:$0xff]
        %v659 = vld [vmem:[%s528 + $0xe0] sm:$0xff]
        %v660 = vld [vmem:[%s528 + $0xe8] sm:$0xff]
        %v661 = vld [vmem:[%s528 + $0xf0] sm:$0xff]
        %v662 = vld [vmem:[%s528 + $0xf8] sm:$0xff]
        %v663 = vld [vmem:[%s528 + $0x100] sm:$0xff]
        %v664 = vld [vmem:[%s528 + $0x108] sm:$0xff]
        %v665 = vld [vmem:[%s528 + $0x110] sm:$0xff]
        %v666 = vld [vmem:[%s528 + $0x118] sm:$0xff]
        %v667 = vld [vmem:[%s528 + $0x120] sm:$0xff]
        %v668 = vld [vmem:[%s528 + $0x128] sm:$0xff]
        %v669 = vld [vmem:[%s528 + $0x130] sm:$0xff]
        %v670 = vld [vmem:[%s528 + $0x138] sm:$0xff]
        %v671 = vld [vmem:[%s528 + $0x140] sm:$0xff]
        %v672 = vld [vmem:[%s528 + $0x148] sm:$0xff]
        %v673 = vld [vmem:[%s528 + $0x150] sm:$0xff]
        %v674 = vld [vmem:[%s528 + $0x158] sm:$0xff]
        %v675 = vld [vmem:[%s528 + $0x160] sm:$0xff]
        %v676 = vld [vmem:[%s528 + $0x168] sm:$0xff]
        %v677 = vld [vmem:[%s528 + $0x170] sm:$0xff]
        %v678 = vld [vmem:[%s528 + $0x178] sm:$0xff]
        %v679 = vld [vmem:[%s528 + $0x180] sm:$0xff]
        %v680 = vld [vmem:[%s537] sm:$0xff]
        %v681 = vld [vmem:[%s537 + $0x8] sm:$0xff]
        %v682 = vld [vmem:[%s537 + $0x10] sm:$0xff]
        %v683 = vld [vmem:[%s537 + $0x18] sm:$0xff]
        %v684 = vld [vmem:[%s537 + $0x20] sm:$0xff]
        %v685 = vld [vmem:[%s537 + $0x28] sm:$0xff]
        %v686 = vld [vmem:[%s537 + $0x30] sm:$0xff]
        %v687 = vld [vmem:[%s537 + $0x38] sm:$0xff]
        %v688 = vld [vmem:[%s537 + $0x40] sm:$0xff]
        %v689 = vld [vmem:[%s537 + $0x48] sm:$0xff]
        %v690 = vld [vmem:[%s537 + $0x50] sm:$0xff]
        %v691 = vld [vmem:[%s537 + $0x58] sm:$0xff]
        %v692 = vld [vmem:[%s537 + $0x60] sm:$0xff]
        %v693 = vld [vmem:[%s537 + $0x68] sm:$0xff]
        %v694 = vld [vmem:[%s537 + $0x70] sm:$0xff]
        %v695 = vld [vmem:[%s537 + $0x78] sm:$0xff]
        %v696 = vld [vmem:[%s537 + $0x80] sm:$0xff]
        %v697 = vld [vmem:[%s537 + $0x88] sm:$0xff]
        %v698 = vld [vmem:[%s537 + $0x90] sm:$0xff]
        %v699 = vld [vmem:[%s537 + $0x98] sm:$0xff]
        %v700 = vld [vmem:[%s537 + $0xa0] sm:$0xff]
        %v701 = vld [vmem:[%s537 + $0xa8] sm:$0xff]
        %v702 = vld [vmem:[%s537 + $0xb0] sm:$0xff]
        %v703 = vld [vmem:[%s537 + $0xb8] sm:$0xff]
        %v704 = vld [vmem:[%s537 + $0xc0] sm:$0xff]
        %v705 = vld [vmem:[%s537 + $0xc8] sm:$0xff]
        %v706 = vld [vmem:[%s537 + $0xd0] sm:$0xff]
        %v707 = vld [vmem:[%s537 + $0xd8] sm:$0xff]
        %v708 = vld [vmem:[%s537 + $0xe0] sm:$0xff]
        %v709 = vld [vmem:[%s537 + $0xe8] sm:$0xff]
        %v710 = vld [vmem:[%s537 + $0xf0] sm:$0xff]
        %v711 = vld [vmem:[%s537 + $0xf8] sm:$0xff]
        %v712 = vld [vmem:[%s537 + $0x100] sm:$0xff]
        %v713 = vld [vmem:[%s537 + $0x108] sm:$0xff]
        %v714 = vld [vmem:[%s537 + $0x110] sm:$0xff]
        %v715 = vld [vmem:[%s537 + $0x118] sm:$0xff]
        %v716 = vld [vmem:[%s537 + $0x120] sm:$0xff]
        %v717 = vld [vmem:[%s537 + $0x128] sm:$0xff]
        %v718 = vld [vmem:[%s537 + $0x130] sm:$0xff]
        %v719 = vld [vmem:[%s537 + $0x138] sm:$0xff]
        %v720 = vld [vmem:[%s537 + $0x140] sm:$0xff]
        %v721 = vld [vmem:[%s537 + $0x148] sm:$0xff]
        %v722 = vld [vmem:[%s537 + $0x150] sm:$0xff]
        %v723 = vld [vmem:[%s537 + $0x158] sm:$0xff]
        %v724 = vld [vmem:[%s537 + $0x160] sm:$0xff]
        %v725 = vld [vmem:[%s537 + $0x168] sm:$0xff]
        %v726 = vld [vmem:[%s537 + $0x170] sm:$0xff]
        %v727 = vld [vmem:[%s537 + $0x178] sm:$0xff]
        %v728 = vld [vmem:[%s537 + $0x180] sm:$0xff]
        %v729 = vmax.f32 %v680, 0.0
        %v730 = vmax.f32 %v681, 0.0
        %v731 = vmax.f32 %v682, 0.0
        %v732 = vmax.f32 %v683, 0.0
        %v733 = vmax.f32 %v684, 0.0
        %v734 = vmax.f32 %v685, 0.0
        %v735 = vmax.f32 %v686, 0.0
        %v736 = vmax.f32 %v687, 0.0
        %v737 = vmax.f32 %v688, 0.0
        %v738 = vmax.f32 %v689, 0.0
        %v739 = vmax.f32 %v690, 0.0
        %v740 = vmax.f32 %v691, 0.0
        %v741 = vmax.f32 %v692, 0.0
        %v742 = vmax.f32 %v693, 0.0
        %v743 = vmax.f32 %v694, 0.0
        %v744 = vmax.f32 %v695, 0.0
        %v745 = vmax.f32 %v696, 0.0
        %v746 = vmax.f32 %v697, 0.0
        %v747 = vmax.f32 %v698, 0.0
        %v748 = vmax.f32 %v699, 0.0
        %v749 = vmax.f32 %v700, 0.0
        %v750 = vmax.f32 %v701, 0.0
        %v751 = vmax.f32 %v702, 0.0
        %v752 = vmax.f32 %v703, 0.0
        %v753 = vmax.f32 %v704, 0.0
        %v754 = vmax.f32 %v705, 0.0
        %v755 = vmax.f32 %v706, 0.0
        %v756 = vmax.f32 %v707, 0.0
        %v757 = vmax.f32 %v708, 0.0
        %v758 = vmax.f32 %v709, 0.0
        %v759 = vmax.f32 %v710, 0.0
        %v760 = vmax.f32 %v711, 0.0
        %v761 = vmax.f32 %v712, 0.0
        %v762 = vmax.f32 %v713, 0.0
        %v763 = vmax.f32 %v714, 0.0
        %v764 = vmax.f32 %v715, 0.0
        %v765 = vmax.f32 %v716, 0.0
        %v766 = vmax.f32 %v717, 0.0
        %v767 = vmax.f32 %v718, 0.0
        %v768 = vmax.f32 %v719, 0.0
        %v769 = vmax.f32 %v720, 0.0
        %v770 = vmax.f32 %v721, 0.0
        %v771 = vmax.f32 %v722, 0.0
        %v772 = vmax.f32 %v723, 0.0
        %v773 = vmax.f32 %v724, 0.0
        %v774 = vmax.f32 %v725, 0.0
        %v775 = vmax.f32 %v726, 0.0
        %v776 = vmax.f32 %v727, 0.0
        %v777 = vmax.f32 %v728, 0.0
        %v778 = vand.u32 2147483647, %v680
        %v779 = vand.u32 2147483647, %v681
        %v780 = vand.u32 2147483647, %v682
        %v781 = vand.u32 2147483647, %v683
        %v782 = vand.u32 2147483647, %v684
        %v783 = vand.u32 2147483647, %v685
        %v784 = vand.u32 2147483647, %v686
        %v785 = vand.u32 2147483647, %v687
        %v786 = vand.u32 2147483647, %v688
        %v787 = vand.u32 2147483647, %v689
        %v788 = vand.u32 2147483647, %v690
        %v789 = vand.u32 2147483647, %v691
        %v790 = vand.u32 2147483647, %v692
        %v791 = vand.u32 2147483647, %v693
        %v792 = vand.u32 2147483647, %v694
        %v793 = vand.u32 2147483647, %v695
        %v794 = vand.u32 2147483647, %v696
        %v795 = vand.u32 2147483647, %v697
        %v796 = vand.u32 2147483647, %v698
        %v797 = vand.u32 2147483647, %v699
        %v798 = vand.u32 2147483647, %v700
        %v799 = vand.u32 2147483647, %v701
        %v800 = vand.u32 2147483647, %v702
        %v801 = vand.u32 2147483647, %v703
        %v802 = vand.u32 2147483647, %v704
        %v803 = vand.u32 2147483647, %v705
        %v804 = vand.u32 2147483647, %v706
        %v805 = vand.u32 2147483647, %v707
        %v806 = vand.u32 2147483647, %v708
        %v807 = vand.u32 2147483647, %v709
        %v808 = vand.u32 2147483647, %v710
        %v809 = vand.u32 2147483647, %v711
        %v810 = vand.u32 2147483647, %v712
        %v811 = vand.u32 2147483647, %v713
        %v812 = vand.u32 2147483647, %v714
        %v813 = vand.u32 2147483647, %v715
        %v814 = vand.u32 2147483647, %v716
        %v815 = vand.u32 2147483647, %v717
        %v816 = vand.u32 2147483647, %v718
        %v817 = vand.u32 2147483647, %v719
        %v818 = vand.u32 2147483647, %v720
        %v819 = vand.u32 2147483647, %v721
        %v820 = vand.u32 2147483647, %v722
        %v821 = vand.u32 2147483647, %v723
        %v822 = vand.u32 2147483647, %v724
        %v823 = vand.u32 2147483647, %v725
        %v824 = vand.u32 2147483647, %v726
        %v825 = vand.u32 2147483647, %v727
        %v826 = vand.u32 2147483647, %v728
        %v827 = vsub.f32 0.0, %v778
        %v828 = vsub.f32 0.0, %v779
        %v829 = vsub.f32 0.0, %v780
        %v830 = vsub.f32 0.0, %v781
        %v831 = vsub.f32 0.0, %v782
        %v832 = vsub.f32 0.0, %v783
        %v833 = vsub.f32 0.0, %v784
        %v834 = vsub.f32 0.0, %v785
        %v835 = vsub.f32 0.0, %v786
        %v836 = vsub.f32 0.0, %v787
        %v837 = vsub.f32 0.0, %v788
        %v838 = vsub.f32 0.0, %v789
        %v839 = vsub.f32 0.0, %v790
        %v840 = vsub.f32 0.0, %v791
        %v841 = vsub.f32 0.0, %v792
        %v842 = vsub.f32 0.0, %v793
        %v843 = vsub.f32 0.0, %v794
        %v844 = vsub.f32 0.0, %v795
        %v845 = vsub.f32 0.0, %v796
        %v846 = vsub.f32 0.0, %v797
        %v847 = vsub.f32 0.0, %v798
        %v848 = vsub.f32 0.0, %v799
        %v849 = vsub.f32 0.0, %v800
        %v850 = vsub.f32 0.0, %v801
        %v851 = vsub.f32 0.0, %v802
        %v852 = vsub.f32 0.0, %v803
        %v853 = vsub.f32 0.0, %v804
        %v854 = vsub.f32 0.0, %v805
        %v855 = vsub.f32 0.0, %v806
        %v856 = vsub.f32 0.0, %v807
        %v857 = vsub.f32 0.0, %v808
        %v858 = vsub.f32 0.0, %v809
        %v859 = vsub.f32 0.0, %v810
        %v860 = vsub.f32 0.0, %v811
        %v861 = vsub.f32 0.0, %v812
        %v862 = vsub.f32 0.0, %v813
        %v863 = vsub.f32 0.0, %v814
        %v864 = vsub.f32 0.0, %v815
        %v865 = vsub.f32 0.0, %v816
        %v866 = vsub.f32 0.0, %v817
        %v867 = vsub.f32 0.0, %v818
        %v868 = vsub.f32 0.0, %v819
        %v869 = vsub.f32 0.0, %v820
        %v870 = vsub.f32 0.0, %v821
        %v871 = vsub.f32 0.0, %v822
        %v872 = vsub.f32 0.0, %v823
        %v873 = vsub.f32 0.0, %v824
        %v874 = vsub.f32 0.0, %v825
        %v875 = vsub.f32 0.0, %v826
        %v876 = vmul.f32 %v827, 1.442695
        %v877 = vpow.pop %v876
        %v878 = vmul.f32 %v828, 1.442695
        %v879 = vpow.pop %v878
        %v880 = vmul.f32 %v829, 1.442695
        %v881 = vpow.pop %v880
        %v882 = vmul.f32 %v830, 1.442695
        %v883 = vpow.pop %v882
        %v884 = vmul.f32 %v831, 1.442695
        %v885 = vpow.pop %v884
        %v886 = vmul.f32 %v832, 1.442695
        %v887 = vpow.pop %v886
        %v888 = vmul.f32 %v833, 1.442695
        %v889 = vpow.pop %v888
        %v890 = vmul.f32 %v834, 1.442695
        %v891 = vpow.pop %v890
        %v892 = vmul.f32 %v835, 1.442695
        %v893 = vpow.pop %v892
        %v894 = vmul.f32 %v836, 1.442695
        %v895 = vpow.pop %v894
        %v896 = vmul.f32 %v837, 1.442695
        %v897 = vpow.pop %v896
        %v898 = vmul.f32 %v838, 1.442695
        %v899 = vpow.pop %v898
        %v900 = vmul.f32 %v839, 1.442695
        %v901 = vpow.pop %v900
        %v902 = vmul.f32 %v840, 1.442695
        %v903 = vpow.pop %v902
        %v904 = vmul.f32 %v841, 1.442695
        %v905 = vpow.pop %v904
        %v906 = vmul.f32 %v842, 1.442695
        %v907 = vpow.pop %v906
        %v908 = vmul.f32 %v843, 1.442695
        %v909 = vpow.pop %v908
        %v910 = vmul.f32 %v844, 1.442695
        %v911 = vpow.pop %v910
        %v912 = vmul.f32 %v845, 1.442695
        %v913 = vpow.pop %v912
        %v914 = vmul.f32 %v846, 1.442695
        %v915 = vpow.pop %v914
        %v916 = vmul.f32 %v847, 1.442695
        %v917 = vpow.pop %v916
        %v918 = vmul.f32 %v848, 1.442695
        %v919 = vpow.pop %v918
        %v920 = vmul.f32 %v849, 1.442695
        %v921 = vpow.pop %v920
        %v922 = vmul.f32 %v850, 1.442695
        %v923 = vpow.pop %v922
        %v924 = vmul.f32 %v851, 1.442695
        %v925 = vpow.pop %v924
        %v926 = vmul.f32 %v852, 1.442695
        %v927 = vpow.pop %v926
        %v928 = vmul.f32 %v853, 1.442695
        %v929 = vpow.pop %v928
        %v930 = vmul.f32 %v854, 1.442695
        %v931 = vpow.pop %v930
        %v932 = vmul.f32 %v855, 1.442695
        %v933 = vpow.pop %v932
        %v934 = vmul.f32 %v856, 1.442695
        %v935 = vpow.pop %v934
        %v936 = vmul.f32 %v857, 1.442695
        %v937 = vpow.pop %v936
        %v938 = vmul.f32 %v858, 1.442695
        %v939 = vpow.pop %v938
        %v940 = vmul.f32 %v859, 1.442695
        %v941 = vpow.pop %v940
        %v942 = vmul.f32 %v860, 1.442695
        %v943 = vpow.pop %v942
        %v944 = vmul.f32 %v861, 1.442695
        %v945 = vpow.pop %v944
        %v946 = vmul.f32 %v862, 1.442695
        %v947 = vpow.pop %v946
        %v948 = vmul.f32 %v863, 1.442695
        %v949 = vpow.pop %v948
        %v950 = vmul.f32 %v864, 1.442695
        %v951 = vpow.pop %v950
        %v952 = vmul.f32 %v865, 1.442695
        %v953 = vpow.pop %v952
        %v954 = vmul.f32 %v866, 1.442695
        %v955 = vpow.pop %v954
        %v956 = vmul.f32 %v867, 1.442695
        %v957 = vpow.pop %v956
        %v958 = vmul.f32 %v868, 1.442695
        %v959 = vpow.pop %v958
        %v960 = vmul.f32 %v869, 1.442695
        %v961 = vpow.pop %v960
        %v962 = vmul.f32 %v870, 1.442695
        %v963 = vpow.pop %v962
        %v964 = vmul.f32 %v871, 1.442695
        %v965 = vpow.pop %v964
        %v966 = vmul.f32 %v872, 1.442695
        %v967 = vpow.pop %v966
        %v968 = vmul.f32 %v873, 1.442695
        %v969 = vpow.pop %v968
        %v970 = vmul.f32 %v874, 1.442695
        %v971 = vpow.pop %v970
        %v972 = vmul.f32 %v875, 1.442695
        %v973 = vpow.pop %v972
        %v974 = vadd.f32 %v877, 1.0
        %v975 = vlog2.pop %v974
        %v976 = vmul.f32 %v975, 0.6931472
        %v977 = vmul.f32 -0.5, %v877
        %v978 = vadd.f32 %v977, 1.0
        %v979 = vmul.f32 %v978, %v877
        %v980 = vand.u32 2147483647, %v877
        %vm981 = vcmp.lt.f32.partialorder %v980, 0.0004427343
        %v982 = vsel %vm981, %v979, %v976
        %v983 = vadd.f32 %v879, 1.0
        %v984 = vlog2.pop %v983
        %v985 = vmul.f32 %v984, 0.6931472
        %v986 = vmul.f32 -0.5, %v879
        %v987 = vadd.f32 %v986, 1.0
        %v988 = vmul.f32 %v987, %v879
        %v989 = vand.u32 2147483647, %v879
        %vm990 = vcmp.lt.f32.partialorder %v989, 0.0004427343
        %v991 = vsel %vm990, %v988, %v985
        %v992 = vadd.f32 %v881, 1.0
        %v993 = vlog2.pop %v992
        %v994 = vmul.f32 %v993, 0.6931472
        %v995 = vmul.f32 -0.5, %v881
        %v996 = vadd.f32 %v995, 1.0
        %v997 = vmul.f32 %v996, %v881
        %v998 = vand.u32 2147483647, %v881
        %vm999 = vcmp.lt.f32.partialorder %v998, 0.0004427343
        %v1000 = vsel %vm999, %v997, %v994
        %v1001 = vadd.f32 %v883, 1.0
        %v1002 = vlog2.pop %v1001
        %v1003 = vmul.f32 %v1002, 0.6931472
        %v1004 = vmul.f32 -0.5, %v883
        %v1005 = vadd.f32 %v1004, 1.0
        %v1006 = vmul.f32 %v1005, %v883
        %v1007 = vand.u32 2147483647, %v883
        %vm1008 = vcmp.lt.f32.partialorder %v1007, 0.0004427343
        %v1009 = vsel %vm1008, %v1006, %v1003
        %v1010 = vadd.f32 %v885, 1.0
        %v1011 = vlog2.pop %v1010
        %v1012 = vmul.f32 %v1011, 0.6931472
        %v1013 = vmul.f32 -0.5, %v885
        %v1014 = vadd.f32 %v1013, 1.0
        %v1015 = vmul.f32 %v1014, %v885
        %v1016 = vand.u32 2147483647, %v885
        %vm1017 = vcmp.lt.f32.partialorder %v1016, 0.0004427343
        %v1018 = vsel %vm1017, %v1015, %v1012
        %v1019 = vadd.f32 %v887, 1.0
        %v1020 = vlog2.pop %v1019
        %v1021 = vmul.f32 %v1020, 0.6931472
        %v1022 = vmul.f32 -0.5, %v887
        %v1023 = vadd.f32 %v1022, 1.0
        %v1024 = vmul.f32 %v1023, %v887
        %v1025 = vand.u32 2147483647, %v887
        %vm1026 = vcmp.lt.f32.partialorder %v1025, 0.0004427343
        %v1027 = vsel %vm1026, %v1024, %v1021
        %v1028 = vadd.f32 %v889, 1.0
        %v1029 = vlog2.pop %v1028
        %v1030 = vmul.f32 %v1029, 0.6931472
        %v1031 = vmul.f32 -0.5, %v889
        %v1032 = vadd.f32 %v1031, 1.0
        %v1033 = vmul.f32 %v1032, %v889
        %v1034 = vand.u32 2147483647, %v889
        %vm1035 = vcmp.lt.f32.partialorder %v1034, 0.0004427343
        %v1036 = vsel %vm1035, %v1033, %v1030
        %v1037 = vadd.f32 %v891, 1.0
        %v1038 = vlog2.pop %v1037
        %v1039 = vmul.f32 %v1038, 0.6931472
        %v1040 = vmul.f32 -0.5, %v891
        %v1041 = vadd.f32 %v1040, 1.0
        %v1042 = vmul.f32 %v1041, %v891
        %v1043 = vand.u32 2147483647, %v891
        %vm1044 = vcmp.lt.f32.partialorder %v1043, 0.0004427343
        %v1045 = vsel %vm1044, %v1042, %v1039
        %v1046 = vadd.f32 %v893, 1.0
        %v1047 = vlog2.pop %v1046
        %v1048 = vmul.f32 %v1047, 0.6931472
        %v1049 = vmul.f32 -0.5, %v893
        %v1050 = vadd.f32 %v1049, 1.0
        %v1051 = vmul.f32 %v1050, %v893
        %v1052 = vand.u32 2147483647, %v893
        %vm1053 = vcmp.lt.f32.partialorder %v1052, 0.0004427343
        %v1054 = vsel %vm1053, %v1051, %v1048
        %v1055 = vadd.f32 %v895, 1.0
        %v1056 = vlog2.pop %v1055
        %v1057 = vmul.f32 %v1056, 0.6931472
        %v1058 = vmul.f32 -0.5, %v895
        %v1059 = vadd.f32 %v1058, 1.0
        %v1060 = vmul.f32 %v1059, %v895
        %v1061 = vand.u32 2147483647, %v895
        %vm1062 = vcmp.lt.f32.partialorder %v1061, 0.0004427343
        %v1063 = vsel %vm1062, %v1060, %v1057
        %v1064 = vadd.f32 %v897, 1.0
        %v1065 = vlog2.pop %v1064
        %v1066 = vmul.f32 %v1065, 0.6931472
        %v1067 = vmul.f32 -0.5, %v897
        %v1068 = vadd.f32 %v1067, 1.0
        %v1069 = vmul.f32 %v1068, %v897
        %v1070 = vand.u32 2147483647, %v897
        %vm1071 = vcmp.lt.f32.partialorder %v1070, 0.0004427343
        %v1072 = vsel %vm1071, %v1069, %v1066
        %v1073 = vadd.f32 %v899, 1.0
        %v1074 = vlog2.pop %v1073
        %v1075 = vmul.f32 %v1074, 0.6931472
        %v1076 = vmul.f32 -0.5, %v899
        %v1077 = vadd.f32 %v1076, 1.0
        %v1078 = vmul.f32 %v1077, %v899
        %v1079 = vand.u32 2147483647, %v899
        %vm1080 = vcmp.lt.f32.partialorder %v1079, 0.0004427343
        %v1081 = vsel %vm1080, %v1078, %v1075
        %v1082 = vadd.f32 %v901, 1.0
        %v1083 = vlog2.pop %v1082
        %v1084 = vmul.f32 %v1083, 0.6931472
        %v1085 = vmul.f32 -0.5, %v901
        %v1086 = vadd.f32 %v1085, 1.0
        %v1087 = vmul.f32 %v1086, %v901
        %v1088 = vand.u32 2147483647, %v901
        %vm1089 = vcmp.lt.f32.partialorder %v1088, 0.0004427343
        %v1090 = vsel %vm1089, %v1087, %v1084
        %v1091 = vadd.f32 %v903, 1.0
        %v1092 = vlog2.pop %v1091
        %v1093 = vmul.f32 %v1092, 0.6931472
        %v1094 = vmul.f32 -0.5, %v903
        %v1095 = vadd.f32 %v1094, 1.0
        %v1096 = vmul.f32 %v1095, %v903
        %v1097 = vand.u32 2147483647, %v903
        %vm1098 = vcmp.lt.f32.partialorder %v1097, 0.0004427343
        %v1099 = vsel %vm1098, %v1096, %v1093
        %v1100 = vadd.f32 %v905, 1.0
        %v1101 = vlog2.pop %v1100
        %v1102 = vmul.f32 %v1101, 0.6931472
        %v1103 = vmul.f32 -0.5, %v905
        %v1104 = vadd.f32 %v1103, 1.0
        %v1105 = vmul.f32 %v1104, %v905
        %v1106 = vand.u32 2147483647, %v905
        %vm1107 = vcmp.lt.f32.partialorder %v1106, 0.0004427343
        %v1108 = vsel %vm1107, %v1105, %v1102
        %v1109 = vadd.f32 %v907, 1.0
        %v1110 = vlog2.pop %v1109
        %v1111 = vmul.f32 %v1110, 0.6931472
        %v1112 = vmul.f32 -0.5, %v907
        %v1113 = vadd.f32 %v1112, 1.0
        %v1114 = vmul.f32 %v1113, %v907
        %v1115 = vand.u32 2147483647, %v907
        %vm1116 = vcmp.lt.f32.partialorder %v1115, 0.0004427343
        %v1117 = vsel %vm1116, %v1114, %v1111
        %v1118 = vadd.f32 %v909, 1.0
        %v1119 = vlog2.pop %v1118
        %v1120 = vmul.f32 %v1119, 0.6931472
        %v1121 = vmul.f32 -0.5, %v909
        %v1122 = vadd.f32 %v1121, 1.0
        %v1123 = vmul.f32 %v1122, %v909
        %v1124 = vand.u32 2147483647, %v909
        %vm1125 = vcmp.lt.f32.partialorder %v1124, 0.0004427343
        %v1126 = vsel %vm1125, %v1123, %v1120
        %v1127 = vadd.f32 %v911, 1.0
        %v1128 = vlog2.pop %v1127
        %v1129 = vmul.f32 %v1128, 0.6931472
        %v1130 = vmul.f32 -0.5, %v911
        %v1131 = vadd.f32 %v1130, 1.0
        %v1132 = vmul.f32 %v1131, %v911
        %v1133 = vand.u32 2147483647, %v911
        %vm1134 = vcmp.lt.f32.partialorder %v1133, 0.0004427343
        %v1135 = vsel %vm1134, %v1132, %v1129
        %v1136 = vadd.f32 %v913, 1.0
        %v1137 = vlog2.pop %v1136
        %v1138 = vmul.f32 %v1137, 0.6931472
        %v1139 = vmul.f32 -0.5, %v913
        %v1140 = vadd.f32 %v1139, 1.0
        %v1141 = vmul.f32 %v1140, %v913
        %v1142 = vand.u32 2147483647, %v913
        %vm1143 = vcmp.lt.f32.partialorder %v1142, 0.0004427343
        %v1144 = vsel %vm1143, %v1141, %v1138
        %v1145 = vadd.f32 %v915, 1.0
        %v1146 = vlog2.pop %v1145
        %v1147 = vmul.f32 %v1146, 0.6931472
        %v1148 = vmul.f32 -0.5, %v915
        %v1149 = vadd.f32 %v1148, 1.0
        %v1150 = vmul.f32 %v1149, %v915
        %v1151 = vand.u32 2147483647, %v915
        %vm1152 = vcmp.lt.f32.partialorder %v1151, 0.0004427343
        %v1153 = vsel %vm1152, %v1150, %v1147
        %v1154 = vadd.f32 %v917, 1.0
        %v1155 = vlog2.pop %v1154
        %v1156 = vmul.f32 %v1155, 0.6931472
        %v1157 = vmul.f32 -0.5, %v917
        %v1158 = vadd.f32 %v1157, 1.0
        %v1159 = vmul.f32 %v1158, %v917
        %v1160 = vand.u32 2147483647, %v917
        %vm1161 = vcmp.lt.f32.partialorder %v1160, 0.0004427343
        %v1162 = vsel %vm1161, %v1159, %v1156
        %v1163 = vadd.f32 %v919, 1.0
        %v1164 = vlog2.pop %v1163
        %v1165 = vmul.f32 %v1164, 0.6931472
        %v1166 = vmul.f32 -0.5, %v919
        %v1167 = vadd.f32 %v1166, 1.0
        %v1168 = vmul.f32 %v1167, %v919
        %v1169 = vand.u32 2147483647, %v919
        %vm1170 = vcmp.lt.f32.partialorder %v1169, 0.0004427343
        %v1171 = vsel %vm1170, %v1168, %v1165
        %v1172 = vadd.f32 %v921, 1.0
        %v1173 = vlog2.pop %v1172
        %v1174 = vmul.f32 %v1173, 0.6931472
        %v1175 = vmul.f32 -0.5, %v921
        %v1176 = vadd.f32 %v1175, 1.0
        %v1177 = vmul.f32 %v1176, %v921
        %v1178 = vand.u32 2147483647, %v921
        %vm1179 = vcmp.lt.f32.partialorder %v1178, 0.0004427343
        %v1180 = vsel %vm1179, %v1177, %v1174
        %v1181 = vadd.f32 %v923, 1.0
        %v1182 = vlog2.pop %v1181
        %v1183 = vmul.f32 %v1182, 0.6931472
        %v1184 = vmul.f32 -0.5, %v923
        %v1185 = vadd.f32 %v1184, 1.0
        %v1186 = vmul.f32 %v1185, %v923
        %v1187 = vand.u32 2147483647, %v923
        %vm1188 = vcmp.lt.f32.partialorder %v1187, 0.0004427343
        %v1189 = vsel %vm1188, %v1186, %v1183
        %v1190 = vadd.f32 %v925, 1.0
        %v1191 = vlog2.pop %v1190
        %v1192 = vmul.f32 %v1191, 0.6931472
        %v1193 = vmul.f32 -0.5, %v925
        %v1194 = vadd.f32 %v1193, 1.0
        %v1195 = vmul.f32 %v1194, %v925
        %v1196 = vand.u32 2147483647, %v925
        %vm1197 = vcmp.lt.f32.partialorder %v1196, 0.0004427343
        %v1198 = vsel %vm1197, %v1195, %v1192
        %v1199 = vadd.f32 %v927, 1.0
        %v1200 = vlog2.pop %v1199
        %v1201 = vmul.f32 %v1200, 0.6931472
        %v1202 = vmul.f32 -0.5, %v927
        %v1203 = vadd.f32 %v1202, 1.0
        %v1204 = vmul.f32 %v1203, %v927
        %v1205 = vand.u32 2147483647, %v927
        %vm1206 = vcmp.lt.f32.partialorder %v1205, 0.0004427343
        %v1207 = vsel %vm1206, %v1204, %v1201
        %v1208 = vadd.f32 %v929, 1.0
        %v1209 = vlog2.pop %v1208
        %v1210 = vmul.f32 %v1209, 0.6931472
        %v1211 = vmul.f32 -0.5, %v929
        %v1212 = vadd.f32 %v1211, 1.0
        %v1213 = vmul.f32 %v1212, %v929
        %v1214 = vand.u32 2147483647, %v929
        %vm1215 = vcmp.lt.f32.partialorder %v1214, 0.0004427343
        %v1216 = vsel %vm1215, %v1213, %v1210
        %v1217 = vadd.f32 %v931, 1.0
        %v1218 = vlog2.pop %v1217
        %v1219 = vmul.f32 %v1218, 0.6931472
        %v1220 = vmul.f32 -0.5, %v931
        %v1221 = vadd.f32 %v1220, 1.0
        %v1222 = vmul.f32 %v1221, %v931
        %v1223 = vand.u32 2147483647, %v931
        %vm1224 = vcmp.lt.f32.partialorder %v1223, 0.0004427343
        %v1225 = vsel %vm1224, %v1222, %v1219
        %v1226 = vadd.f32 %v933, 1.0
        %v1227 = vlog2.pop %v1226
        %v1228 = vmul.f32 %v1227, 0.6931472
        %v1229 = vmul.f32 -0.5, %v933
        %v1230 = vadd.f32 %v1229, 1.0
        %v1231 = vmul.f32 %v1230, %v933
        %v1232 = vand.u32 2147483647, %v933
        %vm1233 = vcmp.lt.f32.partialorder %v1232, 0.0004427343
        %v1234 = vsel %vm1233, %v1231, %v1228
        %v1235 = vadd.f32 %v935, 1.0
        %v1236 = vlog2.pop %v1235
        %v1237 = vmul.f32 %v1236, 0.6931472
        %v1238 = vmul.f32 -0.5, %v935
        %v1239 = vadd.f32 %v1238, 1.0
        %v1240 = vmul.f32 %v1239, %v935
        %v1241 = vand.u32 2147483647, %v935
        %vm1242 = vcmp.lt.f32.partialorder %v1241, 0.0004427343
        %v1243 = vsel %vm1242, %v1240, %v1237
        %v1244 = vadd.f32 %v937, 1.0
        %v1245 = vlog2.pop %v1244
        %v1246 = vmul.f32 %v1245, 0.6931472
        %v1247 = vmul.f32 -0.5, %v937
        %v1248 = vadd.f32 %v1247, 1.0
        %v1249 = vmul.f32 %v1248, %v937
        %v1250 = vand.u32 2147483647, %v937
        %vm1251 = vcmp.lt.f32.partialorder %v1250, 0.0004427343
        %v1252 = vsel %vm1251, %v1249, %v1246
        %v1253 = vadd.f32 %v939, 1.0
        %v1254 = vlog2.pop %v1253
        %v1255 = vmul.f32 %v1254, 0.6931472
        %v1256 = vmul.f32 -0.5, %v939
        %v1257 = vadd.f32 %v1256, 1.0
        %v1258 = vmul.f32 %v1257, %v939
        %v1259 = vand.u32 2147483647, %v939
        %vm1260 = vcmp.lt.f32.partialorder %v1259, 0.0004427343
        %v1261 = vsel %vm1260, %v1258, %v1255
        %v1262 = vadd.f32 %v941, 1.0
        %v1263 = vlog2.pop %v1262
        %v1264 = vmul.f32 %v1263, 0.6931472
        %v1265 = vmul.f32 -0.5, %v941
        %v1266 = vadd.f32 %v1265, 1.0
        %v1267 = vmul.f32 %v1266, %v941
        %v1268 = vand.u32 2147483647, %v941
        %vm1269 = vcmp.lt.f32.partialorder %v1268, 0.0004427343
        %v1270 = vsel %vm1269, %v1267, %v1264
        %v1271 = vadd.f32 %v943, 1.0
        %v1272 = vlog2.pop %v1271
        %v1273 = vmul.f32 %v1272, 0.6931472
        %v1274 = vmul.f32 -0.5, %v943
        %v1275 = vadd.f32 %v1274, 1.0
        %v1276 = vmul.f32 %v1275, %v943
        %v1277 = vand.u32 2147483647, %v943
        %vm1278 = vcmp.lt.f32.partialorder %v1277, 0.0004427343
        %v1279 = vsel %vm1278, %v1276, %v1273
        %v1280 = vadd.f32 %v945, 1.0
        %v1281 = vlog2.pop %v1280
        %v1282 = vmul.f32 %v1281, 0.6931472
        %v1283 = vmul.f32 -0.5, %v945
        %v1284 = vadd.f32 %v1283, 1.0
        %v1285 = vmul.f32 %v1284, %v945
        %v1286 = vand.u32 2147483647, %v945
        %vm1287 = vcmp.lt.f32.partialorder %v1286, 0.0004427343
        %v1288 = vsel %vm1287, %v1285, %v1282
        %v1289 = vadd.f32 %v947, 1.0
        %v1290 = vlog2.pop %v1289
        %v1291 = vmul.f32 %v1290, 0.6931472
        %v1292 = vmul.f32 -0.5, %v947
        %v1293 = vadd.f32 %v1292, 1.0
        %v1294 = vmul.f32 %v1293, %v947
        %v1295 = vand.u32 2147483647, %v947
        %vm1296 = vcmp.lt.f32.partialorder %v1295, 0.0004427343
        %v1297 = vsel %vm1296, %v1294, %v1291
        %v1298 = vadd.f32 %v949, 1.0
        %v1299 = vlog2.pop %v1298
        %v1300 = vmul.f32 %v1299, 0.6931472
        %v1301 = vmul.f32 -0.5, %v949
        %v1302 = vadd.f32 %v1301, 1.0
        %v1303 = vmul.f32 %v1302, %v949
        %v1304 = vand.u32 2147483647, %v949
        %vm1305 = vcmp.lt.f32.partialorder %v1304, 0.0004427343
        %v1306 = vsel %vm1305, %v1303, %v1300
        %v1307 = vadd.f32 %v951, 1.0
        %v1308 = vlog2.pop %v1307
        %v1309 = vmul.f32 %v1308, 0.6931472
        %v1310 = vmul.f32 -0.5, %v951
        %v1311 = vadd.f32 %v1310, 1.0
        %v1312 = vmul.f32 %v1311, %v951
        %v1313 = vand.u32 2147483647, %v951
        %vm1314 = vcmp.lt.f32.partialorder %v1313, 0.0004427343
        %v1315 = vsel %vm1314, %v1312, %v1309
        %v1316 = vadd.f32 %v953, 1.0
        %v1317 = vlog2.pop %v1316
        %v1318 = vmul.f32 %v1317, 0.6931472
        %v1319 = vmul.f32 -0.5, %v953
        %v1320 = vadd.f32 %v1319, 1.0
        %v1321 = vmul.f32 %v1320, %v953
        %v1322 = vand.u32 2147483647, %v953
        %vm1323 = vcmp.lt.f32.partialorder %v1322, 0.0004427343
        %v1324 = vsel %vm1323, %v1321, %v1318
        %v1325 = vadd.f32 %v955, 1.0
        %v1326 = vlog2.pop %v1325
        %v1327 = vmul.f32 %v1326, 0.6931472
        %v1328 = vmul.f32 -0.5, %v955
        %v1329 = vadd.f32 %v1328, 1.0
        %v1330 = vmul.f32 %v1329, %v955
        %v1331 = vand.u32 2147483647, %v955
        %vm1332 = vcmp.lt.f32.partialorder %v1331, 0.0004427343
        %v1333 = vsel %vm1332, %v1330, %v1327
        %v1334 = vadd.f32 %v957, 1.0
        %v1335 = vlog2.pop %v1334
        %v1336 = vmul.f32 %v1335, 0.6931472
        %v1337 = vmul.f32 -0.5, %v957
        %v1338 = vadd.f32 %v1337, 1.0
        %v1339 = vmul.f32 %v1338, %v957
        %v1340 = vand.u32 2147483647, %v957
        %vm1341 = vcmp.lt.f32.partialorder %v1340, 0.0004427343
        %v1342 = vsel %vm1341, %v1339, %v1336
        %v1343 = vadd.f32 %v959, 1.0
        %v1344 = vlog2.pop %v1343
        %v1345 = vmul.f32 %v1344, 0.6931472
        %v1346 = vmul.f32 -0.5, %v959
        %v1347 = vadd.f32 %v1346, 1.0
        %v1348 = vmul.f32 %v1347, %v959
        %v1349 = vand.u32 2147483647, %v959
        %vm1350 = vcmp.lt.f32.partialorder %v1349, 0.0004427343
        %v1351 = vsel %vm1350, %v1348, %v1345
        %v1352 = vadd.f32 %v961, 1.0
        %v1353 = vlog2.pop %v1352
        %v1354 = vmul.f32 %v1353, 0.6931472
        %v1355 = vmul.f32 -0.5, %v961
        %v1356 = vadd.f32 %v1355, 1.0
        %v1357 = vmul.f32 %v1356, %v961
        %v1358 = vand.u32 2147483647, %v961
        %vm1359 = vcmp.lt.f32.partialorder %v1358, 0.0004427343
        %v1360 = vsel %vm1359, %v1357, %v1354
        %v1361 = vadd.f32 %v963, 1.0
        %v1362 = vlog2.pop %v1361
        %v1363 = vmul.f32 %v1362, 0.6931472
        %v1364 = vmul.f32 -0.5, %v963
        %v1365 = vadd.f32 %v1364, 1.0
        %v1366 = vmul.f32 %v1365, %v963
        %v1367 = vand.u32 2147483647, %v963
        %vm1368 = vcmp.lt.f32.partialorder %v1367, 0.0004427343
        %v1369 = vsel %vm1368, %v1366, %v1363
        %v1370 = vadd.f32 %v965, 1.0
        %v1371 = vlog2.pop %v1370
        %v1372 = vmul.f32 %v1371, 0.6931472
        %v1373 = vmul.f32 -0.5, %v965
        %v1374 = vadd.f32 %v1373, 1.0
        %v1375 = vmul.f32 %v1374, %v965
        %v1376 = vand.u32 2147483647, %v965
        %vm1377 = vcmp.lt.f32.partialorder %v1376, 0.0004427343
        %v1378 = vsel %vm1377, %v1375, %v1372
        %v1379 = vadd.f32 %v967, 1.0
        %v1380 = vlog2.pop %v1379
        %v1381 = vmul.f32 %v1380, 0.6931472
        %v1382 = vmul.f32 -0.5, %v967
        %v1383 = vadd.f32 %v1382, 1.0
        %v1384 = vmul.f32 %v1383, %v967
        %v1385 = vand.u32 2147483647, %v967
        %vm1386 = vcmp.lt.f32.partialorder %v1385, 0.0004427343
        %v1387 = vsel %vm1386, %v1384, %v1381
        %v1388 = vadd.f32 %v969, 1.0
        %v1389 = vlog2.pop %v1388
        %v1390 = vmul.f32 %v1389, 0.6931472
        %v1391 = vmul.f32 -0.5, %v969
        %v1392 = vadd.f32 %v1391, 1.0
        %v1393 = vmul.f32 %v1392, %v969
        %v1394 = vand.u32 2147483647, %v969
        %vm1395 = vcmp.lt.f32.partialorder %v1394, 0.0004427343
        %v1396 = vsel %vm1395, %v1393, %v1390
        %v1397 = vadd.f32 %v971, 1.0
        %v1398 = vlog2.pop %v1397
        %v1399 = vmul.f32 %v1398, 0.6931472
        %v1400 = vmul.f32 -0.5, %v971
        %v1401 = vadd.f32 %v1400, 1.0
        %v1402 = vmul.f32 %v1401, %v971
        %v1403 = vand.u32 2147483647, %v971
        %vm1404 = vcmp.lt.f32.partialorder %v1403, 0.0004427343
        %v1405 = vsel %vm1404, %v1402, %v1399
        %v1406 = vadd.f32 %v973, 1.0
        %v1407 = vlog2.pop %v1406
        %v1408 = vmul.f32 %v1407, 0.6931472
        %v1409 = vmul.f32 -0.5, %v973
        %v1410 = vadd.f32 %v1409, 1.0
        %v1411 = vmul.f32 %v1410, %v973
        %v1412 = vand.u32 2147483647, %v973
        %vm1413 = vcmp.lt.f32.partialorder %v1412, 0.0004427343
        %v1414 = vsel %vm1413, %v1411, %v1408
        %v1415 = vadd.f32 %v729, %v982
        %v1416 = vadd.f32 %v730, %v991
        %v1417 = vadd.f32 %v731, %v1000
        %v1418 = vadd.f32 %v732, %v1009
        %v1419 = vadd.f32 %v733, %v1018
        %v1420 = vadd.f32 %v734, %v1027
        %v1421 = vadd.f32 %v735, %v1036
        %v1422 = vadd.f32 %v736, %v1045
        %v1423 = vadd.f32 %v737, %v1054
        %v1424 = vadd.f32 %v738, %v1063
        %v1425 = vadd.f32 %v739, %v1072
        %v1426 = vadd.f32 %v740, %v1081
        %v1427 = vadd.f32 %v741, %v1090
        %v1428 = vadd.f32 %v742, %v1099
        %v1429 = vadd.f32 %v743, %v1108
        %v1430 = vadd.f32 %v744, %v1117
        %v1431 = vadd.f32 %v745, %v1126
        %v1432 = vadd.f32 %v746, %v1135
        %v1433 = vadd.f32 %v747, %v1144
        %v1434 = vadd.f32 %v748, %v1153
        %v1435 = vadd.f32 %v749, %v1162
        %v1436 = vadd.f32 %v750, %v1171
        %v1437 = vadd.f32 %v751, %v1180
        %v1438 = vadd.f32 %v752, %v1189
        %v1439 = vadd.f32 %v753, %v1198
        %v1440 = vadd.f32 %v754, %v1207
        %v1441 = vadd.f32 %v755, %v1216
        %v1442 = vadd.f32 %v756, %v1225
        %v1443 = vadd.f32 %v757, %v1234
        %v1444 = vadd.f32 %v758, %v1243
        %v1445 = vadd.f32 %v759, %v1252
        %v1446 = vadd.f32 %v760, %v1261
        %v1447 = vadd.f32 %v761, %v1270
        %v1448 = vadd.f32 %v762, %v1279
        %v1449 = vadd.f32 %v763, %v1288
        %v1450 = vadd.f32 %v764, %v1297
        %v1451 = vadd.f32 %v765, %v1306
        %v1452 = vadd.f32 %v766, %v1315
        %v1453 = vadd.f32 %v767, %v1324
        %v1454 = vadd.f32 %v768, %v1333
        %v1455 = vadd.f32 %v769, %v1342
        %v1456 = vadd.f32 %v770, %v1351
        %v1457 = vadd.f32 %v771, %v1360
        %v1458 = vadd.f32 %v772, %v1369
        %v1459 = vadd.f32 %v773, %v1378
        %v1460 = vadd.f32 %v774, %v1387
        %v1461 = vadd.f32 %v775, %v1396
        %v1462 = vadd.f32 %v776, %v1405
        %v1463 = vadd.f32 %v777, %v1414
        %v1464 = vld [vmem:[%s546] sm:$0xff]
        %v1465 = vld [vmem:[%s546 + $0x8] sm:$0xff]
        %v1466 = vld [vmem:[%s546 + $0x10] sm:$0xff]
        %v1467 = vld [vmem:[%s546 + $0x18] sm:$0xff]
        %v1468 = vld [vmem:[%s546 + $0x20] sm:$0xff]
        %v1469 = vld [vmem:[%s546 + $0x28] sm:$0xff]
        %v1470 = vld [vmem:[%s546 + $0x30] sm:$0xff]
        %v1471 = vld [vmem:[%s546 + $0x38] sm:$0xff]
        %v1472 = vld [vmem:[%s546 + $0x40] sm:$0xff]
        %v1473 = vld [vmem:[%s546 + $0x48] sm:$0xff]
        %v1474 = vld [vmem:[%s546 + $0x50] sm:$0xff]
        %v1475 = vld [vmem:[%s546 + $0x58] sm:$0xff]
        %v1476 = vld [vmem:[%s546 + $0x60] sm:$0xff]
        %v1477 = vld [vmem:[%s546 + $0x68] sm:$0xff]
        %v1478 = vld [vmem:[%s546 + $0x70] sm:$0xff]
        %v1479 = vld [vmem:[%s546 + $0x78] sm:$0xff]
        %v1480 = vld [vmem:[%s546 + $0x80] sm:$0xff]
        %v1481 = vld [vmem:[%s546 + $0x88] sm:$0xff]
        %v1482 = vld [vmem:[%s546 + $0x90] sm:$0xff]
        %v1483 = vld [vmem:[%s546 + $0x98] sm:$0xff]
        %v1484 = vld [vmem:[%s546 + $0xa0] sm:$0xff]
        %v1485 = vld [vmem:[%s546 + $0xa8] sm:$0xff]
        %v1486 = vld [vmem:[%s546 + $0xb0] sm:$0xff]
        %v1487 = vld [vmem:[%s546 + $0xb8] sm:$0xff]
        %v1488 = vld [vmem:[%s546 + $0xc0] sm:$0xff]
        %v1489 = vld [vmem:[%s546 + $0xc8] sm:$0xff]
        %v1490 = vld [vmem:[%s546 + $0xd0] sm:$0xff]
        %v1491 = vld [vmem:[%s546 + $0xd8] sm:$0xff]
        %v1492 = vld [vmem:[%s546 + $0xe0] sm:$0xff]
        %v1493 = vld [vmem:[%s546 + $0xe8] sm:$0xff]
        %v1494 = vld [vmem:[%s546 + $0xf0] sm:$0xff]
        %v1495 = vld [vmem:[%s546 + $0xf8] sm:$0xff]
        %v1496 = vld [vmem:[%s546 + $0x100] sm:$0xff]
        %v1497 = vld [vmem:[%s546 + $0x108] sm:$0xff]
        %v1498 = vld [vmem:[%s546 + $0x110] sm:$0xff]
        %v1499 = vld [vmem:[%s546 + $0x118] sm:$0xff]
        %v1500 = vld [vmem:[%s546 + $0x120] sm:$0xff]
        %v1501 = vld [vmem:[%s546 + $0x128] sm:$0xff]
        %v1502 = vld [vmem:[%s546 + $0x130] sm:$0xff]
        %v1503 = vld [vmem:[%s546 + $0x138] sm:$0xff]
        %v1504 = vld [vmem:[%s546 + $0x140] sm:$0xff]
        %v1505 = vld [vmem:[%s546 + $0x148] sm:$0xff]
        %v1506 = vld [vmem:[%s546 + $0x150] sm:$0xff]
        %v1507 = vld [vmem:[%s546 + $0x158] sm:$0xff]
        %v1508 = vld [vmem:[%s546 + $0x160] sm:$0xff]
        %v1509 = vld [vmem:[%s546 + $0x168] sm:$0xff]
        %v1510 = vld [vmem:[%s546 + $0x170] sm:$0xff]
        %v1511 = vld [vmem:[%s546 + $0x178] sm:$0xff]
        %v1512 = vld [vmem:[%s546 + $0x180] sm:$0xff]
        %v1513 = vmul.f32 %v1415, %v1464
        %v1514 = vmul.f32 %v1416, %v1465
        %v1515 = vmul.f32 %v1417, %v1466
        %v1516 = vmul.f32 %v1418, %v1467
        %v1517 = vmul.f32 %v1419, %v1468
        %v1518 = vmul.f32 %v1420, %v1469
        %v1519 = vmul.f32 %v1421, %v1470
        %v1520 = vmul.f32 %v1422, %v1471
        %v1521 = vmul.f32 %v1423, %v1472
        %v1522 = vmul.f32 %v1424, %v1473
        %v1523 = vmul.f32 %v1425, %v1474
        %v1524 = vmul.f32 %v1426, %v1475
        %v1525 = vmul.f32 %v1427, %v1476
        %v1526 = vmul.f32 %v1428, %v1477
        %v1527 = vmul.f32 %v1429, %v1478
        %v1528 = vmul.f32 %v1430, %v1479
        %v1529 = vmul.f32 %v1431, %v1480
        %v1530 = vmul.f32 %v1432, %v1481
        %v1531 = vmul.f32 %v1433, %v1482
        %v1532 = vmul.f32 %v1434, %v1483
        %v1533 = vmul.f32 %v1435, %v1484
        %v1534 = vmul.f32 %v1436, %v1485
        %v1535 = vmul.f32 %v1437, %v1486
        %v1536 = vmul.f32 %v1438, %v1487
        %v1537 = vmul.f32 %v1439, %v1488
        %v1538 = vmul.f32 %v1440, %v1489
        %v1539 = vmul.f32 %v1441, %v1490
        %v1540 = vmul.f32 %v1442, %v1491
        %v1541 = vmul.f32 %v1443, %v1492
        %v1542 = vmul.f32 %v1444, %v1493
        %v1543 = vmul.f32 %v1445, %v1494
        %v1544 = vmul.f32 %v1446, %v1495
        %v1545 = vmul.f32 %v1447, %v1496
        %v1546 = vmul.f32 %v1448, %v1497
        %v1547 = vmul.f32 %v1449, %v1498
        %v1548 = vmul.f32 %v1450, %v1499
        %v1549 = vmul.f32 %v1451, %v1500
        %v1550 = vmul.f32 %v1452, %v1501
        %v1551 = vmul.f32 %v1453, %v1502
        %v1552 = vmul.f32 %v1454, %v1503
        %v1553 = vmul.f32 %v1455, %v1504
        %v1554 = vmul.f32 %v1456, %v1505
        %v1555 = vmul.f32 %v1457, %v1506
        %v1556 = vmul.f32 %v1458, %v1507
        %v1557 = vmul.f32 %v1459, %v1508
        %v1558 = vmul.f32 %v1460, %v1509
        %v1559 = vmul.f32 %v1461, %v1510
        %v1560 = vmul.f32 %v1462, %v1511
        %v1561 = vmul.f32 %v1463, %v1512
        %v1562 = vadd.f32 %v631, %v1513
        %v1563 = vadd.f32 %v632, %v1514
        %v1564 = vadd.f32 %v633, %v1515
        %v1565 = vadd.f32 %v634, %v1516
        %v1566 = vadd.f32 %v635, %v1517
        %v1567 = vadd.f32 %v636, %v1518
        %v1568 = vadd.f32 %v637, %v1519
        %v1569 = vadd.f32 %v638, %v1520
        %v1570 = vadd.f32 %v639, %v1521
        %v1571 = vadd.f32 %v640, %v1522
        %v1572 = vadd.f32 %v641, %v1523
        %v1573 = vadd.f32 %v642, %v1524
        %v1574 = vadd.f32 %v643, %v1525
        %v1575 = vadd.f32 %v644, %v1526
        %v1576 = vadd.f32 %v645, %v1527
        %v1577 = vadd.f32 %v646, %v1528
        %v1578 = vadd.f32 %v647, %v1529
        %v1579 = vadd.f32 %v648, %v1530
        %v1580 = vadd.f32 %v649, %v1531
        %v1581 = vadd.f32 %v650, %v1532
        %v1582 = vadd.f32 %v651, %v1533
        %v1583 = vadd.f32 %v652, %v1534
        %v1584 = vadd.f32 %v653, %v1535
        %v1585 = vadd.f32 %v654, %v1536
        %v1586 = vadd.f32 %v655, %v1537
        %v1587 = vadd.f32 %v656, %v1538
        %v1588 = vadd.f32 %v657, %v1539
        %v1589 = vadd.f32 %v658, %v1540
        %v1590 = vadd.f32 %v659, %v1541
        %v1591 = vadd.f32 %v660, %v1542
        %v1592 = vadd.f32 %v661, %v1543
        %v1593 = vadd.f32 %v662, %v1544
        %v1594 = vadd.f32 %v663, %v1545
        %v1595 = vadd.f32 %v664, %v1546
        %v1596 = vadd.f32 %v665, %v1547
        %v1597 = vadd.f32 %v666, %v1548
        %v1598 = vadd.f32 %v667, %v1549
        %v1599 = vadd.f32 %v668, %v1550
        %v1600 = vadd.f32 %v669, %v1551
        %v1601 = vadd.f32 %v670, %v1552
        %v1602 = vadd.f32 %v671, %v1553
        %v1603 = vadd.f32 %v672, %v1554
        %v1604 = vadd.f32 %v673, %v1555
        %v1605 = vadd.f32 %v674, %v1556
        %v1606 = vadd.f32 %v675, %v1557
        %v1607 = vadd.f32 %v676, %v1558
        %v1608 = vadd.f32 %v677, %v1559
        %v1609 = vadd.f32 %v678, %v1560
        %v1610 = vadd.f32 %v679, %v1561
        %v1611 = vld [vmem:[#allocation2] sm:$0xff]
        %v1612 = vld [vmem:[%s519] sm:$0xff]
        %v1613 = vld [vmem:[%s519 + $0x8] sm:$0xff]
        %v1614 = vld [vmem:[%s519 + $0x10] sm:$0xff]
        %v1615 = vld [vmem:[%s519 + $0x18] sm:$0xff]
        %vm1616 = vcmask 64512
        %v1618 = vsel %vm1616, %v1615, 0
        %1620 = vmatprep.subr.mxu0 0.0
        %1621 = vmatpush1.msra.mxu0 %v1562
        %1622 = vmatprep.subr.mxu0 0.0
        %1623 = vmatpush1.msra.mxu0 %v1563
        %1624 = vmatprep.subr.mxu0 0.0
        %1625 = vmatpush1.msra.mxu0 %v1564
        %1626 = vmatprep.subr.mxu0 0.0
        %1627 = vmatpush1.msra.mxu0 %v1565
        %1628 = vmatprep.subr.mxu0 0.0
        %1629 = vmatpush1.msra.mxu0 %v1566
        %1630 = vmatprep.subr.mxu0 0.0
        %1631 = vmatpush1.msra.mxu0 %v1567
        %1632 = vmatprep.subr.mxu0 0.0
        %1633 = vmatpush1.msra.mxu0 %v1568
        %1634 = vmatprep.subr.mxu0 0.0
        %1635 = vmatpush1.msra.mxu0 %v1569
        %1636 = vmatprep.subr.mxu0 0.0
        %1637 = vmatpush1.msra.mxu0 %v1570
        %1638 = vmatprep.subr.mxu0 0.0
        %1639 = vmatpush1.msra.mxu0 %v1571
        %1640 = vmatprep.subr.mxu0 0.0
        %1641 = vmatpush1.msra.mxu0 %v1572
        %1642 = vmatprep.subr.mxu0 0.0
        %1643 = vmatpush1.msra.mxu0 %v1573
        %1644 = vmatprep.subr.mxu0 0.0
        %1645 = vmatpush1.msra.mxu0 %v1574
        %1646 = vmatprep.subr.mxu0 0.0
        %1647 = vmatpush1.msra.mxu0 %v1575
        %1648 = vmatprep.subr.mxu0 0.0
        %1649 = vmatpush1.msra.mxu0 %v1576
        %1650 = vmatprep.subr.mxu0 0.0
        %1651 = vmatpush1.msra.mxu0 %v1577
        %1652 = vmatprep.subr.mxu0 0.0
        %1653 = vmatpush1.msra.mxu0 %v1578
        %1654 = vmatprep.subr.mxu0 0.0
        %1655 = vmatpush1.msra.mxu0 %v1579
        %1656 = vmatprep.subr.mxu0 0.0
        %1657 = vmatpush1.msra.mxu0 %v1580
        %1658 = vmatprep.subr.mxu0 0.0
        %1659 = vmatpush1.msra.mxu0 %v1581
        %1660 = vmatprep.subr.mxu0 0.0
        %1661 = vmatpush1.msra.mxu0 %v1582
        %1662 = vmatprep.subr.mxu0 0.0
        %1663 = vmatpush1.msra.mxu0 %v1583
        %1664 = vmatprep.subr.mxu0 0.0
        %1665 = vmatpush1.msra.mxu0 %v1584
        %1666 = vmatprep.subr.mxu0 0.0
        %1667 = vmatpush1.msra.mxu0 %v1585
        %1668 = vmatprep.subr.mxu0 0.0
        %1669 = vmatpush1.msra.mxu0 %v1586
        %1670 = vmatprep.subr.mxu0 0.0
        %1671 = vmatpush1.msra.mxu0 %v1587
        %1672 = vmatprep.subr.mxu0 0.0
        %1673 = vmatpush1.msra.mxu0 %v1588
        %1674 = vmatprep.subr.mxu0 0.0
        %1675 = vmatpush1.msra.mxu0 %v1589
        %1676 = vmatprep.subr.mxu0 0.0
        %1677 = vmatpush1.msra.mxu0 %v1590
        %1678 = vmatprep.subr.mxu0 0.0
        %1679 = vmatpush1.msra.mxu0 %v1591
        %1680 = vmatprep.subr.mxu0 0.0
        %1681 = vmatpush1.msra.mxu0 %v1592
        %1682 = vmatprep.subr.mxu0 0.0
        %1683 = vmatpush1.msra.mxu0 %v1593
        %1684 = vmatprep.mubr.f32.mxu0 %v1613
        %1685 = vmatmul.mubr.f32.gmra.mrb[0].mxu0 %v1612
        %v1686 = vpop.f32.mrb[0].mxu0
        %v1687 = vadd.f32 0.0, %v1686
        %v1688 = vpop.f32.mrb[0].mxu0
        %1689 = vdwg.mxu0
        %1690 = vmatprep.subr.mxu0 0.0
        %1691 = vmatpush1.msra.mxu0 %v1594
        %1692 = vmatprep.subr.mxu0 0.0
        %1693 = vmatpush1.msra.mxu0 %v1595
        %1694 = vmatprep.subr.mxu0 0.0
        %1695 = vmatpush1.msra.mxu0 %v1596
        %1696 = vmatprep.subr.mxu0 0.0
        %1697 = vmatpush1.msra.mxu0 %v1597
        %1698 = vmatprep.subr.mxu0 0.0
        %1699 = vmatpush1.msra.mxu0 %v1598
        %1700 = vmatprep.subr.mxu0 0.0
        %1701 = vmatpush1.msra.mxu0 %v1599
        %1702 = vmatprep.subr.mxu0 0.0
        %1703 = vmatpush1.msra.mxu0 %v1600
        %1704 = vmatprep.subr.mxu0 0.0
        %1705 = vmatpush1.msra.mxu0 %v1601
        %1706 = vmatprep.subr.mxu0 0.0
        %1707 = vmatpush1.msra.mxu0 %v1602
        %1708 = vmatprep.subr.mxu0 0.0
        %1709 = vmatpush1.msra.mxu0 %v1603
        %1710 = vmatprep.subr.mxu0 0.0
        %1711 = vmatpush1.msra.mxu0 %v1604
        %1712 = vmatprep.subr.mxu0 0.0
        %1713 = vmatpush1.msra.mxu0 %v1605
        %1714 = vmatprep.subr.mxu0 0.0
        %1715 = vmatpush1.msra.mxu0 %v1606
        %1716 = vmatprep.subr.mxu0 0.0
        %1717 = vmatpush1.msra.mxu0 %v1607
        %1718 = vmatprep.subr.mxu0 0.0
        %1719 = vmatpush1.msra.mxu0 %v1608
        %1720 = vmatprep.subr.mxu0 0.0
        %1721 = vmatpush1.msra.mxu0 %v1609
        %1722 = vmatprep.subr.mxu0 0.0
        %1723 = vmatpush1.msra.mxu0 %v1610
        %1724 = vmatprep.subr.mxu0 0.0
        %1725 = vmatpush1.msra.mxu0 0.0
        %1726 = vmatprep.subr.mxu0 0.0
        %1727 = vmatpush1.msra.mxu0 0.0
        %1728 = vmatprep.subr.mxu0 0.0
        %1729 = vmatpush1.msra.mxu0 0.0
        %1730 = vmatprep.subr.mxu0 0.0
        %1731 = vmatpush1.msra.mxu0 0.0
        %1732 = vmatprep.subr.mxu0 0.0
        %1733 = vmatpush1.msra.mxu0 0.0
        %1734 = vmatprep.subr.mxu0 0.0
        %1735 = vmatpush1.msra.mxu0 0.0
        %1736 = vmatprep.subr.mxu0 0.0
        %1737 = vmatpush1.msra.mxu0 0.0
        %1738 = vmatprep.subr.mxu0 0.0
        %1739 = vmatpush1.msra.mxu0 0.0
        %1740 = vmatprep.subr.mxu0 0.0
        %1741 = vmatpush1.msra.mxu0 0.0
        %1742 = vmatprep.subr.mxu0 0.0
        %1743 = vmatpush1.msra.mxu0 0.0
        %1744 = vmatprep.subr.mxu0 0.0
        %1745 = vmatpush1.msra.mxu0 0.0
        %1746 = vmatprep.subr.mxu0 0.0
        %1747 = vmatpush1.msra.mxu0 0.0
        %1748 = vmatprep.subr.mxu0 0.0
        %1749 = vmatpush1.msra.mxu0 0.0
        %1750 = vmatprep.subr.mxu0 0.0
        %1751 = vmatpush1.msra.mxu0 0.0
        %1752 = vmatprep.subr.mxu0 0.0
        %1753 = vmatpush1.msra.mxu0 0.0
        %1754 = vmatprep.mubr.f32.mxu0 %v1618
        %1755 = vmatmul.mubr.f32.gmra.mrb[0].mxu0 %v1614
        %v1756 = vpop.f32.mrb[0].mxu0
        %v1757 = vadd.f32 %v1687, %v1756
        %v1758 = vpop.f32.mrb[0].mxu0
        %1759 = vdwg.mxu0
        %v1760 = vadd.f32 %v1611, %v1757
        %1761 = vst [vmem:[#allocation2] sm:$0xff] %v1760
        %s1762 = sld [smem:[#allocation3]]
        %v1763 = vlog2.pop %v1415
        %v1764 = vmul.f32 %v1763, 0.6931472
        %v1765 = vlog2.pop %v1416
        %v1766 = vmul.f32 %v1765, 0.6931472
        %v1767 = vlog2.pop %v1417
        %v1768 = vmul.f32 %v1767, 0.6931472
        %v1769 = vlog2.pop %v1418
        %v1770 = vmul.f32 %v1769, 0.6931472
        %v1771 = vlog2.pop %v1419
        %v1772 = vmul.f32 %v1771, 0.6931472
        %v1773 = vlog2.pop %v1420
        %v1774 = vmul.f32 %v1773, 0.6931472
        %v1775 = vlog2.pop %v1421
        %v1776 = vmul.f32 %v1775, 0.6931472
        %v1777 = vlog2.pop %v1422
        %v1778 = vmul.f32 %v1777, 0.6931472
        %v1779 = vlog2.pop %v1423
        %v1780 = vmul.f32 %v1779, 0.6931472
        %v1781 = vlog2.pop %v1424
        %v1782 = vmul.f32 %v1781, 0.6931472
        %v1783 = vlog2.pop %v1425
        %v1784 = vmul.f32 %v1783, 0.6931472
        %v1785 = vlog2.pop %v1426
        %v1786 = vmul.f32 %v1785, 0.6931472
        %v1787 = vlog2.pop %v1427
        %v1788 = vmul.f32 %v1787, 0.6931472
        %v1789 = vlog2.pop %v1428
        %v1790 = vmul.f32 %v1789, 0.6931472
        %v1791 = vlog2.pop %v1429
        %v1792 = vmul.f32 %v1791, 0.6931472
        %v1793 = vlog2.pop %v1430
        %v1794 = vmul.f32 %v1793, 0.6931472
        %v1795 = vlog2.pop %v1431
        %v1796 = vmul.f32 %v1795, 0.6931472
        %v1797 = vlog2.pop %v1432
        %v1798 = vmul.f32 %v1797, 0.6931472
        %v1799 = vlog2.pop %v1433
        %v1800 = vmul.f32 %v1799, 0.6931472
        %v1801 = vlog2.pop %v1434
        %v1802 = vmul.f32 %v1801, 0.6931472
        %v1803 = vlog2.pop %v1435
        %v1804 = vmul.f32 %v1803, 0.6931472
        %v1805 = vlog2.pop %v1436
        %v1806 = vmul.f32 %v1805, 0.6931472
        %v1807 = vlog2.pop %v1437
        %v1808 = vmul.f32 %v1807, 0.6931472
        %v1809 = vlog2.pop %v1438
        %v1810 = vmul.f32 %v1809, 0.6931472
        %v1811 = vlog2.pop %v1439
        %v1812 = vmul.f32 %v1811, 0.6931472
        %v1813 = vlog2.pop %v1440
        %v1814 = vmul.f32 %v1813, 0.6931472
        %v1815 = vlog2.pop %v1441
        %v1816 = vmul.f32 %v1815, 0.6931472
        %v1817 = vlog2.pop %v1442
        %v1818 = vmul.f32 %v1817, 0.6931472
        %v1819 = vlog2.pop %v1443
        %v1820 = vmul.f32 %v1819, 0.6931472
        %v1821 = vlog2.pop %v1444
        %v1822 = vmul.f32 %v1821, 0.6931472
        %v1823 = vlog2.pop %v1445
        %v1824 = vmul.f32 %v1823, 0.6931472
        %v1825 = vlog2.pop %v1446
        %v1826 = vmul.f32 %v1825, 0.6931472
        %v1827 = vlog2.pop %v1447
        %v1828 = vmul.f32 %v1827, 0.6931472
        %v1829 = vlog2.pop %v1448
        %v1830 = vmul.f32 %v1829, 0.6931472
        %v1831 = vlog2.pop %v1449
        %v1832 = vmul.f32 %v1831, 0.6931472
        %v1833 = vlog2.pop %v1450
        %v1834 = vmul.f32 %v1833, 0.6931472
        %v1835 = vlog2.pop %v1451
        %v1836 = vmul.f32 %v1835, 0.6931472
        %v1837 = vlog2.pop %v1452
        %v1838 = vmul.f32 %v1837, 0.6931472
        %v1839 = vlog2.pop %v1453
        %v1840 = vmul.f32 %v1839, 0.6931472
        %v1841 = vlog2.pop %v1454
        %v1842 = vmul.f32 %v1841, 0.6931472
        %v1843 = vlog2.pop %v1455
        %v1844 = vmul.f32 %v1843, 0.6931472
        %v1845 = vlog2.pop %v1456
        %v1846 = vmul.f32 %v1845, 0.6931472
        %v1847 = vlog2.pop %v1457
        %v1848 = vmul.f32 %v1847, 0.6931472
        %v1849 = vlog2.pop %v1458
        %v1850 = vmul.f32 %v1849, 0.6931472
        %v1851 = vlog2.pop %v1459
        %v1852 = vmul.f32 %v1851, 0.6931472
        %v1853 = vlog2.pop %v1460
        %v1854 = vmul.f32 %v1853, 0.6931472
        %v1855 = vlog2.pop %v1461
        %v1856 = vmul.f32 %v1855, 0.6931472
        %v1857 = vlog2.pop %v1462
        %v1858 = vmul.f32 %v1857, 0.6931472
        %v1859 = vlog2.pop %v1463
        %v1860 = vmul.f32 %v1859, 0.6931472
        %v1861 = vsub.f32 0.0, %v1764
        %v1862 = vsub.f32 0.0, %v1766
        %v1863 = vsub.f32 0.0, %v1768
        %v1864 = vsub.f32 0.0, %v1770
        %v1865 = vsub.f32 0.0, %v1772
        %v1866 = vsub.f32 0.0, %v1774
        %v1867 = vsub.f32 0.0, %v1776
        %v1868 = vsub.f32 0.0, %v1778
        %v1869 = vsub.f32 0.0, %v1780
        %v1870 = vsub.f32 0.0, %v1782
        %v1871 = vsub.f32 0.0, %v1784
        %v1872 = vsub.f32 0.0, %v1786
        %v1873 = vsub.f32 0.0, %v1788
        %v1874 = vsub.f32 0.0, %v1790
        %v1875 = vsub.f32 0.0, %v1792
        %v1876 = vsub.f32 0.0, %v1794
        %v1877 = vsub.f32 0.0, %v1796
        %v1878 = vsub.f32 0.0, %v1798
        %v1879 = vsub.f32 0.0, %v1800
        %v1880 = vsub.f32 0.0, %v1802
        %v1881 = vsub.f32 0.0, %v1804
        %v1882 = vsub.f32 0.0, %v1806
        %v1883 = vsub.f32 0.0, %v1808
        %v1884 = vsub.f32 0.0, %v1810
        %v1885 = vsub.f32 0.0, %v1812
        %v1886 = vsub.f32 0.0, %v1814
        %v1887 = vsub.f32 0.0, %v1816
        %v1888 = vsub.f32 0.0, %v1818
        %v1889 = vsub.f32 0.0, %v1820
        %v1890 = vsub.f32 0.0, %v1822
        %v1891 = vsub.f32 0.0, %v1824
        %v1892 = vsub.f32 0.0, %v1826
        %v1893 = vsub.f32 0.0, %v1828
        %v1894 = vsub.f32 0.0, %v1830
        %v1895 = vsub.f32 0.0, %v1832
        %v1896 = vsub.f32 0.0, %v1834
        %v1897 = vsub.f32 0.0, %v1836
        %v1898 = vsub.f32 0.0, %v1838
        %v1899 = vsub.f32 0.0, %v1840
        %v1900 = vsub.f32 0.0, %v1842
        %v1901 = vsub.f32 0.0, %v1844
        %v1902 = vsub.f32 0.0, %v1846
        %v1903 = vsub.f32 0.0, %v1848
        %v1904 = vsub.f32 0.0, %v1850
        %v1905 = vsub.f32 0.0, %v1852
        %v1906 = vsub.f32 0.0, %v1854
        %v1907 = vsub.f32 0.0, %v1856
        %v1908 = vsub.f32 0.0, %v1858
        %v1909 = vsub.f32 0.0, %v1860
        %v1910 = vmul.f32 %v1415, %v1415
        %v1911 = vmul.f32 %v1416, %v1416
        %v1912 = vmul.f32 %v1417, %v1417
        %v1913 = vmul.f32 %v1418, %v1418
        %v1914 = vmul.f32 %v1419, %v1419
        %v1915 = vmul.f32 %v1420, %v1420
        %v1916 = vmul.f32 %v1421, %v1421
        %v1917 = vmul.f32 %v1422, %v1422
        %v1918 = vmul.f32 %v1423, %v1423
        %v1919 = vmul.f32 %v1424, %v1424
        %v1920 = vmul.f32 %v1425, %v1425
        %v1921 = vmul.f32 %v1426, %v1426
        %v1922 = vmul.f32 %v1427, %v1427
        %v1923 = vmul.f32 %v1428, %v1428
        %v1924 = vmul.f32 %v1429, %v1429
        %v1925 = vmul.f32 %v1430, %v1430
        %v1926 = vmul.f32 %v1431, %v1431
        %v1927 = vmul.f32 %v1432, %v1432
        %v1928 = vmul.f32 %v1433, %v1433
        %v1929 = vmul.f32 %v1434, %v1434
        %v1930 = vmul.f32 %v1435, %v1435
        %v1931 = vmul.f32 %v1436, %v1436
        %v1932 = vmul.f32 %v1437, %v1437
        %v1933 = vmul.f32 %v1438, %v1438
        %v1934 = vmul.f32 %v1439, %v1439
        %v1935 = vmul.f32 %v1440, %v1440
        %v1936 = vmul.f32 %v1441, %v1441
        %v1937 = vmul.f32 %v1442, %v1442
        %v1938 = vmul.f32 %v1443, %v1443
        %v1939 = vmul.f32 %v1444, %v1444
        %v1940 = vmul.f32 %v1445, %v1445
        %v1941 = vmul.f32 %v1446, %v1446
        %v1942 = vmul.f32 %v1447, %v1447
        %v1943 = vmul.f32 %v1448, %v1448
        %v1944 = vmul.f32 %v1449, %v1449
        %v1945 = vmul.f32 %v1450, %v1450
        %v1946 = vmul.f32 %v1451, %v1451
        %v1947 = vmul.f32 %v1452, %v1452
        %v1948 = vmul.f32 %v1453, %v1453
        %v1949 = vmul.f32 %v1454, %v1454
        %v1950 = vmul.f32 %v1455, %v1455
        %v1951 = vmul.f32 %v1456, %v1456
        %v1952 = vmul.f32 %v1457, %v1457
        %v1953 = vmul.f32 %v1458, %v1458
        %v1954 = vmul.f32 %v1459, %v1459
        %v1955 = vmul.f32 %v1460, %v1460
        %v1956 = vmul.f32 %v1461, %v1461
        %v1957 = vmul.f32 %v1462, %v1462
        %v1958 = vmul.f32 %v1463, %v1463
        %v1959 = vmul.f32 %v631, %v631
        %v1960 = vmul.f32 %v632, %v632
        %v1961 = vmul.f32 %v633, %v633
        %v1962 = vmul.f32 %v634, %v634
        %v1963 = vmul.f32 %v635, %v635
        %v1964 = vmul.f32 %v636, %v636
        %v1965 = vmul.f32 %v637, %v637
        %v1966 = vmul.f32 %v638, %v638
        %v1967 = vmul.f32 %v639, %v639
        %v1968 = vmul.f32 %v640, %v640
        %v1969 = vmul.f32 %v641, %v641
        %v1970 = vmul.f32 %v642, %v642
        %v1971 = vmul.f32 %v643, %v643
        %v1972 = vmul.f32 %v644, %v644
        %v1973 = vmul.f32 %v645, %v645
        %v1974 = vmul.f32 %v646, %v646
        %v1975 = vmul.f32 %v647, %v647
        %v1976 = vmul.f32 %v648, %v648
        %v1977 = vmul.f32 %v649, %v649
        %v1978 = vmul.f32 %v650, %v650
        %v1979 = vmul.f32 %v651, %v651
        %v1980 = vmul.f32 %v652, %v652
        %v1981 = vmul.f32 %v653, %v653
        %v1982 = vmul.f32 %v654, %v654
        %v1983 = vmul.f32 %v655, %v655
        %v1984 = vmul.f32 %v656, %v656
        %v1985 = vmul.f32 %v657, %v657
        %v1986 = vmul.f32 %v658, %v658
        %v1987 = vmul.f32 %v659, %v659
        %v1988 = vmul.f32 %v660, %v660
        %v1989 = vmul.f32 %v661, %v661
        %v1990 = vmul.f32 %v662, %v662
        %v1991 = vmul.f32 %v663, %v663
        %v1992 = vmul.f32 %v664, %v664
        %v1993 = vmul.f32 %v665, %v665
        %v1994 = vmul.f32 %v666, %v666
        %v1995 = vmul.f32 %v667, %v667
        %v1996 = vmul.f32 %v668, %v668
        %v1997 = vmul.f32 %v669, %v669
        %v1998 = vmul.f32 %v670, %v670
        %v1999 = vmul.f32 %v671, %v671
        %v2000 = vmul.f32 %v672, %v672
        %v2001 = vmul.f32 %v673, %v673
        %v2002 = vmul.f32 %v674, %v674
        %v2003 = vmul.f32 %v675, %v675
        %v2004 = vmul.f32 %v676, %v676
        %v2005 = vmul.f32 %v677, %v677
        %v2006 = vmul.f32 %v678, %v678
        %v2007 = vmul.f32 %v679, %v679
        %v2008 = vadd.f32 %v1910, %v1959
        %v2009 = vadd.f32 %v1911, %v1960
        %v2010 = vadd.f32 %v1912, %v1961
        %v2011 = vadd.f32 %v1913, %v1962
        %v2012 = vadd.f32 %v1914, %v1963
        %v2013 = vadd.f32 %v1915, %v1964
        %v2014 = vadd.f32 %v1916, %v1965
        %v2015 = vadd.f32 %v1917, %v1966
        %v2016 = vadd.f32 %v1918, %v1967
        %v2017 = vadd.f32 %v1919, %v1968
        %v2018 = vadd.f32 %v1920, %v1969
        %v2019 = vadd.f32 %v1921, %v1970
        %v2020 = vadd.f32 %v1922, %v1971
        %v2021 = vadd.f32 %v1923, %v1972
        %v2022 = vadd.f32 %v1924, %v1973
        %v2023 = vadd.f32 %v1925, %v1974
        %v2024 = vadd.f32 %v1926, %v1975
        %v2025 = vadd.f32 %v1927, %v1976
        %v2026 = vadd.f32 %v1928, %v1977
        %v2027 = vadd.f32 %v1929, %v1978
        %v2028 = vadd.f32 %v1930, %v1979
        %v2029 = vadd.f32 %v1931, %v1980
        %v2030 = vadd.f32 %v1932, %v1981
        %v2031 = vadd.f32 %v1933, %v1982
        %v2032 = vadd.f32 %v1934, %v1983
        %v2033 = vadd.f32 %v1935, %v1984
        %v2034 = vadd.f32 %v1936, %v1985
        %v2035 = vadd.f32 %v1937, %v1986
        %v2036 = vadd.f32 %v1938, %v1987
        %v2037 = vadd.f32 %v1939, %v1988
        %v2038 = vadd.f32 %v1940, %v1989
        %v2039 = vadd.f32 %v1941, %v1990
        %v2040 = vadd.f32 %v1942, %v1991
        %v2041 = vadd.f32 %v1943, %v1992
        %v2042 = vadd.f32 %v1944, %v1993
        %v2043 = vadd.f32 %v1945, %v1994
        %v2044 = vadd.f32 %v1946, %v1995
        %v2045 = vadd.f32 %v1947, %v1996
        %v2046 = vadd.f32 %v1948, %v1997
        %v2047 = vadd.f32 %v1949, %v1998
        %v2048 = vadd.f32 %v1950, %v1999
        %v2049 = vadd.f32 %v1951, %v2000
        %v2050 = vadd.f32 %v1952, %v2001
        %v2051 = vadd.f32 %v1953, %v2002
        %v2052 = vadd.f32 %v1954, %v2003
        %v2053 = vadd.f32 %v1955, %v2004
        %v2054 = vadd.f32 %v1956, %v2005
        %v2055 = vadd.f32 %v1957, %v2006
        %v2056 = vadd.f32 %v1958, %v2007
        %v2057 = vmul.f32 %v2008, 0.5
        %v2058 = vmul.f32 %v2009, 0.5
        %v2059 = vmul.f32 %v2010, 0.5
        %v2060 = vmul.f32 %v2011, 0.5
        %v2061 = vmul.f32 %v2012, 0.5
        %v2062 = vmul.f32 %v2013, 0.5
        %v2063 = vmul.f32 %v2014, 0.5
        %v2064 = vmul.f32 %v2015, 0.5
        %v2065 = vmul.f32 %v2016, 0.5
        %v2066 = vmul.f32 %v2017, 0.5
        %v2067 = vmul.f32 %v2018, 0.5
        %v2068 = vmul.f32 %v2019, 0.5
        %v2069 = vmul.f32 %v2020, 0.5
        %v2070 = vmul.f32 %v2021, 0.5
        %v2071 = vmul.f32 %v2022, 0.5
        %v2072 = vmul.f32 %v2023, 0.5
        %v2073 = vmul.f32 %v2024, 0.5
        %v2074 = vmul.f32 %v2025, 0.5
        %v2075 = vmul.f32 %v2026, 0.5
        %v2076 = vmul.f32 %v2027, 0.5
        %v2077 = vmul.f32 %v2028, 0.5
        %v2078 = vmul.f32 %v2029, 0.5
        %v2079 = vmul.f32 %v2030, 0.5
        %v2080 = vmul.f32 %v2031, 0.5
        %v2081 = vmul.f32 %v2032, 0.5
        %v2082 = vmul.f32 %v2033, 0.5
        %v2083 = vmul.f32 %v2034, 0.5
        %v2084 = vmul.f32 %v2035, 0.5
        %v2085 = vmul.f32 %v2036, 0.5
        %v2086 = vmul.f32 %v2037, 0.5
        %v2087 = vmul.f32 %v2038, 0.5
        %v2088 = vmul.f32 %v2039, 0.5
        %v2089 = vmul.f32 %v2040, 0.5
        %v2090 = vmul.f32 %v2041, 0.5
        %v2091 = vmul.f32 %v2042, 0.5
        %v2092 = vmul.f32 %v2043, 0.5
        %v2093 = vmul.f32 %v2044, 0.5
        %v2094 = vmul.f32 %v2045, 0.5
        %v2095 = vmul.f32 %v2046, 0.5
        %v2096 = vmul.f32 %v2047, 0.5
        %v2097 = vmul.f32 %v2048, 0.5
        %v2098 = vmul.f32 %v2049, 0.5
        %v2099 = vmul.f32 %v2050, 0.5
        %v2100 = vmul.f32 %v2051, 0.5
        %v2101 = vmul.f32 %v2052, 0.5
        %v2102 = vmul.f32 %v2053, 0.5
        %v2103 = vmul.f32 %v2054, 0.5
        %v2104 = vmul.f32 %v2055, 0.5
        %v2105 = vmul.f32 %v2056, 0.5
        %v2106 = vadd.f32 %v1861, %v2057
        %v2107 = vadd.f32 %v1862, %v2058
        %v2108 = vadd.f32 %v1863, %v2059
        %v2109 = vadd.f32 %v1864, %v2060
        %v2110 = vadd.f32 %v1865, %v2061
        %v2111 = vadd.f32 %v1866, %v2062
        %v2112 = vadd.f32 %v1867, %v2063
        %v2113 = vadd.f32 %v1868, %v2064
        %v2114 = vadd.f32 %v1869, %v2065
        %v2115 = vadd.f32 %v1870, %v2066
        %v2116 = vadd.f32 %v1871, %v2067
        %v2117 = vadd.f32 %v1872, %v2068
        %v2118 = vadd.f32 %v1873, %v2069
        %v2119 = vadd.f32 %v1874, %v2070
        %v2120 = vadd.f32 %v1875, %v2071
        %v2121 = vadd.f32 %v1876, %v2072
        %v2122 = vadd.f32 %v1877, %v2073
        %v2123 = vadd.f32 %v1878, %v2074
        %v2124 = vadd.f32 %v1879, %v2075
        %v2125 = vadd.f32 %v1880, %v2076
        %v2126 = vadd.f32 %v1881, %v2077
        %v2127 = vadd.f32 %v1882, %v2078
        %v2128 = vadd.f32 %v1883, %v2079
        %v2129 = vadd.f32 %v1884, %v2080
        %v2130 = vadd.f32 %v1885, %v2081
        %v2131 = vadd.f32 %v1886, %v2082
        %v2132 = vadd.f32 %v1887, %v2083
        %v2133 = vadd.f32 %v1888, %v2084
        %v2134 = vadd.f32 %v1889, %v2085
        %v2135 = vadd.f32 %v1890, %v2086
        %v2136 = vadd.f32 %v1891, %v2087
        %v2137 = vadd.f32 %v1892, %v2088
        %v2138 = vadd.f32 %v1893, %v2089
        %v2139 = vadd.f32 %v1894, %v2090
        %v2140 = vadd.f32 %v1895, %v2091
        %v2141 = vadd.f32 %v1896, %v2092
        %v2142 = vadd.f32 %v1897, %v2093
        %v2143 = vadd.f32 %v1898, %v2094
        %v2144 = vadd.f32 %v1899, %v2095
        %v2145 = vadd.f32 %v1900, %v2096
        %v2146 = vadd.f32 %v1901, %v2097
        %v2147 = vadd.f32 %v1902, %v2098
        %v2148 = vadd.f32 %v1903, %v2099
        %v2149 = vadd.f32 %v1904, %v2100
        %v2150 = vadd.f32 %v1905, %v2101
        %v2151 = vadd.f32 %v1906, %v2102
        %v2152 = vadd.f32 %v1907, %v2103
        %v2153 = vadd.f32 %v1908, %v2104
        %v2154 = vadd.f32 %v1909, %v2105
        %v2155 = vsub.f32 %v2106, 0.5
        %v2156 = vsub.f32 %v2107, 0.5
        %v2157 = vsub.f32 %v2108, 0.5
        %v2158 = vsub.f32 %v2109, 0.5
        %v2159 = vsub.f32 %v2110, 0.5
        %v2160 = vsub.f32 %v2111, 0.5
        %v2161 = vsub.f32 %v2112, 0.5
        %v2162 = vsub.f32 %v2113, 0.5
        %v2163 = vsub.f32 %v2114, 0.5
        %v2164 = vsub.f32 %v2115, 0.5
        %v2165 = vsub.f32 %v2116, 0.5
        %v2166 = vsub.f32 %v2117, 0.5
        %v2167 = vsub.f32 %v2118, 0.5
        %v2168 = vsub.f32 %v2119, 0.5
        %v2169 = vsub.f32 %v2120, 0.5
        %v2170 = vsub.f32 %v2121, 0.5
        %v2171 = vsub.f32 %v2122, 0.5
        %v2172 = vsub.f32 %v2123, 0.5
        %v2173 = vsub.f32 %v2124, 0.5
        %v2174 = vsub.f32 %v2125, 0.5
        %v2175 = vsub.f32 %v2126, 0.5
        %v2176 = vsub.f32 %v2127, 0.5
        %v2177 = vsub.f32 %v2128, 0.5
        %v2178 = vsub.f32 %v2129, 0.5
        %v2179 = vsub.f32 %v2130, 0.5
        %v2180 = vsub.f32 %v2131, 0.5
        %v2181 = vsub.f32 %v2132, 0.5
        %v2182 = vsub.f32 %v2133, 0.5
        %v2183 = vsub.f32 %v2134, 0.5
        %v2184 = vsub.f32 %v2135, 0.5
        %v2185 = vsub.f32 %v2136, 0.5
        %v2186 = vsub.f32 %v2137, 0.5
        %v2187 = vsub.f32 %v2138, 0.5
        %v2188 = vsub.f32 %v2139, 0.5
        %v2189 = vsub.f32 %v2140, 0.5
        %v2190 = vsub.f32 %v2141, 0.5
        %v2191 = vsub.f32 %v2142, 0.5
        %v2192 = vsub.f32 %v2143, 0.5
        %v2193 = vsub.f32 %v2144, 0.5
        %v2194 = vsub.f32 %v2145, 0.5
        %v2195 = vsub.f32 %v2146, 0.5
        %v2196 = vsub.f32 %v2147, 0.5
        %v2197 = vsub.f32 %v2148, 0.5
        %v2198 = vsub.f32 %v2149, 0.5
        %v2199 = vsub.f32 %v2150, 0.5
        %v2200 = vsub.f32 %v2151, 0.5
        %v2201 = vsub.f32 %v2152, 0.5
        %v2202 = vsub.f32 %v2153, 0.5
        %v2203 = vsub.f32 %v2154, 0.5
        %v2204 = vadd.f32 %v2155, %v2156
        %v2205 = vadd.f32 %v2204, %v2157
        %v2206 = vadd.f32 %v2205, %v2158
        %v2207 = vadd.f32 %v2206, %v2159
        %v2208 = vadd.f32 %v2207, %v2160
        %v2209 = vadd.f32 %v2208, %v2161
        %v2210 = vadd.f32 %v2209, %v2162
        %v2211 = vadd.f32 %v2210, %v2163
        %v2212 = vadd.f32 %v2211, %v2164
        %v2213 = vadd.f32 %v2212, %v2165
        %v2214 = vadd.f32 %v2213, %v2166
        %v2215 = vadd.f32 %v2214, %v2167
        %v2216 = vadd.f32 %v2215, %v2168
        %v2217 = vadd.f32 %v2216, %v2169
        %v2218 = vadd.f32 %v2217, %v2170
        %v2219 = vadd.f32 %v2218, %v2171
        %v2220 = vadd.f32 %v2219, %v2172
        %v2221 = vadd.f32 %v2220, %v2173
        %v2222 = vadd.f32 %v2221, %v2174
        %v2223 = vadd.f32 %v2222, %v2175
        %v2224 = vadd.f32 %v2223, %v2176
        %v2225 = vadd.f32 %v2224, %v2177
        %v2226 = vadd.f32 %v2225, %v2178
        %v2227 = vadd.f32 %v2226, %v2179
        %v2228 = vadd.f32 %v2227, %v2180
        %v2229 = vadd.f32 %v2228, %v2181
        %v2230 = vadd.f32 %v2229, %v2182
        %v2231 = vadd.f32 %v2230, %v2183
        %v2232 = vadd.f32 %v2231, %v2184
        %v2233 = vadd.f32 %v2232, %v2185
        %v2234 = vadd.f32 %v2233, %v2186
        %v2235 = vadd.f32 %v2234, %v2187
        %v2236 = vadd.f32 %v2235, %v2188
        %v2237 = vadd.f32 %v2236, %v2189
        %v2238 = vadd.f32 %v2237, %v2190
        %v2239 = vadd.f32 %v2238, %v2191
        %v2240 = vadd.f32 %v2239, %v2192
        %v2241 = vadd.f32 %v2240, %v2193
        %v2242 = vadd.f32 %v2241, %v2194
        %v2243 = vadd.f32 %v2242, %v2195
        %v2244 = vadd.f32 %v2243, %v2196
        %v2245 = vadd.f32 %v2244, %v2197
        %v2246 = vadd.f32 %v2245, %v2198
        %v2247 = vadd.f32 %v2246, %v2199
        %v2248 = vadd.f32 %v2247, %v2200
        %v2249 = vadd.f32 %v2248, %v2201
        %v2250 = vadd.f32 %v2249, %v2202
        %v2251 = vadd.f32 %v2250, %v2203
        %2252 = vadd.xlane.f32.xlu0 %v2251
        %v2253 = vpop.xlane.xlu0 %2252
        %v2254 = vrot.slane %v2253, 4
        %v2255 = vadd.f32 %v2253, %v2254
        %v2256 = vrot.slane %v2255, 2
        %v2257 = vadd.f32 %v2255, %v2256
        %v2258 = vrot.slane %v2257, 1
        %v2259 = vadd.f32 %v2257, %v2258
        %s2260 = vtos %v2259
        %s2261 = sadd.f32 %s1762, %s2260
        %s2262 = scalar_lea.smem [#allocation3], 0
        %2263 = sst [smem:[%s2262]] %s2261
        %p2264 = scmp.eq.s32.totalorder %s38, 1
        // Predicated region
        $region109: #{tpu_custom_call.1} parent=63 // pred_check
          %p2265 = pneg %p2264
        $region110: #{tpu_custom_call.1} parent=63 // pred_check_branch
          %2267 = sbr.rel (%p2265) target = $region112
        $region111: #{tpu_custom_call.1} parent=63 // pred_region
          %v2268 = vld [vmem:[%s10] sm:$0x1]
          %v2269 = vld [vmem:[%s10 + $0x1] sm:$0x1]
          %v2270 = vld [vmem:[%s10 + $0x2] sm:$0x1]
          %v2271 = vld [vmem:[%s10 + $0x3] sm:$0x1]
          %v2272 = vld [vmem:[%s10 + $0x4] sm:$0x1]
          %v2273 = vld [vmem:[%s10 + $0x5] sm:$0x1]
          %v2274 = vld [vmem:[%s10 + $0x6] sm:$0x1]
          %v2275 = vld [vmem:[%s10 + $0x7] sm:$0x1]
          %v2276 = vld [vmem:[%s10 + $0x8] sm:$0x1]
          %v2277 = vld [vmem:[%s10 + $0x9] sm:$0x1]
          %v2278 = vld [vmem:[%s10 + $0xa] sm:$0x1]
          %v2279 = vld [vmem:[%s10 + $0xb] sm:$0x1]
          %v2280 = vld [vmem:[%s10 + $0xc] sm:$0x1]
          %v2281 = vmax.f32 %v2269, 0.0
          %v2282 = vand.u32 2147483647, %v2269
          %v2283 = vsub.f32 0.0, %v2282
          %v2284 = vmul.f32 %v2283, 1.442695
          %v2285 = vpow.pop %v2284
          %v2286 = vadd.f32 %v2285, 1.0
          %v2287 = vlog2.pop %v2286
          %v2288 = vmul.f32 %v2287, 0.6931472
          %v2289 = vmul.f32 -0.5, %v2285
          %v2290 = vadd.f32 %v2289, 1.0
          %v2291 = vmul.f32 %v2290, %v2285
          %v2292 = vand.u32 2147483647, %v2285
          %vm2293 = vcmp.lt.f32.partialorder %v2292, 0.0004427343
          %v2294 = vsel %vm2293, %v2291, %v2288
          %v2295 = vadd.f32 %v2281, %v2294
          %v2296 = vmul.f32 %v2295, %v2270
          %v2297 = vadd.f32 %v2268, %v2296
          %v2298 = vlog2.pop %v2295
          %v2299 = vmul.f32 %v2298, 0.6931472
          %v2300 = vsub.f32 0.0, %v2299
          %v2301 = vmul.f32 %v2295, %v2295
          %v2302 = vmul.f32 %v2268, %v2268
          %v2303 = vadd.f32 %v2301, %v2302
          %v2304 = vmul.f32 %v2303, 0.5
          %v2305 = vadd.f32 %v2300, %v2304
          %v2306 = vsub.f32 %v2305, 0.5
          %vm2307 = vcmask 1040384
          %v2308 = vsel %vm2307, %v2306, 0.0
          %2309 = vadd.xlane.f32.xlu0 %v2308
          %v2310 = vpop.xlane.xlu0 %2309
          %v2311 = vrot.slane %v2310, 4
          %v2312 = vadd.f32 %v2310, %v2311
          %v2313 = vrot.slane %v2312, 2
          %v2314 = vadd.f32 %v2312, %v2313
          %v2315 = vrot.slane %v2314, 1
          %v2316 = vadd.f32 %v2314, %v2315
          %s2317 = vtos %v2316
          %v2318 = vld [vmem:[#allocation2] sm:$0xff]
          %v2319 = vlaneseq
          %v2320 = vshrl.u32 %v2319, 7
          %v2321 = vsub.s32 0, %v2320
          %v2322 = vrot.slane %v2297, %v2321
          %v2323 = vadd.f32 %v2318, %v2322
          %v2324 = vrot.slane %v2323, 4
          %v2325 = vadd.f32 %v2323, %v2324
          %v2326 = vrot.slane %v2325, 2
          %v2327 = vadd.f32 %v2325, %v2326
          %v2328 = vrot.slane %v2327, 1
          %v2329 = vadd.f32 %v2327, %v2328
          %v2330 = vrcp.pop 8.0
          %v2331 = vmul.f32 %v2329, %v2330
          %v2332 = vsub.f32 %v2323, %v2331
          %v2333 = vmul.f32 %v2332, %v2332
          %v2334 = vrot.slane %v2333, 4
          %v2335 = vadd.f32 %v2333, %v2334
          %v2336 = vrot.slane %v2335, 2
          %v2337 = vadd.f32 %v2335, %v2336
          %v2338 = vrot.slane %v2337, 1
          %v2339 = vadd.f32 %v2337, %v2338
          %v2340 = vmul.f32 %v2339, %v2330
          %v2341 = vadd.f32 %v2340, 1e-05
          %v2342 = vrsqrt.pop %v2341
          %v2343 = vmul.f32 %v2332, %v2342
          %v2344 = vlaneseq
          %v2345 = vshrl.u32 %v2344, 7
          %v2346 = vsub.s32 0, %v2345
          %v2347 = vrot.slane %v2271, %v2346
          %v2348 = vmul.f32 %v2343, %v2347
          %v2349 = vlaneseq
          %v2350 = vshrl.u32 %v2349, 7
          %v2351 = vsub.s32 0, %v2350
          %v2352 = vrot.slane %v2272, %v2351
          %v2353 = vadd.f32 %v2348, %v2352
          %v2354 = vmax.f32 %v2353, 0.0
          %v2355 = vld [vmem:[#allocation13] sm:$0xff]
          %v2356 = vld [vmem:[#allocation13 + $0x8] sm:$0xff]
          %v2357 = vld [vmem:[#allocation13 + $0x10] sm:$0xff]
          %v2358 = vld [vmem:[#allocation13 + $0x18] sm:$0xff]
          %v2359 = vld [vmem:[#allocation13 + $0x20] sm:$0xff]
          %v2360 = vld [vmem:[#allocation13 + $0x28] sm:$0xff]
          %v2361 = vld [vmem:[#allocation13 + $0x30] sm:$0xff]
          %v2362 = vld [vmem:[#allocation13 + $0x38] sm:$0xff]
          %v2363 = vld [vmem:[#allocation13 + $0x40] sm:$0xff]
          %v2364 = vld [vmem:[#allocation13 + $0x48] sm:$0xff]
          %v2365 = vld [vmem:[#allocation13 + $0x50] sm:$0xff]
          %v2366 = vld [vmem:[#allocation13 + $0x58] sm:$0xff]
          %v2367 = vld [vmem:[#allocation13 + $0x60] sm:$0xff]
          %v2368 = vld [vmem:[#allocation13 + $0x68] sm:$0xff]
          %v2369 = vld [vmem:[#allocation13 + $0x70] sm:$0xff]
          %v2370 = vld [vmem:[#allocation13 + $0x78] sm:$0xff]
          %v2371 = vld [vmem:[#allocation14] sm:$0xff]
          %v2372 = vld [vmem:[#allocation14 + $0x8] sm:$0xff]
          %v2373 = vld [vmem:[#allocation14 + $0x10] sm:$0xff]
          %v2374 = vld [vmem:[#allocation14 + $0x18] sm:$0xff]
          %v2375 = vld [vmem:[#allocation14 + $0x20] sm:$0xff]
          %v2376 = vld [vmem:[#allocation14 + $0x28] sm:$0xff]
          %v2377 = vld [vmem:[#allocation14 + $0x30] sm:$0xff]
          %v2378 = vld [vmem:[#allocation14 + $0x38] sm:$0xff]
          %v2379 = vld [vmem:[#allocation14 + $0x40] sm:$0xff]
          %v2380 = vld [vmem:[#allocation14 + $0x48] sm:$0xff]
          %v2381 = vld [vmem:[#allocation14 + $0x50] sm:$0xff]
          %v2382 = vld [vmem:[#allocation14 + $0x58] sm:$0xff]
          %v2383 = vld [vmem:[#allocation14 + $0x60] sm:$0xff]
          %v2384 = vld [vmem:[#allocation14 + $0x68] sm:$0xff]
          %v2385 = vld [vmem:[#allocation14 + $0x70] sm:$0xff]
          %v2386 = vld [vmem:[#allocation14 + $0x78] sm:$0xff]
          %v2387 = vld [vmem:[#allocation16] sm:$0xff]
          %v2388 = vld [vmem:[#allocation16 + $0x8] sm:$0xff]
          %v2389 = vld [vmem:[#allocation16 + $0x10] sm:$0xff]
          %v2390 = vld [vmem:[#allocation16 + $0x18] sm:$0xff]
          %v2391 = vld [vmem:[#allocation16 + $0x20] sm:$0xff]
          %v2392 = vld [vmem:[#allocation16 + $0x28] sm:$0xff]
          %v2393 = vld [vmem:[#allocation16 + $0x30] sm:$0xff]
          %v2394 = vld [vmem:[#allocation16 + $0x38] sm:$0xff]
          %v2395 = vld [vmem:[#allocation16 + $0x40] sm:$0xff]
          %v2396 = vld [vmem:[#allocation16 + $0x48] sm:$0xff]
          %v2397 = vld [vmem:[#allocation16 + $0x50] sm:$0xff]
          %v2398 = vld [vmem:[#allocation16 + $0x58] sm:$0xff]
          %v2399 = vld [vmem:[#allocation16 + $0x60] sm:$0xff]
          %v2400 = vld [vmem:[#allocation16 + $0x68] sm:$0xff]
          %v2401 = vld [vmem:[#allocation16 + $0x70] sm:$0xff]
          %v2402 = vld [vmem:[#allocation16 + $0x78] sm:$0xff]
          %v2403 = vmax.f32 %v2371, 0.0
          %v2404 = vmax.f32 %v2372, 0.0
          %v2405 = vmax.f32 %v2373, 0.0
          %v2406 = vmax.f32 %v2374, 0.0
          %v2407 = vmax.f32 %v2375, 0.0
          %v2408 = vmax.f32 %v2376, 0.0
          %v2409 = vmax.f32 %v2377, 0.0
          %v2410 = vmax.f32 %v2378, 0.0
          %v2411 = vmax.f32 %v2379, 0.0
          %v2412 = vmax.f32 %v2380, 0.0
          %v2413 = vmax.f32 %v2381, 0.0
          %v2414 = vmax.f32 %v2382, 0.0
          %v2415 = vmax.f32 %v2383, 0.0
          %v2416 = vmax.f32 %v2384, 0.0
          %v2417 = vmax.f32 %v2385, 0.0
          %v2418 = vmax.f32 %v2386, 0.0
          %v2419 = vand.u32 2147483647, %v2371
          %v2420 = vand.u32 2147483647, %v2372
          %v2421 = vand.u32 2147483647, %v2373
          %v2422 = vand.u32 2147483647, %v2374
          %v2423 = vand.u32 2147483647, %v2375
          %v2424 = vand.u32 2147483647, %v2376
          %v2425 = vand.u32 2147483647, %v2377
          %v2426 = vand.u32 2147483647, %v2378
          %v2427 = vand.u32 2147483647, %v2379
          %v2428 = vand.u32 2147483647, %v2380
          %v2429 = vand.u32 2147483647, %v2381
          %v2430 = vand.u32 2147483647, %v2382
          %v2431 = vand.u32 2147483647, %v2383
          %v2432 = vand.u32 2147483647, %v2384
          %v2433 = vand.u32 2147483647, %v2385
          %v2434 = vand.u32 2147483647, %v2386
          %v2435 = vsub.f32 0.0, %v2419
          %v2436 = vsub.f32 0.0, %v2420
          %v2437 = vsub.f32 0.0, %v2421
          %v2438 = vsub.f32 0.0, %v2422
          %v2439 = vsub.f32 0.0, %v2423
          %v2440 = vsub.f32 0.0, %v2424
          %v2441 = vsub.f32 0.0, %v2425
          %v2442 = vsub.f32 0.0, %v2426
          %v2443 = vsub.f32 0.0, %v2427
          %v2444 = vsub.f32 0.0, %v2428
          %v2445 = vsub.f32 0.0, %v2429
          %v2446 = vsub.f32 0.0, %v2430
          %v2447 = vsub.f32 0.0, %v2431
          %v2448 = vsub.f32 0.0, %v2432
          %v2449 = vsub.f32 0.0, %v2433
          %v2450 = vsub.f32 0.0, %v2434
          %v2451 = vmul.f32 %v2435, 1.442695
          %v2452 = vpow.pop %v2451
          %v2453 = vmul.f32 %v2436, 1.442695
          %v2454 = vpow.pop %v2453
          %v2455 = vmul.f32 %v2437, 1.442695
          %v2456 = vpow.pop %v2455
          %v2457 = vmul.f32 %v2438, 1.442695
          %v2458 = vpow.pop %v2457
          %v2459 = vmul.f32 %v2439, 1.442695
          %v2460 = vpow.pop %v2459
          %v2461 = vmul.f32 %v2440, 1.442695
          %v2462 = vpow.pop %v2461
          %v2463 = vmul.f32 %v2441, 1.442695
          %v2464 = vpow.pop %v2463
          %v2465 = vmul.f32 %v2442, 1.442695
          %v2466 = vpow.pop %v2465
          %v2467 = vmul.f32 %v2443, 1.442695
          %v2468 = vpow.pop %v2467
          %v2469 = vmul.f32 %v2444, 1.442695
          %v2470 = vpow.pop %v2469
          %v2471 = vmul.f32 %v2445, 1.442695
          %v2472 = vpow.pop %v2471
          %v2473 = vmul.f32 %v2446, 1.442695
          %v2474 = vpow.pop %v2473
          %v2475 = vmul.f32 %v2447, 1.442695
          %v2476 = vpow.pop %v2475
          %v2477 = vmul.f32 %v2448, 1.442695
          %v2478 = vpow.pop %v2477
          %v2479 = vmul.f32 %v2449, 1.442695
          %v2480 = vpow.pop %v2479
          %v2481 = vmul.f32 %v2450, 1.442695
          %v2482 = vpow.pop %v2481
          %v2483 = vadd.f32 %v2452, 1.0
          %v2484 = vlog2.pop %v2483
          %v2485 = vmul.f32 %v2484, 0.6931472
          %v2486 = vmul.f32 -0.5, %v2452
          %v2487 = vadd.f32 %v2486, 1.0
          %v2488 = vmul.f32 %v2487, %v2452
          %v2489 = vand.u32 2147483647, %v2452
          %vm2490 = vcmp.lt.f32.partialorder %v2489, 0.0004427343
          %v2491 = vsel %vm2490, %v2488, %v2485
          %v2492 = vadd.f32 %v2454, 1.0
          %v2493 = vlog2.pop %v2492
          %v2494 = vmul.f32 %v2493, 0.6931472
          %v2495 = vmul.f32 -0.5, %v2454
          %v2496 = vadd.f32 %v2495, 1.0
          %v2497 = vmul.f32 %v2496, %v2454
          %v2498 = vand.u32 2147483647, %v2454
          %vm2499 = vcmp.lt.f32.partialorder %v2498, 0.0004427343
          %v2500 = vsel %vm2499, %v2497, %v2494
          %v2501 = vadd.f32 %v2456, 1.0
          %v2502 = vlog2.pop %v2501
          %v2503 = vmul.f32 %v2502, 0.6931472
          %v2504 = vmul.f32 -0.5, %v2456
          %v2505 = vadd.f32 %v2504, 1.0
          %v2506 = vmul.f32 %v2505, %v2456
          %v2507 = vand.u32 2147483647, %v2456
          %vm2508 = vcmp.lt.f32.partialorder %v2507, 0.0004427343
          %v2509 = vsel %vm2508, %v2506, %v2503
          %v2510 = vadd.f32 %v2458, 1.0
          %v2511 = vlog2.pop %v2510
          %v2512 = vmul.f32 %v2511, 0.6931472
          %v2513 = vmul.f32 -0.5, %v2458
          %v2514 = vadd.f32 %v2513, 1.0
          %v2515 = vmul.f32 %v2514, %v2458
          %v2516 = vand.u32 2147483647, %v2458
          %vm2517 = vcmp.lt.f32.partialorder %v2516, 0.0004427343
          %v2518 = vsel %vm2517, %v2515, %v2512
          %v2519 = vadd.f32 %v2460, 1.0
          %v2520 = vlog2.pop %v2519
          %v2521 = vmul.f32 %v2520, 0.6931472
          %v2522 = vmul.f32 -0.5, %v2460
          %v2523 = vadd.f32 %v2522, 1.0
          %v2524 = vmul.f32 %v2523, %v2460
          %v2525 = vand.u32 2147483647, %v2460
          %vm2526 = vcmp.lt.f32.partialorder %v2525, 0.0004427343
          %v2527 = vsel %vm2526, %v2524, %v2521
          %v2528 = vadd.f32 %v2462, 1.0
          %v2529 = vlog2.pop %v2528
          %v2530 = vmul.f32 %v2529, 0.6931472
          %v2531 = vmul.f32 -0.5, %v2462
          %v2532 = vadd.f32 %v2531, 1.0
          %v2533 = vmul.f32 %v2532, %v2462
          %v2534 = vand.u32 2147483647, %v2462
          %vm2535 = vcmp.lt.f32.partialorder %v2534, 0.0004427343
          %v2536 = vsel %vm2535, %v2533, %v2530
          %v2537 = vadd.f32 %v2464, 1.0
          %v2538 = vlog2.pop %v2537
          %v2539 = vmul.f32 %v2538, 0.6931472
          %v2540 = vmul.f32 -0.5, %v2464
          %v2541 = vadd.f32 %v2540, 1.0
          %v2542 = vmul.f32 %v2541, %v2464
          %v2543 = vand.u32 2147483647, %v2464
          %vm2544 = vcmp.lt.f32.partialorder %v2543, 0.0004427343
          %v2545 = vsel %vm2544, %v2542, %v2539
          %v2546 = vadd.f32 %v2466, 1.0
          %v2547 = vlog2.pop %v2546
          %v2548 = vmul.f32 %v2547, 0.6931472
          %v2549 = vmul.f32 -0.5, %v2466
          %v2550 = vadd.f32 %v2549, 1.0
          %v2551 = vmul.f32 %v2550, %v2466
          %v2552 = vand.u32 2147483647, %v2466
          %vm2553 = vcmp.lt.f32.partialorder %v2552, 0.0004427343
          %v2554 = vsel %vm2553, %v2551, %v2548
          %v2555 = vadd.f32 %v2468, 1.0
          %v2556 = vlog2.pop %v2555
          %v2557 = vmul.f32 %v2556, 0.6931472
          %v2558 = vmul.f32 -0.5, %v2468
          %v2559 = vadd.f32 %v2558, 1.0
          %v2560 = vmul.f32 %v2559, %v2468
          %v2561 = vand.u32 2147483647, %v2468
          %vm2562 = vcmp.lt.f32.partialorder %v2561, 0.0004427343
          %v2563 = vsel %vm2562, %v2560, %v2557
          %v2564 = vadd.f32 %v2470, 1.0
          %v2565 = vlog2.pop %v2564
          %v2566 = vmul.f32 %v2565, 0.6931472
          %v2567 = vmul.f32 -0.5, %v2470
          %v2568 = vadd.f32 %v2567, 1.0
          %v2569 = vmul.f32 %v2568, %v2470
          %v2570 = vand.u32 2147483647, %v2470
          %vm2571 = vcmp.lt.f32.partialorder %v2570, 0.0004427343
          %v2572 = vsel %vm2571, %v2569, %v2566
          %v2573 = vadd.f32 %v2472, 1.0
          %v2574 = vlog2.pop %v2573
          %v2575 = vmul.f32 %v2574, 0.6931472
          %v2576 = vmul.f32 -0.5, %v2472
          %v2577 = vadd.f32 %v2576, 1.0
          %v2578 = vmul.f32 %v2577, %v2472
          %v2579 = vand.u32 2147483647, %v2472
          %vm2580 = vcmp.lt.f32.partialorder %v2579, 0.0004427343
          %v2581 = vsel %vm2580, %v2578, %v2575
          %v2582 = vadd.f32 %v2474, 1.0
          %v2583 = vlog2.pop %v2582
          %v2584 = vmul.f32 %v2583, 0.6931472
          %v2585 = vmul.f32 -0.5, %v2474
          %v2586 = vadd.f32 %v2585, 1.0
          %v2587 = vmul.f32 %v2586, %v2474
          %v2588 = vand.u32 2147483647, %v2474
          %vm2589 = vcmp.lt.f32.partialorder %v2588, 0.0004427343
          %v2590 = vsel %vm2589, %v2587, %v2584
          %v2591 = vadd.f32 %v2476, 1.0
          %v2592 = vlog2.pop %v2591
          %v2593 = vmul.f32 %v2592, 0.6931472
          %v2594 = vmul.f32 -0.5, %v2476
          %v2595 = vadd.f32 %v2594, 1.0
          %v2596 = vmul.f32 %v2595, %v2476
          %v2597 = vand.u32 2147483647, %v2476
          %vm2598 = vcmp.lt.f32.partialorder %v2597, 0.0004427343
          %v2599 = vsel %vm2598, %v2596, %v2593
          %v2600 = vadd.f32 %v2478, 1.0
          %v2601 = vlog2.pop %v2600
          %v2602 = vmul.f32 %v2601, 0.6931472
          %v2603 = vmul.f32 -0.5, %v2478
          %v2604 = vadd.f32 %v2603, 1.0
          %v2605 = vmul.f32 %v2604, %v2478
          %v2606 = vand.u32 2147483647, %v2478
          %vm2607 = vcmp.lt.f32.partialorder %v2606, 0.0004427343
          %v2608 = vsel %vm2607, %v2605, %v2602
          %v2609 = vadd.f32 %v2480, 1.0
          %v2610 = vlog2.pop %v2609
          %v2611 = vmul.f32 %v2610, 0.6931472
          %v2612 = vmul.f32 -0.5, %v2480
          %v2613 = vadd.f32 %v2612, 1.0
          %v2614 = vmul.f32 %v2613, %v2480
          %v2615 = vand.u32 2147483647, %v2480
          %vm2616 = vcmp.lt.f32.partialorder %v2615, 0.0004427343
          %v2617 = vsel %vm2616, %v2614, %v2611
          %v2618 = vadd.f32 %v2482, 1.0
          %v2619 = vlog2.pop %v2618
          %v2620 = vmul.f32 %v2619, 0.6931472
          %v2621 = vmul.f32 -0.5, %v2482
          %v2622 = vadd.f32 %v2621, 1.0
          %v2623 = vmul.f32 %v2622, %v2482
          %v2624 = vand.u32 2147483647, %v2482
          %vm2625 = vcmp.lt.f32.partialorder %v2624, 0.0004427343
          %v2626 = vsel %vm2625, %v2623, %v2620
          %v2627 = vadd.f32 %v2403, %v2491
          %v2628 = vadd.f32 %v2404, %v2500
          %v2629 = vadd.f32 %v2405, %v2509
          %v2630 = vadd.f32 %v2406, %v2518
          %v2631 = vadd.f32 %v2407, %v2527
          %v2632 = vadd.f32 %v2408, %v2536
          %v2633 = vadd.f32 %v2409, %v2545
          %v2634 = vadd.f32 %v2410, %v2554
          %v2635 = vadd.f32 %v2411, %v2563
          %v2636 = vadd.f32 %v2412, %v2572
          %v2637 = vadd.f32 %v2413, %v2581
          %v2638 = vadd.f32 %v2414, %v2590
          %v2639 = vadd.f32 %v2415, %v2599
          %v2640 = vadd.f32 %v2416, %v2608
          %v2641 = vadd.f32 %v2417, %v2617
          %v2642 = vadd.f32 %v2418, %v2626
          %v2643 = vmul.f32 %v2627, %v2387
          %v2644 = vmul.f32 %v2628, %v2388
          %v2645 = vmul.f32 %v2629, %v2389
          %v2646 = vmul.f32 %v2630, %v2390
          %v2647 = vmul.f32 %v2631, %v2391
          %v2648 = vmul.f32 %v2632, %v2392
          %v2649 = vmul.f32 %v2633, %v2393
          %v2650 = vmul.f32 %v2634, %v2394
          %v2651 = vmul.f32 %v2635, %v2395
          %v2652 = vmul.f32 %v2636, %v2396
          %v2653 = vmul.f32 %v2637, %v2397
          %v2654 = vmul.f32 %v2638, %v2398
          %v2655 = vmul.f32 %v2639, %v2399
          %v2656 = vmul.f32 %v2640, %v2400
          %v2657 = vmul.f32 %v2641, %v2401
          %v2658 = vmul.f32 %v2642, %v2402
          %v2659 = vadd.f32 %v2355, %v2643
          %v2660 = vadd.f32 %v2356, %v2644
          %v2661 = vadd.f32 %v2357, %v2645
          %v2662 = vadd.f32 %v2358, %v2646
          %v2663 = vadd.f32 %v2359, %v2647
          %v2664 = vadd.f32 %v2360, %v2648
          %v2665 = vadd.f32 %v2361, %v2649
          %v2666 = vadd.f32 %v2362, %v2650
          %v2667 = vadd.f32 %v2363, %v2651
          %v2668 = vadd.f32 %v2364, %v2652
          %v2669 = vadd.f32 %v2365, %v2653
          %v2670 = vadd.f32 %v2366, %v2654
          %v2671 = vadd.f32 %v2367, %v2655
          %v2672 = vadd.f32 %v2368, %v2656
          %v2673 = vadd.f32 %v2369, %v2657
          %v2674 = vadd.f32 %v2370, %v2658
          %v2675 = vlog2.pop %v2627
          %v2676 = vmul.f32 %v2675, 0.6931472
          %v2677 = vlog2.pop %v2628
          %v2678 = vmul.f32 %v2677, 0.6931472
          %v2679 = vlog2.pop %v2629
          %v2680 = vmul.f32 %v2679, 0.6931472
          %v2681 = vlog2.pop %v2630
          %v2682 = vmul.f32 %v2681, 0.6931472
          %v2683 = vlog2.pop %v2631
          %v2684 = vmul.f32 %v2683, 0.6931472
          %v2685 = vlog2.pop %v2632
          %v2686 = vmul.f32 %v2685, 0.6931472
          %v2687 = vlog2.pop %v2633
          %v2688 = vmul.f32 %v2687, 0.6931472
          %v2689 = vlog2.pop %v2634
          %v2690 = vmul.f32 %v2689, 0.6931472
          %v2691 = vlog2.pop %v2635
          %v2692 = vmul.f32 %v2691, 0.6931472
          %v2693 = vlog2.pop %v2636
          %v2694 = vmul.f32 %v2693, 0.6931472
          %v2695 = vlog2.pop %v2637
          %v2696 = vmul.f32 %v2695, 0.6931472
          %v2697 = vlog2.pop %v2638
          %v2698 = vmul.f32 %v2697, 0.6931472
          %v2699 = vlog2.pop %v2639
          %v2700 = vmul.f32 %v2699, 0.6931472
          %v2701 = vlog2.pop %v2640
          %v2702 = vmul.f32 %v2701, 0.6931472
          %v2703 = vlog2.pop %v2641
          %v2704 = vmul.f32 %v2703, 0.6931472
          %v2705 = vlog2.pop %v2642
          %v2706 = vmul.f32 %v2705, 0.6931472
          %v2707 = vsub.f32 0.0, %v2676
          %v2708 = vsub.f32 0.0, %v2678
          %v2709 = vsub.f32 0.0, %v2680
          %v2710 = vsub.f32 0.0, %v2682
          %v2711 = vsub.f32 0.0, %v2684
          %v2712 = vsub.f32 0.0, %v2686
          %v2713 = vsub.f32 0.0, %v2688
          %v2714 = vsub.f32 0.0, %v2690
          %v2715 = vsub.f32 0.0, %v2692
          %v2716 = vsub.f32 0.0, %v2694
          %v2717 = vsub.f32 0.0, %v2696
          %v2718 = vsub.f32 0.0, %v2698
          %v2719 = vsub.f32 0.0, %v2700
          %v2720 = vsub.f32 0.0, %v2702
          %v2721 = vsub.f32 0.0, %v2704
          %v2722 = vsub.f32 0.0, %v2706
          %v2723 = vmul.f32 %v2627, %v2627
          %v2724 = vmul.f32 %v2628, %v2628
          %v2725 = vmul.f32 %v2629, %v2629
          %v2726 = vmul.f32 %v2630, %v2630
          %v2727 = vmul.f32 %v2631, %v2631
          %v2728 = vmul.f32 %v2632, %v2632
          %v2729 = vmul.f32 %v2633, %v2633
          %v2730 = vmul.f32 %v2634, %v2634
          %v2731 = vmul.f32 %v2635, %v2635
          %v2732 = vmul.f32 %v2636, %v2636
          %v2733 = vmul.f32 %v2637, %v2637
          %v2734 = vmul.f32 %v2638, %v2638
          %v2735 = vmul.f32 %v2639, %v2639
          %v2736 = vmul.f32 %v2640, %v2640
          %v2737 = vmul.f32 %v2641, %v2641
          %v2738 = vmul.f32 %v2642, %v2642
          %v2739 = vmul.f32 %v2355, %v2355
          %v2740 = vmul.f32 %v2356, %v2356
          %v2741 = vmul.f32 %v2357, %v2357
          %v2742 = vmul.f32 %v2358, %v2358
          %v2743 = vmul.f32 %v2359, %v2359
          %v2744 = vmul.f32 %v2360, %v2360
          %v2745 = vmul.f32 %v2361, %v2361
          %v2746 = vmul.f32 %v2362, %v2362
          %v2747 = vmul.f32 %v2363, %v2363
          %v2748 = vmul.f32 %v2364, %v2364
          %v2749 = vmul.f32 %v2365, %v2365
          %v2750 = vmul.f32 %v2366, %v2366
          %v2751 = vmul.f32 %v2367, %v2367
          %v2752 = vmul.f32 %v2368, %v2368
          %v2753 = vmul.f32 %v2369, %v2369
          %v2754 = vmul.f32 %v2370, %v2370
          %v2755 = vadd.f32 %v2723, %v2739
          %v2756 = vadd.f32 %v2724, %v2740
          %v2757 = vadd.f32 %v2725, %v2741
          %v2758 = vadd.f32 %v2726, %v2742
          %v2759 = vadd.f32 %v2727, %v2743
          %v2760 = vadd.f32 %v2728, %v2744
          %v2761 = vadd.f32 %v2729, %v2745
          %v2762 = vadd.f32 %v2730, %v2746
          %v2763 = vadd.f32 %v2731, %v2747
          %v2764 = vadd.f32 %v2732, %v2748
          %v2765 = vadd.f32 %v2733, %v2749
          %v2766 = vadd.f32 %v2734, %v2750
          %v2767 = vadd.f32 %v2735, %v2751
          %v2768 = vadd.f32 %v2736, %v2752
          %v2769 = vadd.f32 %v2737, %v2753
          %v2770 = vadd.f32 %v2738, %v2754
          %v2771 = vmul.f32 %v2755, 0.5
          %v2772 = vmul.f32 %v2756, 0.5
          %v2773 = vmul.f32 %v2757, 0.5
          %v2774 = vmul.f32 %v2758, 0.5
          %v2775 = vmul.f32 %v2759, 0.5
          %v2776 = vmul.f32 %v2760, 0.5
          %v2777 = vmul.f32 %v2761, 0.5
          %v2778 = vmul.f32 %v2762, 0.5
          %v2779 = vmul.f32 %v2763, 0.5
          %v2780 = vmul.f32 %v2764, 0.5
          %v2781 = vmul.f32 %v2765, 0.5
          %v2782 = vmul.f32 %v2766, 0.5
          %v2783 = vmul.f32 %v2767, 0.5
          %v2784 = vmul.f32 %v2768, 0.5
          %v2785 = vmul.f32 %v2769, 0.5
          %v2786 = vmul.f32 %v2770, 0.5
          %v2787 = vadd.f32 %v2707, %v2771
          %v2788 = vadd.f32 %v2708, %v2772
          %v2789 = vadd.f32 %v2709, %v2773
          %v2790 = vadd.f32 %v2710, %v2774
          %v2791 = vadd.f32 %v2711, %v2775
          %v2792 = vadd.f32 %v2712, %v2776
          %v2793 = vadd.f32 %v2713, %v2777
          %v2794 = vadd.f32 %v2714, %v2778
          %v2795 = vadd.f32 %v2715, %v2779
          %v2796 = vadd.f32 %v2716, %v2780
          %v2797 = vadd.f32 %v2717, %v2781
          %v2798 = vadd.f32 %v2718, %v2782
          %v2799 = vadd.f32 %v2719, %v2783
          %v2800 = vadd.f32 %v2720, %v2784
          %v2801 = vadd.f32 %v2721, %v2785
          %v2802 = vadd.f32 %v2722, %v2786
          %v2803 = vsub.f32 %v2787, 0.5
          %v2804 = vsub.f32 %v2788, 0.5
          %v2805 = vsub.f32 %v2789, 0.5
          %v2806 = vsub.f32 %v2790, 0.5
          %v2807 = vsub.f32 %v2791, 0.5
          %v2808 = vsub.f32 %v2792, 0.5
          %v2809 = vsub.f32 %v2793, 0.5
          %v2810 = vsub.f32 %v2794, 0.5
          %v2811 = vsub.f32 %v2795, 0.5
          %v2812 = vsub.f32 %v2796, 0.5
          %v2813 = vsub.f32 %v2797, 0.5
          %v2814 = vsub.f32 %v2798, 0.5
          %v2815 = vsub.f32 %v2799, 0.5
          %v2816 = vsub.f32 %v2800, 0.5
          %v2817 = vsub.f32 %v2801, 0.5
          %v2818 = vsub.f32 %v2802, 0.5
          %v2819 = vadd.f32 %v2803, %v2804
          %v2820 = vadd.f32 %v2819, %v2805
          %v2821 = vadd.f32 %v2820, %v2806
          %v2822 = vadd.f32 %v2821, %v2807
          %v2823 = vadd.f32 %v2822, %v2808
          %v2824 = vadd.f32 %v2823, %v2809
          %v2825 = vadd.f32 %v2824, %v2810
          %v2826 = vadd.f32 %v2825, %v2811
          %v2827 = vadd.f32 %v2826, %v2812
          %v2828 = vadd.f32 %v2827, %v2813
          %v2829 = vadd.f32 %v2828, %v2814
          %v2830 = vadd.f32 %v2829, %v2815
          %v2831 = vadd.f32 %v2830, %v2816
          %v2832 = vadd.f32 %v2831, %v2817
          %v2833 = vadd.f32 %v2832, %v2818
          %2834 = vadd.xlane.f32.xlu0 %v2833
          %v2835 = vpop.xlane.xlu0 %2834
          %v2836 = vrot.slane %v2835, 4
          %v2837 = vadd.f32 %v2835, %v2836
          %v2838 = vrot.slane %v2837, 2
          %v2839 = vadd.f32 %v2837, %v2838
          %v2840 = vrot.slane %v2839, 1
          %v2841 = vadd.f32 %v2839, %v2840
          %s2842 = vtos %v2841
          %v2843 = vmax.f32 %v2274, 0.0
          %v2844 = vand.u32 2147483647, %v2274
          %v2845 = vsub.f32 0.0, %v2844
          %v2846 = vmul.f32 %v2845, 1.442695
          %v2847 = vpow.pop %v2846
          %v2848 = vadd.f32 %v2847, 1.0
          %v2849 = vlog2.pop %v2848
          %v2850 = vmul.f32 %v2849, 0.6931472
          %v2851 = vmul.f32 -0.5, %v2847
          %v2852 = vadd.f32 %v2851, 1.0
          %v2853 = vmul.f32 %v2852, %v2847
          %v2854 = vand.u32 2147483647, %v2847
          %vm2855 = vcmp.lt.f32.partialorder %v2854, 0.0004427343
          %v2856 = vsel %vm2855, %v2853, %v2850
          %v2857 = vadd.f32 %v2843, %v2856
          %v2858 = vmul.f32 %v2857, %v2275
          %v2859 = vadd.f32 %v2273, %v2858
          %v2860 = vlog2.pop %v2857
          %v2861 = vmul.f32 %v2860, 0.6931472
          %v2862 = vsub.f32 0.0, %v2861
          %v2863 = vmul.f32 %v2857, %v2857
          %v2864 = vmul.f32 %v2273, %v2273
          %v2865 = vadd.f32 %v2863, %v2864
          %v2866 = vmul.f32 %v2865, 0.5
          %v2867 = vadd.f32 %v2862, %v2866
          %v2868 = vsub.f32 %v2867, 0.5
          %v2869 = vsel %vm2307, %v2868, 0.0
          %2870 = vadd.xlane.f32.xlu0 %v2869
          %v2871 = vpop.xlane.xlu0 %2870
          %v2872 = vrot.slane %v2871, 4
          %v2873 = vadd.f32 %v2871, %v2872
          %v2874 = vrot.slane %v2873, 2
          %v2875 = vadd.f32 %v2873, %v2874
          %v2876 = vrot.slane %v2875, 1
          %v2877 = vadd.f32 %v2875, %v2876
          %s2878 = vtos %v2877
          %v2879 = vlaneseq
          %v2880 = vshrl.u32 %v2879, 7
          %v2881 = vsub.s32 0, %v2880
          %v2882 = vrot.slane %v2859, %v2881
          %2883 = vmatprep.subr.mxu0 0.0
          %2884 = vmatpush1.msra.mxu0 %v2659
          %2885 = vmatprep.subr.mxu0 0.0
          %2886 = vmatpush1.msra.mxu0 %v2660
          %2887 = vmatprep.subr.mxu0 0.0
          %2888 = vmatpush1.msra.mxu0 %v2661
          %2889 = vmatprep.subr.mxu0 0.0
          %2890 = vmatpush1.msra.mxu0 %v2662
          %2891 = vmatprep.subr.mxu0 0.0
          %2892 = vmatpush1.msra.mxu0 %v2663
          %2893 = vmatprep.subr.mxu0 0.0
          %2894 = vmatpush1.msra.mxu0 %v2664
          %2895 = vmatprep.subr.mxu0 0.0
          %2896 = vmatpush1.msra.mxu0 %v2665
          %2897 = vmatprep.subr.mxu0 0.0
          %2898 = vmatpush1.msra.mxu0 %v2666
          %2899 = vmatprep.subr.mxu0 0.0
          %2900 = vmatpush1.msra.mxu0 %v2667
          %2901 = vmatprep.subr.mxu0 0.0
          %2902 = vmatpush1.msra.mxu0 %v2668
          %2903 = vmatprep.subr.mxu0 0.0
          %2904 = vmatpush1.msra.mxu0 %v2669
          %2905 = vmatprep.subr.mxu0 0.0
          %2906 = vmatpush1.msra.mxu0 %v2670
          %2907 = vmatprep.subr.mxu0 0.0
          %2908 = vmatpush1.msra.mxu0 %v2671
          %2909 = vmatprep.subr.mxu0 0.0
          %2910 = vmatpush1.msra.mxu0 %v2672
          %2911 = vmatprep.subr.mxu0 0.0
          %2912 = vmatpush1.msra.mxu0 %v2673
          %2913 = vmatprep.subr.mxu0 0.0
          %2914 = vmatpush1.msra.mxu0 %v2674
          %2915 = vmatprep.subr.mxu0 0.0
          %2916 = vmatpush1.msra.mxu0 0.0
          %2917 = vmatprep.subr.mxu0 0.0
          %2918 = vmatpush1.msra.mxu0 0.0
          %2919 = vmatprep.subr.mxu0 0.0
          %2920 = vmatpush1.msra.mxu0 0.0
          %2921 = vmatprep.subr.mxu0 0.0
          %2922 = vmatpush1.msra.mxu0 0.0
          %2923 = vmatprep.subr.mxu0 0.0
          %2924 = vmatpush1.msra.mxu0 0.0
          %2925 = vmatprep.subr.mxu0 0.0
          %2926 = vmatpush1.msra.mxu0 0.0
          %2927 = vmatprep.subr.mxu0 0.0
          %2928 = vmatpush1.msra.mxu0 0.0
          %2929 = vmatprep.subr.mxu0 0.0
          %2930 = vmatpush1.msra.mxu0 0.0
          %2931 = vmatprep.subr.mxu0 0.0
          %2932 = vmatpush1.msra.mxu0 0.0
          %2933 = vmatprep.subr.mxu0 0.0
          %2934 = vmatpush1.msra.mxu0 0.0
          %2935 = vmatprep.subr.mxu0 0.0
          %2936 = vmatpush1.msra.mxu0 0.0
          %2937 = vmatprep.subr.mxu0 0.0
          %2938 = vmatpush1.msra.mxu0 0.0
          %2939 = vmatprep.subr.mxu0 0.0
          %2940 = vmatpush1.msra.mxu0 0.0
          %2941 = vmatprep.subr.mxu0 0.0
          %2942 = vmatpush1.msra.mxu0 0.0
          %2943 = vmatprep.subr.mxu0 0.0
          %2944 = vmatpush1.msra.mxu0 0.0
          %2945 = vmatprep.subr.mxu0 0.0
          %2946 = vmatpush1.msra.mxu0 0.0
          %2947 = vmatprep.mubr.f32.mxu0 0.0
          %2948 = vmatmul.mubr.f32.gmra.mrb[0].mxu0 %v2354
          %v2949 = vpop.f32.mrb[0].mxu0
          %v2950 = vadd.f32 %v2882, %v2949
          %v2951 = vpop.f32.mrb[0].mxu0
          %2952 = vdwg.mxu0
          %v2953 = vrot.slane %v2950, 4
          %v2954 = vadd.f32 %v2950, %v2953
          %v2955 = vrot.slane %v2954, 2
          %v2956 = vadd.f32 %v2954, %v2955
          %v2957 = vrot.slane %v2956, 1
          %v2958 = vadd.f32 %v2956, %v2957
          %v2959 = vmul.f32 %v2958, %v2330
          %v2960 = vsub.f32 %v2950, %v2959
          %v2961 = vmul.f32 %v2960, %v2960
          %v2962 = vrot.slane %v2961, 4
          %v2963 = vadd.f32 %v2961, %v2962
          %v2964 = vrot.slane %v2963, 2
          %v2965 = vadd.f32 %v2963, %v2964
          %v2966 = vrot.slane %v2965, 1
          %v2967 = vadd.f32 %v2965, %v2966
          %v2968 = vmul.f32 %v2967, %v2330
          %v2969 = vadd.f32 %v2968, 1e-05
          %v2970 = vrsqrt.pop %v2969
          %v2971 = vmul.f32 %v2960, %v2970
          %v2972 = vlaneseq
          %v2973 = vshrl.u32 %v2972, 7
          %v2974 = vsub.s32 0, %v2973
          %v2975 = vrot.slane %v2276, %v2974
          %v2976 = vmul.f32 %v2971, %v2975
          %v2977 = vlaneseq
          %v2978 = vshrl.u32 %v2977, 7
          %v2979 = vsub.s32 0, %v2978
          %v2980 = vrot.slane %v2277, %v2979
          %v2981 = vadd.f32 %v2976, %v2980
          %v2982 = vmax.f32 %v2981, 0.0
          %v2983 = vld [vmem:[#allocation17] sm:$0xff]
          %v2984 = vld [vmem:[#allocation17 + $0x8] sm:$0xff]
          %v2985 = vld [vmem:[#allocation17 + $0x10] sm:$0xff]
          %v2986 = vld [vmem:[#allocation17 + $0x18] sm:$0xff]
          %v2987 = vld [vmem:[#allocation17 + $0x20] sm:$0xff]
          %v2988 = vld [vmem:[#allocation17 + $0x28] sm:$0xff]
          %v2989 = vld [vmem:[#allocation17 + $0x30] sm:$0xff]
          %v2990 = vld [vmem:[#allocation17 + $0x38] sm:$0xff]
          %v2991 = vld [vmem:[#allocation17 + $0x40] sm:$0xff]
          %v2992 = vld [vmem:[#allocation17 + $0x48] sm:$0xff]
          %v2993 = vld [vmem:[#allocation17 + $0x50] sm:$0xff]
          %v2994 = vld [vmem:[#allocation17 + $0x58] sm:$0xff]
          %v2995 = vld [vmem:[#allocation17 + $0x60] sm:$0xff]
          %v2996 = vld [vmem:[#allocation17 + $0x68] sm:$0xff]
          %v2997 = vld [vmem:[#allocation17 + $0x70] sm:$0xff]
          %v2998 = vld [vmem:[#allocation17 + $0x78] sm:$0xff]
          %v2999 = vld [vmem:[#allocation19] sm:$0xff]
          %v3000 = vld [vmem:[#allocation19 + $0x8] sm:$0xff]
          %v3001 = vld [vmem:[#allocation19 + $0x10] sm:$0xff]
          %v3002 = vld [vmem:[#allocation19 + $0x18] sm:$0xff]
          %v3003 = vld [vmem:[#allocation19 + $0x20] sm:$0xff]
          %v3004 = vld [vmem:[#allocation19 + $0x28] sm:$0xff]
          %v3005 = vld [vmem:[#allocation19 + $0x30] sm:$0xff]
          %v3006 = vld [vmem:[#allocation19 + $0x38] sm:$0xff]
          %v3007 = vld [vmem:[#allocation19 + $0x40] sm:$0xff]
          %v3008 = vld [vmem:[#allocation19 + $0x48] sm:$0xff]
          %v3009 = vld [vmem:[#allocation19 + $0x50] sm:$0xff]
          %v3010 = vld [vmem:[#allocation19 + $0x58] sm:$0xff]
          %v3011 = vld [vmem:[#allocation19 + $0x60] sm:$0xff]
          %v3012 = vld [vmem:[#allocation19 + $0x68] sm:$0xff]
          %v3013 = vld [vmem:[#allocation19 + $0x70] sm:$0xff]
          %v3014 = vld [vmem:[#allocation19 + $0x78] sm:$0xff]
          %v3015 = vld [vmem:[#allocation20] sm:$0xff]
          %v3016 = vld [vmem:[#allocation20 + $0x8] sm:$0xff]
          %v3017 = vld [vmem:[#allocation20 + $0x10] sm:$0xff]
          %v3018 = vld [vmem:[#allocation20 + $0x18] sm:$0xff]
          %v3019 = vld [vmem:[#allocation20 + $0x20] sm:$0xff]
          %v3020 = vld [vmem:[#allocation20 + $0x28] sm:$0xff]
          %v3021 = vld [vmem:[#allocation20 + $0x30] sm:$0xff]
          %v3022 = vld [vmem:[#allocation20 + $0x38] sm:$0xff]
          %v3023 = vld [vmem:[#allocation20 + $0x40] sm:$0xff]
          %v3024 = vld [vmem:[#allocation20 + $0x48] sm:$0xff]
          %v3025 = vld [vmem:[#allocation20 + $0x50] sm:$0xff]
          %v3026 = vld [vmem:[#allocation20 + $0x58] sm:$0xff]
          %v3027 = vld [vmem:[#allocation20 + $0x60] sm:$0xff]
          %v3028 = vld [vmem:[#allocation20 + $0x68] sm:$0xff]
          %v3029 = vld [vmem:[#allocation20 + $0x70] sm:$0xff]
          %v3030 = vld [vmem:[#allocation20 + $0x78] sm:$0xff]
          %v3031 = vmax.f32 %v2999, 0.0
          %v3032 = vmax.f32 %v3000, 0.0
          %v3033 = vmax.f32 %v3001, 0.0
          %v3034 = vmax.f32 %v3002, 0.0
          %v3035 = vmax.f32 %v3003, 0.0
          %v3036 = vmax.f32 %v3004, 0.0
          %v3037 = vmax.f32 %v3005, 0.0
          %v3038 = vmax.f32 %v3006, 0.0
          %v3039 = vmax.f32 %v3007, 0.0
          %v3040 = vmax.f32 %v3008, 0.0
          %v3041 = vmax.f32 %v3009, 0.0
          %v3042 = vmax.f32 %v3010, 0.0
          %v3043 = vmax.f32 %v3011, 0.0
          %v3044 = vmax.f32 %v3012, 0.0
          %v3045 = vmax.f32 %v3013, 0.0
          %v3046 = vmax.f32 %v3014, 0.0
          %v3047 = vand.u32 2147483647, %v2999
          %v3048 = vand.u32 2147483647, %v3000
          %v3049 = vand.u32 2147483647, %v3001
          %v3050 = vand.u32 2147483647, %v3002
          %v3051 = vand.u32 2147483647, %v3003
          %v3052 = vand.u32 2147483647, %v3004
          %v3053 = vand.u32 2147483647, %v3005
          %v3054 = vand.u32 2147483647, %v3006
          %v3055 = vand.u32 2147483647, %v3007
          %v3056 = vand.u32 2147483647, %v3008
          %v3057 = vand.u32 2147483647, %v3009
          %v3058 = vand.u32 2147483647, %v3010
          %v3059 = vand.u32 2147483647, %v3011
          %v3060 = vand.u32 2147483647, %v3012
          %v3061 = vand.u32 2147483647, %v3013
          %v3062 = vand.u32 2147483647, %v3014
          %v3063 = vsub.f32 0.0, %v3047
          %v3064 = vsub.f32 0.0, %v3048
          %v3065 = vsub.f32 0.0, %v3049
          %v3066 = vsub.f32 0.0, %v3050
          %v3067 = vsub.f32 0.0, %v3051
          %v3068 = vsub.f32 0.0, %v3052
          %v3069 = vsub.f32 0.0, %v3053
          %v3070 = vsub.f32 0.0, %v3054
          %v3071 = vsub.f32 0.0, %v3055
          %v3072 = vsub.f32 0.0, %v3056
          %v3073 = vsub.f32 0.0, %v3057
          %v3074 = vsub.f32 0.0, %v3058
          %v3075 = vsub.f32 0.0, %v3059
          %v3076 = vsub.f32 0.0, %v3060
          %v3077 = vsub.f32 0.0, %v3061
          %v3078 = vsub.f32 0.0, %v3062
          %v3079 = vmul.f32 %v3063, 1.442695
          %v3080 = vpow.pop %v3079
          %v3081 = vmul.f32 %v3064, 1.442695
          %v3082 = vpow.pop %v3081
          %v3083 = vmul.f32 %v3065, 1.442695
          %v3084 = vpow.pop %v3083
          %v3085 = vmul.f32 %v3066, 1.442695
          %v3086 = vpow.pop %v3085
          %v3087 = vmul.f32 %v3067, 1.442695
          %v3088 = vpow.pop %v3087
          %v3089 = vmul.f32 %v3068, 1.442695
          %v3090 = vpow.pop %v3089
          %v3091 = vmul.f32 %v3069, 1.442695
          %v3092 = vpow.pop %v3091
          %v3093 = vmul.f32 %v3070, 1.442695
          %v3094 = vpow.pop %v3093
          %v3095 = vmul.f32 %v3071, 1.442695
          %v3096 = vpow.pop %v3095
          %v3097 = vmul.f32 %v3072, 1.442695
          %v3098 = vpow.pop %v3097
          %v3099 = vmul.f32 %v3073, 1.442695
          %v3100 = vpow.pop %v3099
          %v3101 = vmul.f32 %v3074, 1.442695
          %v3102 = vpow.pop %v3101
          %v3103 = vmul.f32 %v3075, 1.442695
          %v3104 = vpow.pop %v3103
          %v3105 = vmul.f32 %v3076, 1.442695
          %v3106 = vpow.pop %v3105
          %v3107 = vmul.f32 %v3077, 1.442695
          %v3108 = vpow.pop %v3107
          %v3109 = vmul.f32 %v3078, 1.442695
          %v3110 = vpow.pop %v3109
          %v3111 = vadd.f32 %v3080, 1.0
          %v3112 = vlog2.pop %v3111
          %v3113 = vmul.f32 %v3112, 0.6931472
          %v3114 = vmul.f32 -0.5, %v3080
          %v3115 = vadd.f32 %v3114, 1.0
          %v3116 = vmul.f32 %v3115, %v3080
          %v3117 = vand.u32 2147483647, %v3080
          %vm3118 = vcmp.lt.f32.partialorder %v3117, 0.0004427343
          %v3119 = vsel %vm3118, %v3116, %v3113
          %v3120 = vadd.f32 %v3082, 1.0
          %v3121 = vlog2.pop %v3120
          %v3122 = vmul.f32 %v3121, 0.6931472
          %v3123 = vmul.f32 -0.5, %v3082
          %v3124 = vadd.f32 %v3123, 1.0
          %v3125 = vmul.f32 %v3124, %v3082
          %v3126 = vand.u32 2147483647, %v3082
          %vm3127 = vcmp.lt.f32.partialorder %v3126, 0.0004427343
          %v3128 = vsel %vm3127, %v3125, %v3122
          %v3129 = vadd.f32 %v3084, 1.0
          %v3130 = vlog2.pop %v3129
          %v3131 = vmul.f32 %v3130, 0.6931472
          %v3132 = vmul.f32 -0.5, %v3084
          %v3133 = vadd.f32 %v3132, 1.0
          %v3134 = vmul.f32 %v3133, %v3084
          %v3135 = vand.u32 2147483647, %v3084
          %vm3136 = vcmp.lt.f32.partialorder %v3135, 0.0004427343
          %v3137 = vsel %vm3136, %v3134, %v3131
          %v3138 = vadd.f32 %v3086, 1.0
          %v3139 = vlog2.pop %v3138
          %v3140 = vmul.f32 %v3139, 0.6931472
          %v3141 = vmul.f32 -0.5, %v3086
          %v3142 = vadd.f32 %v3141, 1.0
          %v3143 = vmul.f32 %v3142, %v3086
          %v3144 = vand.u32 2147483647, %v3086
          %vm3145 = vcmp.lt.f32.partialorder %v3144, 0.0004427343
          %v3146 = vsel %vm3145, %v3143, %v3140
          %v3147 = vadd.f32 %v3088, 1.0
          %v3148 = vlog2.pop %v3147
          %v3149 = vmul.f32 %v3148, 0.6931472
          %v3150 = vmul.f32 -0.5, %v3088
          %v3151 = vadd.f32 %v3150, 1.0
          %v3152 = vmul.f32 %v3151, %v3088
          %v3153 = vand.u32 2147483647, %v3088
          %vm3154 = vcmp.lt.f32.partialorder %v3153, 0.0004427343
          %v3155 = vsel %vm3154, %v3152, %v3149
          %v3156 = vadd.f32 %v3090, 1.0
          %v3157 = vlog2.pop %v3156
          %v3158 = vmul.f32 %v3157, 0.6931472
          %v3159 = vmul.f32 -0.5, %v3090
          %v3160 = vadd.f32 %v3159, 1.0
          %v3161 = vmul.f32 %v3160, %v3090
          %v3162 = vand.u32 2147483647, %v3090
          %vm3163 = vcmp.lt.f32.partialorder %v3162, 0.0004427343
          %v3164 = vsel %vm3163, %v3161, %v3158
          %v3165 = vadd.f32 %v3092, 1.0
          %v3166 = vlog2.pop %v3165
          %v3167 = vmul.f32 %v3166, 0.6931472
          %v3168 = vmul.f32 -0.5, %v3092
          %v3169 = vadd.f32 %v3168, 1.0
          %v3170 = vmul.f32 %v3169, %v3092
          %v3171 = vand.u32 2147483647, %v3092
          %vm3172 = vcmp.lt.f32.partialorder %v3171, 0.0004427343
          %v3173 = vsel %vm3172, %v3170, %v3167
          %v3174 = vadd.f32 %v3094, 1.0
          %v3175 = vlog2.pop %v3174
          %v3176 = vmul.f32 %v3175, 0.6931472
          %v3177 = vmul.f32 -0.5, %v3094
          %v3178 = vadd.f32 %v3177, 1.0
          %v3179 = vmul.f32 %v3178, %v3094
          %v3180 = vand.u32 2147483647, %v3094
          %vm3181 = vcmp.lt.f32.partialorder %v3180, 0.0004427343
          %v3182 = vsel %vm3181, %v3179, %v3176
          %v3183 = vadd.f32 %v3096, 1.0
          %v3184 = vlog2.pop %v3183
          %v3185 = vmul.f32 %v3184, 0.6931472
          %v3186 = vmul.f32 -0.5, %v3096
          %v3187 = vadd.f32 %v3186, 1.0
          %v3188 = vmul.f32 %v3187, %v3096
          %v3189 = vand.u32 2147483647, %v3096
          %vm3190 = vcmp.lt.f32.partialorder %v3189, 0.0004427343
          %v3191 = vsel %vm3190, %v3188, %v3185
          %v3192 = vadd.f32 %v3098, 1.0
          %v3193 = vlog2.pop %v3192
          %v3194 = vmul.f32 %v3193, 0.6931472
          %v3195 = vmul.f32 -0.5, %v3098
          %v3196 = vadd.f32 %v3195, 1.0
          %v3197 = vmul.f32 %v3196, %v3098
          %v3198 = vand.u32 2147483647, %v3098
          %vm3199 = vcmp.lt.f32.partialorder %v3198, 0.0004427343
          %v3200 = vsel %vm3199, %v3197, %v3194
          %v3201 = vadd.f32 %v3100, 1.0
          %v3202 = vlog2.pop %v3201
          %v3203 = vmul.f32 %v3202, 0.6931472
          %v3204 = vmul.f32 -0.5, %v3100
          %v3205 = vadd.f32 %v3204, 1.0
          %v3206 = vmul.f32 %v3205, %v3100
          %v3207 = vand.u32 2147483647, %v3100
          %vm3208 = vcmp.lt.f32.partialorder %v3207, 0.0004427343
          %v3209 = vsel %vm3208, %v3206, %v3203
          %v3210 = vadd.f32 %v3102, 1.0
          %v3211 = vlog2.pop %v3210
          %v3212 = vmul.f32 %v3211, 0.6931472
          %v3213 = vmul.f32 -0.5, %v3102
          %v3214 = vadd.f32 %v3213, 1.0
          %v3215 = vmul.f32 %v3214, %v3102
          %v3216 = vand.u32 2147483647, %v3102
          %vm3217 = vcmp.lt.f32.partialorder %v3216, 0.0004427343
          %v3218 = vsel %vm3217, %v3215, %v3212
          %v3219 = vadd.f32 %v3104, 1.0
          %v3220 = vlog2.pop %v3219
          %v3221 = vmul.f32 %v3220, 0.6931472
          %v3222 = vmul.f32 -0.5, %v3104
          %v3223 = vadd.f32 %v3222, 1.0
          %v3224 = vmul.f32 %v3223, %v3104
          %v3225 = vand.u32 2147483647, %v3104
          %vm3226 = vcmp.lt.f32.partialorder %v3225, 0.0004427343
          %v3227 = vsel %vm3226, %v3224, %v3221
          %v3228 = vadd.f32 %v3106, 1.0
          %v3229 = vlog2.pop %v3228
          %v3230 = vmul.f32 %v3229, 0.6931472
          %v3231 = vmul.f32 -0.5, %v3106
          %v3232 = vadd.f32 %v3231, 1.0
          %v3233 = vmul.f32 %v3232, %v3106
          %v3234 = vand.u32 2147483647, %v3106
          %vm3235 = vcmp.lt.f32.partialorder %v3234, 0.0004427343
          %v3236 = vsel %vm3235, %v3233, %v3230
          %v3237 = vadd.f32 %v3108, 1.0
          %v3238 = vlog2.pop %v3237
          %v3239 = vmul.f32 %v3238, 0.6931472
          %v3240 = vmul.f32 -0.5, %v3108
          %v3241 = vadd.f32 %v3240, 1.0
          %v3242 = vmul.f32 %v3241, %v3108
          %v3243 = vand.u32 2147483647, %v3108
          %vm3244 = vcmp.lt.f32.partialorder %v3243, 0.0004427343
          %v3245 = vsel %vm3244, %v3242, %v3239
          %v3246 = vadd.f32 %v3110, 1.0
          %v3247 = vlog2.pop %v3246
          %v3248 = vmul.f32 %v3247, 0.6931472
          %v3249 = vmul.f32 -0.5, %v3110
          %v3250 = vadd.f32 %v3249, 1.0
          %v3251 = vmul.f32 %v3250, %v3110
          %v3252 = vand.u32 2147483647, %v3110
          %vm3253 = vcmp.lt.f32.partialorder %v3252, 0.0004427343
          %v3254 = vsel %vm3253, %v3251, %v3248
          %v3255 = vadd.f32 %v3031, %v3119
          %v3256 = vadd.f32 %v3032, %v3128
          %v3257 = vadd.f32 %v3033, %v3137
          %v3258 = vadd.f32 %v3034, %v3146
          %v3259 = vadd.f32 %v3035, %v3155
          %v3260 = vadd.f32 %v3036, %v3164
          %v3261 = vadd.f32 %v3037, %v3173
          %v3262 = vadd.f32 %v3038, %v3182
          %v3263 = vadd.f32 %v3039, %v3191
          %v3264 = vadd.f32 %v3040, %v3200
          %v3265 = vadd.f32 %v3041, %v3209
          %v3266 = vadd.f32 %v3042, %v3218
          %v3267 = vadd.f32 %v3043, %v3227
          %v3268 = vadd.f32 %v3044, %v3236
          %v3269 = vadd.f32 %v3045, %v3245
          %v3270 = vadd.f32 %v3046, %v3254
          %v3271 = vmul.f32 %v3255, %v3015
          %v3272 = vmul.f32 %v3256, %v3016
          %v3273 = vmul.f32 %v3257, %v3017
          %v3274 = vmul.f32 %v3258, %v3018
          %v3275 = vmul.f32 %v3259, %v3019
          %v3276 = vmul.f32 %v3260, %v3020
          %v3277 = vmul.f32 %v3261, %v3021
          %v3278 = vmul.f32 %v3262, %v3022
          %v3279 = vmul.f32 %v3263, %v3023
          %v3280 = vmul.f32 %v3264, %v3024
          %v3281 = vmul.f32 %v3265, %v3025
          %v3282 = vmul.f32 %v3266, %v3026
          %v3283 = vmul.f32 %v3267, %v3027
          %v3284 = vmul.f32 %v3268, %v3028
          %v3285 = vmul.f32 %v3269, %v3029
          %v3286 = vmul.f32 %v3270, %v3030
          %v3287 = vadd.f32 %v2983, %v3271
          %v3288 = vadd.f32 %v2984, %v3272
          %v3289 = vadd.f32 %v2985, %v3273
          %v3290 = vadd.f32 %v2986, %v3274
          %v3291 = vadd.f32 %v2987, %v3275
          %v3292 = vadd.f32 %v2988, %v3276
          %v3293 = vadd.f32 %v2989, %v3277
          %v3294 = vadd.f32 %v2990, %v3278
          %v3295 = vadd.f32 %v2991, %v3279
          %v3296 = vadd.f32 %v2992, %v3280
          %v3297 = vadd.f32 %v2993, %v3281
          %v3298 = vadd.f32 %v2994, %v3282
          %v3299 = vadd.f32 %v2995, %v3283
          %v3300 = vadd.f32 %v2996, %v3284
          %v3301 = vadd.f32 %v2997, %v3285
          %v3302 = vadd.f32 %v2998, %v3286
          %v3303 = vlog2.pop %v3255
          %v3304 = vmul.f32 %v3303, 0.6931472
          %v3305 = vlog2.pop %v3256
          %v3306 = vmul.f32 %v3305, 0.6931472
          %v3307 = vlog2.pop %v3257
          %v3308 = vmul.f32 %v3307, 0.6931472
          %v3309 = vlog2.pop %v3258
          %v3310 = vmul.f32 %v3309, 0.6931472
          %v3311 = vlog2.pop %v3259
          %v3312 = vmul.f32 %v3311, 0.6931472
          %v3313 = vlog2.pop %v3260
          %v3314 = vmul.f32 %v3313, 0.6931472
          %v3315 = vlog2.pop %v3261
          %v3316 = vmul.f32 %v3315, 0.6931472
          %v3317 = vlog2.pop %v3262
          %v3318 = vmul.f32 %v3317, 0.6931472
          %v3319 = vlog2.pop %v3263
          %v3320 = vmul.f32 %v3319, 0.6931472
          %v3321 = vlog2.pop %v3264
          %v3322 = vmul.f32 %v3321, 0.6931472
          %v3323 = vlog2.pop %v3265
          %v3324 = vmul.f32 %v3323, 0.6931472
          %v3325 = vlog2.pop %v3266
          %v3326 = vmul.f32 %v3325, 0.6931472
          %v3327 = vlog2.pop %v3267
          %v3328 = vmul.f32 %v3327, 0.6931472
          %v3329 = vlog2.pop %v3268
          %v3330 = vmul.f32 %v3329, 0.6931472
          %v3331 = vlog2.pop %v3269
          %v3332 = vmul.f32 %v3331, 0.6931472
          %v3333 = vlog2.pop %v3270
          %v3334 = vmul.f32 %v3333, 0.6931472
          %v3335 = vsub.f32 0.0, %v3304
          %v3336 = vsub.f32 0.0, %v3306
          %v3337 = vsub.f32 0.0, %v3308
          %v3338 = vsub.f32 0.0, %v3310
          %v3339 = vsub.f32 0.0, %v3312
          %v3340 = vsub.f32 0.0, %v3314
          %v3341 = vsub.f32 0.0, %v3316
          %v3342 = vsub.f32 0.0, %v3318
          %v3343 = vsub.f32 0.0, %v3320
          %v3344 = vsub.f32 0.0, %v3322
          %v3345 = vsub.f32 0.0, %v3324
          %v3346 = vsub.f32 0.0, %v3326
          %v3347 = vsub.f32 0.0, %v3328
          %v3348 = vsub.f32 0.0, %v3330
          %v3349 = vsub.f32 0.0, %v3332
          %v3350 = vsub.f32 0.0, %v3334
          %v3351 = vmul.f32 %v3255, %v3255
          %v3352 = vmul.f32 %v3256, %v3256
          %v3353 = vmul.f32 %v3257, %v3257
          %v3354 = vmul.f32 %v3258, %v3258
          %v3355 = vmul.f32 %v3259, %v3259
          %v3356 = vmul.f32 %v3260, %v3260
          %v3357 = vmul.f32 %v3261, %v3261
          %v3358 = vmul.f32 %v3262, %v3262
          %v3359 = vmul.f32 %v3263, %v3263
          %v3360 = vmul.f32 %v3264, %v3264
          %v3361 = vmul.f32 %v3265, %v3265
          %v3362 = vmul.f32 %v3266, %v3266
          %v3363 = vmul.f32 %v3267, %v3267
          %v3364 = vmul.f32 %v3268, %v3268
          %v3365 = vmul.f32 %v3269, %v3269
          %v3366 = vmul.f32 %v3270, %v3270
          %v3367 = vmul.f32 %v2983, %v2983
          %v3368 = vmul.f32 %v2984, %v2984
          %v3369 = vmul.f32 %v2985, %v2985
          %v3370 = vmul.f32 %v2986, %v2986
          %v3371 = vmul.f32 %v2987, %v2987
          %v3372 = vmul.f32 %v2988, %v2988
          %v3373 = vmul.f32 %v2989, %v2989
          %v3374 = vmul.f32 %v2990, %v2990
          %v3375 = vmul.f32 %v2991, %v2991
          %v3376 = vmul.f32 %v2992, %v2992
          %v3377 = vmul.f32 %v2993, %v2993
          %v3378 = vmul.f32 %v2994, %v2994
          %v3379 = vmul.f32 %v2995, %v2995
          %v3380 = vmul.f32 %v2996, %v2996
          %v3381 = vmul.f32 %v2997, %v2997
          %v3382 = vmul.f32 %v2998, %v2998
          %v3383 = vadd.f32 %v3351, %v3367
          %v3384 = vadd.f32 %v3352, %v3368
          %v3385 = vadd.f32 %v3353, %v3369
          %v3386 = vadd.f32 %v3354, %v3370
          %v3387 = vadd.f32 %v3355, %v3371
          %v3388 = vadd.f32 %v3356, %v3372
          %v3389 = vadd.f32 %v3357, %v3373
          %v3390 = vadd.f32 %v3358, %v3374
          %v3391 = vadd.f32 %v3359, %v3375
          %v3392 = vadd.f32 %v3360, %v3376
          %v3393 = vadd.f32 %v3361, %v3377
          %v3394 = vadd.f32 %v3362, %v3378
          %v3395 = vadd.f32 %v3363, %v3379
          %v3396 = vadd.f32 %v3364, %v3380
          %v3397 = vadd.f32 %v3365, %v3381
          %v3398 = vadd.f32 %v3366, %v3382
          %v3399 = vmul.f32 %v3383, 0.5
          %v3400 = vmul.f32 %v3384, 0.5
          %v3401 = vmul.f32 %v3385, 0.5
          %v3402 = vmul.f32 %v3386, 0.5
          %v3403 = vmul.f32 %v3387, 0.5
          %v3404 = vmul.f32 %v3388, 0.5
          %v3405 = vmul.f32 %v3389, 0.5
          %v3406 = vmul.f32 %v3390, 0.5
          %v3407 = vmul.f32 %v3391, 0.5
          %v3408 = vmul.f32 %v3392, 0.5
          %v3409 = vmul.f32 %v3393, 0.5
          %v3410 = vmul.f32 %v3394, 0.5
          %v3411 = vmul.f32 %v3395, 0.5
          %v3412 = vmul.f32 %v3396, 0.5
          %v3413 = vmul.f32 %v3397, 0.5
          %v3414 = vmul.f32 %v3398, 0.5
          %v3415 = vadd.f32 %v3335, %v3399
          %v3416 = vadd.f32 %v3336, %v3400
          %v3417 = vadd.f32 %v3337, %v3401
          %v3418 = vadd.f32 %v3338, %v3402
          %v3419 = vadd.f32 %v3339, %v3403
          %v3420 = vadd.f32 %v3340, %v3404
          %v3421 = vadd.f32 %v3341, %v3405
          %v3422 = vadd.f32 %v3342, %v3406
          %v3423 = vadd.f32 %v3343, %v3407
          %v3424 = vadd.f32 %v3344, %v3408
          %v3425 = vadd.f32 %v3345, %v3409
          %v3426 = vadd.f32 %v3346, %v3410
          %v3427 = vadd.f32 %v3347, %v3411
          %v3428 = vadd.f32 %v3348, %v3412
          %v3429 = vadd.f32 %v3349, %v3413
          %v3430 = vadd.f32 %v3350, %v3414
          %v3431 = vsub.f32 %v3415, 0.5
          %v3432 = vsub.f32 %v3416, 0.5
          %v3433 = vsub.f32 %v3417, 0.5
          %v3434 = vsub.f32 %v3418, 0.5
          %v3435 = vsub.f32 %v3419, 0.5
          %v3436 = vsub.f32 %v3420, 0.5
          %v3437 = vsub.f32 %v3421, 0.5
          %v3438 = vsub.f32 %v3422, 0.5
          %v3439 = vsub.f32 %v3423, 0.5
          %v3440 = vsub.f32 %v3424, 0.5
          %v3441 = vsub.f32 %v3425, 0.5
          %v3442 = vsub.f32 %v3426, 0.5
          %v3443 = vsub.f32 %v3427, 0.5
          %v3444 = vsub.f32 %v3428, 0.5
          %v3445 = vsub.f32 %v3429, 0.5
          %v3446 = vsub.f32 %v3430, 0.5
          %v3447 = vadd.f32 %v3431, %v3432
          %v3448 = vadd.f32 %v3447, %v3433
          %v3449 = vadd.f32 %v3448, %v3434
          %v3450 = vadd.f32 %v3449, %v3435
          %v3451 = vadd.f32 %v3450, %v3436
          %v3452 = vadd.f32 %v3451, %v3437
          %v3453 = vadd.f32 %v3452, %v3438
          %v3454 = vadd.f32 %v3453, %v3439
          %v3455 = vadd.f32 %v3454, %v3440
          %v3456 = vadd.f32 %v3455, %v3441
          %v3457 = vadd.f32 %v3456, %v3442
          %v3458 = vadd.f32 %v3457, %v3443
          %v3459 = vadd.f32 %v3458, %v3444
          %v3460 = vadd.f32 %v3459, %v3445
          %v3461 = vadd.f32 %v3460, %v3446
          %3462 = vadd.xlane.f32.xlu0 %v3461
          %v3463 = vpop.xlane.xlu0 %3462
          %v3464 = vrot.slane %v3463, 4
          %v3465 = vadd.f32 %v3463, %v3464
          %v3466 = vrot.slane %v3465, 2
          %v3467 = vadd.f32 %v3465, %v3466
          %v3468 = vrot.slane %v3467, 1
          %v3469 = vadd.f32 %v3467, %v3468
          %s3470 = vtos %v3469
          %v3471 = vmax.f32 %v2279, 0.0
          %v3472 = vand.u32 2147483647, %v2279
          %v3473 = vsub.f32 0.0, %v3472
          %v3474 = vmul.f32 %v3473, 1.442695
          %v3475 = vpow.pop %v3474
          %v3476 = vadd.f32 %v3475, 1.0
          %v3477 = vlog2.pop %v3476
          %v3478 = vmul.f32 %v3477, 0.6931472
          %v3479 = vmul.f32 -0.5, %v3475
          %v3480 = vadd.f32 %v3479, 1.0
          %v3481 = vmul.f32 %v3480, %v3475
          %v3482 = vand.u32 2147483647, %v3475
          %vm3483 = vcmp.lt.f32.partialorder %v3482, 0.0004427343
          %v3484 = vsel %vm3483, %v3481, %v3478
          %v3485 = vadd.f32 %v3471, %v3484
          %v3486 = vmul.f32 %v3485, %v2280
          %v3487 = vadd.f32 %v2278, %v3486
          %v3488 = vlog2.pop %v3485
          %v3489 = vmul.f32 %v3488, 0.6931472
          %v3490 = vsub.f32 0.0, %v3489
          %v3491 = vmul.f32 %v3485, %v3485
          %v3492 = vmul.f32 %v2278, %v2278
          %v3493 = vadd.f32 %v3491, %v3492
          %v3494 = vmul.f32 %v3493, 0.5
          %v3495 = vadd.f32 %v3490, %v3494
          %v3496 = vsub.f32 %v3495, 0.5
          %v3497 = vsel %vm2307, %v3496, 0.0
          %3498 = vadd.xlane.f32.xlu0 %v3497
          %v3499 = vpop.xlane.xlu0 %3498
          %v3500 = vrot.slane %v3499, 4
          %v3501 = vadd.f32 %v3499, %v3500
          %v3502 = vrot.slane %v3501, 2
          %v3503 = vadd.f32 %v3501, %v3502
          %v3504 = vrot.slane %v3503, 1
          %v3505 = vadd.f32 %v3503, %v3504
          %s3506 = vtos %v3505
          %v3507 = vlaneseq
          %v3508 = vshrl.u32 %v3507, 7
          %v3509 = vsub.s32 0, %v3508
          %v3510 = vrot.slane %v3487, %v3509
          %3511 = vmatprep.subr.mxu0 0.0
          %3512 = vmatpush1.msra.mxu0 %v3287
          %3513 = vmatprep.subr.mxu0 0.0
          %3514 = vmatpush1.msra.mxu0 %v3288
          %3515 = vmatprep.subr.mxu0 0.0
          %3516 = vmatpush1.msra.mxu0 %v3289
          %3517 = vmatprep.subr.mxu0 0.0
          %3518 = vmatpush1.msra.mxu0 %v3290
          %3519 = vmatprep.subr.mxu0 0.0
          %3520 = vmatpush1.msra.mxu0 %v3291
          %3521 = vmatprep.subr.mxu0 0.0
          %3522 = vmatpush1.msra.mxu0 %v3292
          %3523 = vmatprep.subr.mxu0 0.0
          %3524 = vmatpush1.msra.mxu0 %v3293
          %3525 = vmatprep.subr.mxu0 0.0
          %3526 = vmatpush1.msra.mxu0 %v3294
          %3527 = vmatprep.subr.mxu0 0.0
          %3528 = vmatpush1.msra.mxu0 %v3295
          %3529 = vmatprep.subr.mxu0 0.0
          %3530 = vmatpush1.msra.mxu0 %v3296
          %3531 = vmatprep.subr.mxu0 0.0
          %3532 = vmatpush1.msra.mxu0 %v3297
          %3533 = vmatprep.subr.mxu0 0.0
          %3534 = vmatpush1.msra.mxu0 %v3298
          %3535 = vmatprep.subr.mxu0 0.0
          %3536 = vmatpush1.msra.mxu0 %v3299
          %3537 = vmatprep.subr.mxu0 0.0
          %3538 = vmatpush1.msra.mxu0 %v3300
          %3539 = vmatprep.subr.mxu0 0.0
          %3540 = vmatpush1.msra.mxu0 %v3301
          %3541 = vmatprep.subr.mxu0 0.0
          %3542 = vmatpush1.msra.mxu0 %v3302
          %3543 = vmatprep.subr.mxu0 0.0
          %3544 = vmatpush1.msra.mxu0 0.0
          %3545 = vmatprep.subr.mxu0 0.0
          %3546 = vmatpush1.msra.mxu0 0.0
          %3547 = vmatprep.subr.mxu0 0.0
          %3548 = vmatpush1.msra.mxu0 0.0
          %3549 = vmatprep.subr.mxu0 0.0
          %3550 = vmatpush1.msra.mxu0 0.0
          %3551 = vmatprep.subr.mxu0 0.0
          %3552 = vmatpush1.msra.mxu0 0.0
          %3553 = vmatprep.subr.mxu0 0.0
          %3554 = vmatpush1.msra.mxu0 0.0
          %3555 = vmatprep.subr.mxu0 0.0
          %3556 = vmatpush1.msra.mxu0 0.0
          %3557 = vmatprep.subr.mxu0 0.0
          %3558 = vmatpush1.msra.mxu0 0.0
          %3559 = vmatprep.subr.mxu0 0.0
          %3560 = vmatpush1.msra.mxu0 0.0
          %3561 = vmatprep.subr.mxu0 0.0
          %3562 = vmatpush1.msra.mxu0 0.0
          %3563 = vmatprep.subr.mxu0 0.0
          %3564 = vmatpush1.msra.mxu0 0.0
          %3565 = vmatprep.subr.mxu0 0.0
          %3566 = vmatpush1.msra.mxu0 0.0
          %3567 = vmatprep.subr.mxu0 0.0
          %3568 = vmatpush1.msra.mxu0 0.0
          %3569 = vmatprep.subr.mxu0 0.0
          %3570 = vmatpush1.msra.mxu0 0.0
          %3571 = vmatprep.subr.mxu0 0.0
          %3572 = vmatpush1.msra.mxu0 0.0
          %3573 = vmatprep.subr.mxu0 0.0
          %3574 = vmatpush1.msra.mxu0 0.0
          %3575 = vmatprep.mubr.f32.mxu0 0.0
          %3576 = vmatmul.mubr.f32.gmra.mrb[0].mxu0 %v2982
          %v3577 = vpop.f32.mrb[0].mxu0
          %v3578 = vadd.f32 %v3510, %v3577
          %v3579 = vpop.f32.mrb[0].mxu0
          %3580 = vdwg.mxu0
          %3581 = vst [vmem:[#allocation22] sm:$0xff] %v3578
          %s3582 = sld [smem:[#allocation3]]
          %v3583 = vrcp.pop 78400.0
          %s3584 = vtos %v3583
          %s3585 = smul.f32 %s3582, %s3584
          %v3586 = vrcp.pop 100.0
          %s3587 = vtos %v3586
          %s3588 = smul.f32 %s2317, %s3587
          %s3589 = sadd.f32 %s3585, %s3588
          %v3590 = vrcp.pop 10000.0
          %s3591 = vtos %v3590
          %s3592 = smul.f32 %s2842, %s3591
          %s3593 = sadd.f32 %s3589, %s3592
          %v3594 = vrcp.pop 100.0
          %s3595 = vtos %v3594
          %s3596 = smul.f32 %s2878, %s3595
          %s3597 = sadd.f32 %s3593, %s3596
          %v3598 = vrcp.pop 1000.0
          %s3599 = vtos %v3598
          %s3600 = smul.f32 %s3470, %s3599
          %s3601 = sadd.f32 %s3597, %s3600
          %v3602 = vrcp.pop 10.0
          %s3603 = vtos %v3602
          %s3604 = smul.f32 %s3506, %s3603
          %s3605 = sadd.f32 %s3601, %s3604
          %s3606 = scalar_lea.smem [#allocation23], 0
          %3607 = sst [smem:[%s3606]] %s3605
        $region112: #{tpu_custom_call.1} parent=63 // pred_fallthru
          _
        // Predicated region
        $region113: #{tpu_custom_call.1} parent=63 // pred_check
          %p3608 = pneg %p302
        $region114: #{tpu_custom_call.1} parent=63 // pred_check_branch
          %3610 = sbr.rel (%p3608) target = $region116
        $region115: #{tpu_custom_call.1} parent=63 // pred_region
          %s3612 = ssub.s32 128, 128
          %3613 = vsyncadd [#allocation6], %s3612
          %s3615 = sshll.u32 [#allocation22], 4
          %s3616 = int_to_ptr.vmem [resolvable:$true] %s3615
          %3618 = dma.vmem_to_hbm [thread:$0]  %s3616, 128, %s11, [#allocation6]
        $region116: #{tpu_custom_call.1} parent=63 // pred_fallthru
          _
        // Predicated region
        $region117: #{tpu_custom_call.1} parent=63 // pred_check
          %p3619 = pneg %p323
        $region118: #{tpu_custom_call.1} parent=63 // pred_check_branch
          %3621 = sbr.rel (%p3619) target = $region120
        $region119: #{tpu_custom_call.1} parent=63 // pred_region
          %s3623 = ssub.s32 16, 16
          %3624 = vsyncadd [#allocation7], %s3623
          %3627 = dma.smem_to_hbm [#allocation23], 16, %s12, [#allocation7]
        $region120: #{tpu_custom_call.1} parent=63 // pred_fallthru
          _
        // Predicated region
        $region121: #{tpu_custom_call.1} parent=63 // pred_check
          %p3628 = pneg %p302
        $region122: #{tpu_custom_call.1} parent=63 // pred_check_branch
          %3630 = sbr.rel (%p3628) target = $region124
        $region123: #{tpu_custom_call.1} parent=63 // pred_region
          %3631 = dma.done [#allocation6], 128
        $region124: #{tpu_custom_call.1} parent=63 // pred_fallthru
          _
        // Predicated region
        $region125: #{tpu_custom_call.1} parent=63 // pred_check
          %p3632 = pneg %p323
        $region126: #{tpu_custom_call.1} parent=63 // pred_check_branch
          %3634 = sbr.rel (%p3632) target = $region128
        $region127: #{tpu_custom_call.1} parent=63 // pred_region
          %3635 = dma.done [#allocation7], 16
        $region128: #{tpu_custom_call.1} parent=63 // pred_fallthru
          _
        %3636 = sfence
      $region64: #{tpu_custom_call.1} parent=5 // pred_fallthru
        _
      %p3637 = scmp.le.s32.totalorder 2, %s33
      // Predicated region
      $region129: #{tpu_custom_call.1} parent=5 // pred_check
        %p3638 = pneg %p3637
      $region130: #{tpu_custom_call.1} parent=5 // pred_check_branch
        %3640 = sbr.rel (%p3638) target = $region132
      $region131: #{tpu_custom_call.1} parent=5 // pred_region
        %s3641 = ssub.s32 %s33, 2
      $region132: #{tpu_custom_call.1} parent=5 // pred_fallthru
        _
    $region6: #{tpu_custom_call.1} parent=1 // loop_footer
      %s37 = sadd.s32 1, %s33
    $region7: #{tpu_custom_call.1} parent=1 // loop_footer_branch
      %32 = sbr.rel target = $region3
    $region8: #{tpu_custom_call.1} parent=1 // loop_exit
      _
    %3642 = vsyncpa [#allocation5], 1
    %s3643 = scalar_lea.sflag [#allocation5], 1
    %3644 = vsyncpa %s3643, 1
    %3645 = vsyncpa [#allocation9], 1
    %s3646 = scalar_lea.sflag [#allocation9], 1
    %3647 = vsyncpa %s3646, 1
    %3648 = vsyncpa [#allocation12], 1
    %s3649 = scalar_lea.sflag [#allocation12], 1
    %3650 = vsyncpa %s3649, 1
    %3651 = vsyncpa [#allocation15], 1
    %3652 = vsyncpa [#allocation18], 1
    %3653 = vsyncpa [#allocation21], 1
    %3654 = vsyncpa [#allocation6], 1
    %s3655 = scalar_lea.sflag [#allocation6], 1
    %3656 = vsyncpa %s3655, 1
    %3657 = vsyncpa [#allocation7], 1
    %s3658 = scalar_lea.sflag [#allocation7], 1
    %3659 = vsyncpa %s3658, 1

</llo_original>
